<compile_context>
chip_gen: v7x
topology: tpu7x:2x2x1
jax: 0.10.0
libtpu: 0.0.40
codegen_flags: <defaults>
</compile_context>

<pallas_src>
import functools

import jax
import jax.numpy as jnp
from jax import lax
from jax.experimental import pallas as pl
from jax.experimental.pallas import tpu as pltpu


def _round_up(n, m):
    return ((n + m - 1) // m) * m


def _lstm_kernel(x_ref, wih1_ref, whh1_ref, b1_ref,
                 wih2_ref, whh2_ref, b2_ref,
                 h2_ref, gx_ref, h1_seq_ref,
                 *, seq_len, batch_pad, hidden_pad):
    T, Bp, Hp = seq_len, batch_pad, hidden_pad

    # --- Pass 1: hoisted input projection for layer 1 (one big MXU matmul) ---
    gx_ref[...] = (jnp.dot(x_ref[...], wih1_ref[...],
                           preferred_element_type=jnp.float32)
                   + b1_ref[...])

    def make_step(whh_ref, write_h_seq):
        def step(t, carry):
            h, c = carry
            row = pl.multiple_of(t * Bp, Bp)
            # Only the recurrent h @ W_hh matmul stays on the serial path.
            gates = (gx_ref[pl.ds(row, Bp), :]
                     + jnp.dot(h, whh_ref[...],
                               preferred_element_type=jnp.float32))
            # PyTorch gate order [i, f, g, o]; slices are 128-lane aligned.
            i = jax.nn.sigmoid(gates[:, 0 * Hp:1 * Hp])
            f = jax.nn.sigmoid(gates[:, 1 * Hp:2 * Hp])
            g = jnp.tanh(gates[:, 2 * Hp:3 * Hp])
            o = jax.nn.sigmoid(gates[:, 3 * Hp:4 * Hp])
            c_new = f * c + i * g
            h_new = o * jnp.tanh(c_new)
            if write_h_seq:
                h1_seq_ref[pl.ds(row, Bp), :] = h_new
            return h_new, c_new
        return step

    zeros = jnp.zeros((Bp, Hp), jnp.float32)

    # --- Layer 1 recurrence (unrolled; records h1 for every step) ---
    _ = lax.fori_loop(0, T, make_step(whh1_ref, True), (zeros, zeros),
                      unroll=True)

    # --- Pass 2: hoisted input projection for layer 2 over the whole h1 seq ---
    gx_ref[...] = (jnp.dot(h1_seq_ref[...], wih2_ref[...],
                           preferred_element_type=jnp.float32)
                   + b2_ref[...])

    # --- Layer 2 recurrence (only the final hidden state is needed) ---
    h2, _ = lax.fori_loop(0, T, make_step(whh2_ref, False), (zeros, zeros),
                          unroll=True)
    h2_ref[...] = h2


def _pad_gate_cols(w, H, Hp):
    """(..., 4*H) -> (..., 4*Hp): zero-pad each of the 4 gate slabs to Hp."""
    lead = w.shape[:-1]
    w4 = w.reshape(*lead, 4, H)
    w4 = jnp.pad(w4, [(0, 0)] * len(lead) + [(0, 0), (0, Hp - H)])
    return w4.reshape(*lead, 4 * Hp)


def _pad_rows(w, H, Hp):
    """(H, N) -> (Hp, N): zero-pad the hidden-input rows."""
    return jnp.pad(w, ((0, Hp - H), (0, 0)))


def lstm_model_forward(x_btd, params, *, hidden_size):
    """x_btd: (B, T, D) float32, batch_first like the PyTorch module."""
    B, T, D = x_btd.shape
    H = hidden_size
    Hp = _round_up(H, 128)   # lane-tile aligned gate slabs
    Bp = _round_up(B, 8)     # sublane-aligned per-step row slices

    (wih1, whh1, b1, wih2, whh2, b2, wfc, bfc) = params

    # Pad weights: gate columns to Hp per slab, hidden-input rows to Hp.
    # Padded hidden units get zero weights/bias => their h, c stay exactly 0
    # and never pollute the real units; padded batch rows are independent.
    wih1_p = _pad_gate_cols(wih1, H, Hp)                      # (D,  4Hp)
    whh1_p = _pad_gate_cols(_pad_rows(whh1, H, Hp), H, Hp)    # (Hp, 4Hp)
    b1_p = _pad_gate_cols(b1, H, Hp)                          # (1,  4Hp)
    wih2_p = _pad_gate_cols(_pad_rows(wih2, H, Hp), H, Hp)    # (Hp, 4Hp)
    whh2_p = _pad_gate_cols(_pad_rows(whh2, H, Hp), H, Hp)    # (Hp, 4Hp)
    b2_p = _pad_gate_cols(b2, H, Hp)                          # (1,  4Hp)

    # Time-major, batch-padded, flattened: row t*Bp + b holds x[b, t, :].
    x_tbd = jnp.transpose(x_btd, (1, 0, 2))
    x_tbd = jnp.pad(x_tbd, ((0, 0), (0, Bp - B), (0, 0)))
    x_flat = x_tbd.reshape(T * Bp, D)

    kernel = functools.partial(_lstm_kernel, seq_len=T, batch_pad=Bp,
                               hidden_pad=Hp)
    full = lambda i: (0, 0)

    h2 = pl.pallas_call(
        kernel,
        out_shape=jax.ShapeDtypeStruct((Bp, Hp), jnp.float32),
        grid_spec=pltpu.PrefetchScalarGridSpec(
            num_scalar_prefetch=0,
            grid=(1,),  # single invocation: time handled inside the kernel
            in_specs=[
                pl.BlockSpec((T * Bp, D), full),     # x, time-major flattened
                pl.BlockSpec((D, 4 * Hp), full),     # W_ih layer 1 (pre-T, padded)
                pl.BlockSpec((Hp, 4 * Hp), full),    # W_hh layer 1
                pl.BlockSpec((1, 4 * Hp), full),     # b_ih + b_hh layer 1
                pl.BlockSpec((Hp, 4 * Hp), full),    # W_ih layer 2
                pl.BlockSpec((Hp, 4 * Hp), full),    # W_hh layer 2
                pl.BlockSpec((1, 4 * Hp), full),     # bias layer 2
            ],
            out_specs=pl.BlockSpec((Bp, Hp), full),  # lane-dense final h2
            scratch_shapes=[
                pltpu.VMEM((T * Bp, 4 * Hp), jnp.float32),  # hoisted gate projections
                pltpu.VMEM((T * Bp, Hp), jnp.float32),      # layer-1 h sequence
            ],
        ),
        compiler_params=pltpu.CompilerParams(
            dimension_semantics=("arbitrary",)),
    )(x_flat, wih1_p, whh1_p, b1_p, wih2_p, whh2_p, b2_p)

    # Final fc + sigmoid on the tiny (B, H) hidden state in plain JAX — avoids
    # the 1-lane masked-store output anti-pattern inside the kernel.
    h_last = h2[:B, :H]
    return jax.nn.sigmoid(h_last @ wfc + bfc)
    # TODO(synk): for very long sequences, chunk the time axis over the grid
    # (Tc steps per grid iteration) instead of holding all T*Bp rows in VMEM.


def init_params(key, input_size, hidden_size, output_size):
    """Deterministic params, PyTorch-style U(-1/sqrt(H), 1/sqrt(H)) init.
    Weights stored transposed relative to PyTorch: (in_features, 4H)."""
    H = hidden_size
    k = 1.0 / jnp.sqrt(jnp.float32(H))
    keys = jax.random.split(key, 10)
    u = lambda kk, shape: jax.random.uniform(kk, shape, jnp.float32, -k, k)
    wih1 = u(keys[0], (input_size, 4 * H))
    whh1 = u(keys[1], (H, 4 * H))
    b1 = u(keys[2], (1, 4 * H)) + u(keys[3], (1, 4 * H))   # b_ih + b_hh
    wih2 = u(keys[4], (H, 4 * H))
    whh2 = u(keys[5], (H, 4 * H))
    b2 = u(keys[6], (1, 4 * H)) + u(keys[7], (1, 4 * H))
    wfc = u(keys[8], (H, output_size))
    bfc = u(keys[9], (1, output_size))
    return (wih1, whh1, b1, wih2, whh2, b2, wfc, bfc)


def _reference_forward(x_btd, params, *, hidden_size):
    """Pure-JAX reference of the PyTorch module forward, for validation."""
    (wih1, whh1, b1, wih2, whh2, b2, wfc, bfc) = params
    B, T, _ = x_btd.shape
    H = hidden_size

    def cell(x, h, c, wih, whh, b):
        gates = x @ wih + h @ whh + b
        i = jax.nn.sigmoid(gates[:, 0 * H:1 * H])
        f = jax.nn.sigmoid(gates[:, 1 * H:2 * H])
        g = jnp.tanh(gates[:, 2 * H:3 * H])
        o = jax.nn.sigmoid(gates[:, 3 * H:4 * H])
        c = f * c + i * g
        h = o * jnp.tanh(c)
        return h, c

    h1 = c1 = h2 = c2 = jnp.zeros((B, H), jnp.float32)
    for t in range(T):
        x_t = x_btd[:, t, :]
        h1, c1 = cell(x_t, h1, c1, wih1, whh1, b1)
        h2, c2 = cell(h1, h2, c2, wih2, whh2, b2)
    return jax.nn.sigmoid(h2 @ wfc + bfc)


if __name__ == "__main__":
    # Small shapes consistent with the module's forward: (batch, seq, features)
    B, T, D = 2, 8, 16
    H = 32          # hidden_size (small stand-in for 50)
    OUT = 1         # output_size

    key = jax.random.PRNGKey(0)
    kx, kp = jax.random.split(key)
    x = jax.random.normal(kx, (B, T, D), dtype=jnp.float32)
    params = init_params(kp, D, H, OUT)

    out = lstm_model_forward(x, params, hidden_size=H)
    out = jax.block_until_ready(out)

    ref = _reference_forward(x, params, hidden_size=H)
    assert out.shape == (B, OUT)
    assert jnp.allclose(out, ref, atol=1e-5, rtol=1e-5), (out, ref)
    print("KERNEL_OK")
</pallas_src>

<mosaic_0001>
module attributes {stable_mosaic.version = 11 : i64} {
  func.func @_lstm_kernel(%arg0: i32, %arg1: memref<64x16xf32, #tpu.memory_space<vmem>>, %arg2: memref<16x512xf32, #tpu.memory_space<vmem>>, %arg3: memref<128x512xf32, #tpu.memory_space<vmem>>, %arg4: memref<1x512xf32, #tpu.memory_space<vmem>>, %arg5: memref<128x512xf32, #tpu.memory_space<vmem>>, %arg6: memref<128x512xf32, #tpu.memory_space<vmem>>, %arg7: memref<1x512xf32, #tpu.memory_space<vmem>>, %arg8: memref<8x128xf32, #tpu.memory_space<vmem>>, %arg9: memref<64x512xf32, #tpu.memory_space<vmem>>, %arg10: memref<64x128xf32, #tpu.memory_space<vmem>>) attributes {dimension_semantics = [#tpu.dimension_semantics<arbitrary>], iteration_bounds = array<i64: 1>, scalar_prefetch = 0 : i64, scratch_operands = 2 : i64, tpu.core_type = #tpu.core_type<tc>, window_params = [{pipeline_mode = #tpu.pipeline_mode<synchronous>, transform_indices = @transform_0, window_bounds = array<i64: 64, 16>}, {pipeline_mode = #tpu.pipeline_mode<synchronous>, transform_indices = @transform_1, window_bounds = array<i64: 16, 512>}, {pipeline_mode = #tpu.pipeline_mode<synchronous>, transform_indices = @transform_2, window_bounds = array<i64: 128, 512>}, {pipeline_mode = #tpu.pipeline_mode<synchronous>, transform_indices = @transform_3, window_bounds = array<i64: 1, 512>}, {pipeline_mode = #tpu.pipeline_mode<synchronous>, transform_indices = @transform_4, window_bounds = array<i64: 128, 512>}, {pipeline_mode = #tpu.pipeline_mode<synchronous>, transform_indices = @transform_5, window_bounds = array<i64: 128, 512>}, {pipeline_mode = #tpu.pipeline_mode<synchronous>, transform_indices = @transform_6, window_bounds = array<i64: 1, 512>}, {pipeline_mode = #tpu.pipeline_mode<synchronous>, transform_indices = @transform_7, window_bounds = array<i64: 8, 128>}]} {
    %c0 = arith.constant 0 : index
    %c0_0 = arith.constant 0 : index
    %0 = vector.load %arg1[%c0, %c0_0] : memref<64x16xf32, #tpu.memory_space<vmem>>, vector<64x16xf32>
    %c0_1 = arith.constant 0 : index
    %c0_2 = arith.constant 0 : index
    %1 = vector.load %arg2[%c0_1, %c0_2] : memref<16x512xf32, #tpu.memory_space<vmem>>, vector<16x512xf32>
    %cst = arith.constant dense<0.000000e+00> : vector<64x512xf32>
    %2 = tpu.matmul %0, %1, %cst {dimension_numbers = #tpu.dot_dimension_numbers<[1], [0], [0], [1], [0, 0, 1, 1], [], []>} : vector<64x16xf32>, vector<16x512xf32>, vector<64x512xf32> -> vector<64x512xf32>
    %c0_3 = arith.constant 0 : index
    %c0_4 = arith.constant 0 : index
    %3 = vector.load %arg4[%c0_3, %c0_4] : memref<1x512xf32, #tpu.memory_space<vmem>>, vector<1x512xf32>
    %4 = vector.broadcast %3 : vector<1x512xf32> to vector<64x512xf32>
    %5 = arith.addf %2, %4 : vector<64x512xf32>
    %c0_5 = arith.constant 0 : index
    %c0_6 = arith.constant 0 : index
    %6 = vector.load %arg9[%c0_5, %c0_6] : memref<64x512xf32, #tpu.memory_space<vmem>>, vector<64x512xf32>
    tpu.vector_store %arg9[%c0_5, %c0_6], %5 {strides = array<i32>} : memref<64x512xf32, #tpu.memory_space<vmem>>, vector<64x512xf32>,
    %cst_7 = arith.constant 0.000000e+00 : f32
    %7 = vector.broadcast %cst_7 : f32 to vector<8x128xf32>
    %c0_i32 = arith.constant 0 : i32
    %c8_i32 = arith.constant 8 : i32
    %8 = arith.muli %c0_i32, %c8_i32 : i32
    %9 = tpu.assume_multiple %8, 8 : i32
    %10 = arith.index_cast %9 : i32 to index
    %c0_8 = arith.constant 0 : index
    %11 = vector.load %arg9[%10, %c0_8] : memref<64x512xf32, #tpu.memory_space<vmem>>, vector<8x512xf32>
    %c0_9 = arith.constant 0 : index
    %c0_10 = arith.constant 0 : index
    %12 = vector.load %arg3[%c0_9, %c0_10] : memref<128x512xf32, #tpu.memory_space<vmem>>, vector<128x512xf32>
    %cst_11 = arith.constant dense<0.000000e+00> : vector<8x512xf32>
    %13 = tpu.matmul %7, %12, %cst_11 {dimension_numbers = #tpu.dot_dimension_numbers<[1], [0], [0], [1], [0, 0, 1, 1], [], []>} : vector<8x128xf32>, vector<128x512xf32>, vector<8x512xf32> -> vector<8x512xf32>
    %14 = arith.addf %11, %13 : vector<8x512xf32>
    %15 = vector.extract_strided_slice %14 {offsets = [0, 0], sizes = [8, 128], strides = [1, 1]} : vector<8x512xf32> to vector<8x128xf32>
    %16 = arith.negf %15 : vector<8x128xf32>
    %17 = math.exp %16 : vector<8x128xf32>
    %cst_12 = arith.constant 1.000000e+00 : f32
    %18 = vector.broadcast %cst_12 : f32 to vector<8x128xf32>
    %19 = arith.addf %18, %17 : vector<8x128xf32>
    %20 = arith.divf %18, %19 : vector<8x128xf32>
    %21 = vector.extract_strided_slice %14 {offsets = [0, 128], sizes = [8, 128], strides = [1, 1]} : vector<8x512xf32> to vector<8x128xf32>
    %22 = arith.negf %21 : vector<8x128xf32>
    %23 = math.exp %22 : vector<8x128xf32>
    %cst_13 = arith.constant 1.000000e+00 : f32
    %24 = vector.broadcast %cst_13 : f32 to vector<8x128xf32>
    %25 = arith.addf %24, %23 : vector<8x128xf32>
    %26 = arith.divf %24, %25 : vector<8x128xf32>
    %27 = vector.extract_strided_slice %14 {offsets = [0, 256], sizes = [8, 128], strides = [1, 1]} : vector<8x512xf32> to vector<8x128xf32>
    %28 = math.tanh %27 : vector<8x128xf32>
    %29 = vector.extract_strided_slice %14 {offsets = [0, 384], sizes = [8, 128], strides = [1, 1]} : vector<8x512xf32> to vector<8x128xf32>
    %30 = arith.negf %29 : vector<8x128xf32>
    %31 = math.exp %30 : vector<8x128xf32>
    %cst_14 = arith.constant 1.000000e+00 : f32
    %32 = vector.broadcast %cst_14 : f32 to vector<8x128xf32>
    %33 = arith.addf %32, %31 : vector<8x128xf32>
    %34 = arith.divf %32, %33 : vector<8x128xf32>
    %35 = arith.mulf %26, %7 : vector<8x128xf32>
    %36 = arith.mulf %20, %28 : vector<8x128xf32>
    %37 = arith.addf %35, %36 : vector<8x128xf32>
    %38 = math.tanh %37 : vector<8x128xf32>
    %39 = arith.mulf %34, %38 : vector<8x128xf32>
    %40 = arith.index_cast %9 : i32 to index
    %c0_15 = arith.constant 0 : index
    %41 = vector.load %arg10[%40, %c0_15] : memref<64x128xf32, #tpu.memory_space<vmem>>, vector<8x128xf32>
    tpu.vector_store %arg10[%40, %c0_15], %39 {strides = array<i32>} : memref<64x128xf32, #tpu.memory_space<vmem>>, vector<8x128xf32>,
    %c1_i32 = arith.constant 1 : i32
    %c8_i32_16 = arith.constant 8 : i32
    %42 = arith.muli %c1_i32, %c8_i32_16 : i32
    %43 = tpu.assume_multiple %42, 8 : i32
    %44 = arith.index_cast %43 : i32 to index
    %c0_17 = arith.constant 0 : index
    %45 = vector.load %arg9[%44, %c0_17] : memref<64x512xf32, #tpu.memory_space<vmem>>, vector<8x512xf32>
    %c0_18 = arith.constant 0 : index
    %c0_19 = arith.constant 0 : index
    %46 = vector.load %arg3[%c0_18, %c0_19] : memref<128x512xf32, #tpu.memory_space<vmem>>, vector<128x512xf32>
    %cst_20 = arith.constant dense<0.000000e+00> : vector<8x512xf32>
    %47 = tpu.matmul %39, %46, %cst_20 {dimension_numbers = #tpu.dot_dimension_numbers<[1], [0], [0], [1], [0, 0, 1, 1], [], []>} : vector<8x128xf32>, vector<128x512xf32>, vector<8x512xf32> -> vector<8x512xf32>
    %48 = arith.addf %45, %47 : vector<8x512xf32>
    %49 = vector.extract_strided_slice %48 {offsets = [0, 0], sizes = [8, 128], strides = [1, 1]} : vector<8x512xf32> to vector<8x128xf32>
    %50 = arith.negf %49 : vector<8x128xf32>
    %51 = math.exp %50 : vector<8x128xf32>
    %cst_21 = arith.constant 1.000000e+00 : f32
    %52 = vector.broadcast %cst_21 : f32 to vector<8x128xf32>
    %53 = arith.addf %52, %51 : vector<8x128xf32>
    %54 = arith.divf %52, %53 : vector<8x128xf32>
    %55 = vector.extract_strided_slice %48 {offsets = [0, 128], sizes = [8, 128], strides = [1, 1]} : vector<8x512xf32> to vector<8x128xf32>
    %56 = arith.negf %55 : vector<8x128xf32>
    %57 = math.exp %56 : vector<8x128xf32>
    %cst_22 = arith.constant 1.000000e+00 : f32
    %58 = vector.broadcast %cst_22 : f32 to vector<8x128xf32>
    %59 = arith.addf %58, %57 : vector<8x128xf32>
    %60 = arith.divf %58, %59 : vector<8x128xf32>
    %61 = vector.extract_strided_slice %48 {offsets = [0, 256], sizes = [8, 128], strides = [1, 1]} : vector<8x512xf32> to vector<8x128xf32>
    %62 = math.tanh %61 : vector<8x128xf32>
    %63 = vector.extract_strided_slice %48 {offsets = [0, 384], sizes = [8, 128], strides = [1, 1]} : vector<8x512xf32> to vector<8x128xf32>
    %64 = arith.negf %63 : vector<8x128xf32>
    %65 = math.exp %64 : vector<8x128xf32>
    %cst_23 = arith.constant 1.000000e+00 : f32
    %66 = vector.broadcast %cst_23 : f32 to vector<8x128xf32>
    %67 = arith.addf %66, %65 : vector<8x128xf32>
    %68 = arith.divf %66, %67 : vector<8x128xf32>
    %69 = arith.mulf %60, %37 : vector<8x128xf32>
    %70 = arith.mulf %54, %62 : vector<8x128xf32>
    %71 = arith.addf %69, %70 : vector<8x128xf32>
    %72 = math.tanh %71 : vector<8x128xf32>
    %73 = arith.mulf %68, %72 : vector<8x128xf32>
    %74 = arith.index_cast %43 : i32 to index
    %c0_24 = arith.constant 0 : index
    %75 = vector.load %arg10[%74, %c0_24] : memref<64x128xf32, #tpu.memory_space<vmem>>, vector<8x128xf32>
    tpu.vector_store %arg10[%74, %c0_24], %73 {strides = array<i32>} : memref<64x128xf32, #tpu.memory_space<vmem>>, vector<8x128xf32>,
    %c2_i32 = arith.constant 2 : i32
    %c8_i32_25 = arith.constant 8 : i32
    %76 = arith.muli %c2_i32, %c8_i32_25 : i32
    %77 = tpu.assume_multiple %76, 8 : i32
    %78 = arith.index_cast %77 : i32 to index
    %c0_26 = arith.constant 0 : index
    %79 = vector.load %arg9[%78, %c0_26] : memref<64x512xf32, #tpu.memory_space<vmem>>, vector<8x512xf32>
    %c0_27 = arith.constant 0 : index
    %c0_28 = arith.constant 0 : index
    %80 = vector.load %arg3[%c0_27, %c0_28] : memref<128x512xf32, #tpu.memory_space<vmem>>, vector<128x512xf32>
    %cst_29 = arith.constant dense<0.000000e+00> : vector<8x512xf32>
    %81 = tpu.matmul %73, %80, %cst_29 {dimension_numbers = #tpu.dot_dimension_numbers<[1], [0], [0], [1], [0, 0, 1, 1], [], []>} : vector<8x128xf32>, vector<128x512xf32>, vector<8x512xf32> -> vector<8x512xf32>
    %82 = arith.addf %79, %81 : vector<8x512xf32>
    %83 = vector.extract_strided_slice %82 {offsets = [0, 0], sizes = [8, 128], strides = [1, 1]} : vector<8x512xf32> to vector<8x128xf32>
    %84 = arith.negf %83 : vector<8x128xf32>
    %85 = math.exp %84 : vector<8x128xf32>
    %cst_30 = arith.constant 1.000000e+00 : f32
    %86 = vector.broadcast %cst_30 : f32 to vector<8x128xf32>
    %87 = arith.addf %86, %85 : vector<8x128xf32>
    %88 = arith.divf %86, %87 : vector<8x128xf32>
    %89 = vector.extract_strided_slice %82 {offsets = [0, 128], sizes = [8, 128], strides = [1, 1]} : vector<8x512xf32> to vector<8x128xf32>
    %90 = arith.negf %89 : vector<8x128xf32>
    %91 = math.exp %90 : vector<8x128xf32>
    %cst_31 = arith.constant 1.000000e+00 : f32
    %92 = vector.broadcast %cst_31 : f32 to vector<8x128xf32>
    %93 = arith.addf %92, %91 : vector<8x128xf32>
    %94 = arith.divf %92, %93 : vector<8x128xf32>
    %95 = vector.extract_strided_slice %82 {offsets = [0, 256], sizes = [8, 128], strides = [1, 1]} : vector<8x512xf32> to vector<8x128xf32>
    %96 = math.tanh %95 : vector<8x128xf32>
    %97 = vector.extract_strided_slice %82 {offsets = [0, 384], sizes = [8, 128], strides = [1, 1]} : vector<8x512xf32> to vector<8x128xf32>
    %98 = arith.negf %97 : vector<8x128xf32>
    %99 = math.exp %98 : vector<8x128xf32>
    %cst_32 = arith.constant 1.000000e+00 : f32
    %100 = vector.broadcast %cst_32 : f32 to vector<8x128xf32>
    %101 = arith.addf %100, %99 : vector<8x128xf32>
    %102 = arith.divf %100, %101 : vector<8x128xf32>
    %103 = arith.mulf %94, %71 : vector<8x128xf32>
    %104 = arith.mulf %88, %96 : vector<8x128xf32>
    %105 = arith.addf %103, %104 : vector<8x128xf32>
    %106 = math.tanh %105 : vector<8x128xf32>
    %107 = arith.mulf %102, %106 : vector<8x128xf32>
    %108 = arith.index_cast %77 : i32 to index
    %c0_33 = arith.constant 0 : index
    %109 = vector.load %arg10[%108, %c0_33] : memref<64x128xf32, #tpu.memory_space<vmem>>, vector<8x128xf32>
    tpu.vector_store %arg10[%108, %c0_33], %107 {strides = array<i32>} : memref<64x128xf32, #tpu.memory_space<vmem>>, vector<8x128xf32>,
    %c3_i32 = arith.constant 3 : i32
    %c8_i32_34 = arith.constant 8 : i32
    %110 = arith.muli %c3_i32, %c8_i32_34 : i32
    %111 = tpu.assume_multiple %110, 8 : i32
    %112 = arith.index_cast %111 : i32 to index
    %c0_35 = arith.constant 0 : index
    %113 = vector.load %arg9[%112, %c0_35] : memref<64x512xf32, #tpu.memory_space<vmem>>, vector<8x512xf32>
    %c0_36 = arith.constant 0 : index
    %c0_37 = arith.constant 0 : index
    %114 = vector.load %arg3[%c0_36, %c0_37] : memref<128x512xf32, #tpu.memory_space<vmem>>, vector<128x512xf32>
    %cst_38 = arith.constant dense<0.000000e+00> : vector<8x512xf32>
    %115 = tpu.matmul %107, %114, %cst_38 {dimension_numbers = #tpu.dot_dimension_numbers<[1], [0], [0], [1], [0, 0, 1, 1], [], []>} : vector<8x128xf32>, vector<128x512xf32>, vector<8x512xf32> -> vector<8x512xf32>
    %116 = arith.addf %113, %115 : vector<8x512xf32>
    %117 = vector.extract_strided_slice %116 {offsets = [0, 0], sizes = [8, 128], strides = [1, 1]} : vector<8x512xf32> to vector<8x128xf32>
    %118 = arith.negf %117 : vector<8x128xf32>
    %119 = math.exp %118 : vector<8x128xf32>
    %cst_39 = arith.constant 1.000000e+00 : f32
    %120 = vector.broadcast %cst_39 : f32 to vector<8x128xf32>
    %121 = arith.addf %120, %119 : vector<8x128xf32>
    %122 = arith.divf %120, %121 : vector<8x128xf32>
    %123 = vector.extract_strided_slice %116 {offsets = [0, 128], sizes = [8, 128], strides = [1, 1]} : vector<8x512xf32> to vector<8x128xf32>
    %124 = arith.negf %123 : vector<8x128xf32>
    %125 = math.exp %124 : vector<8x128xf32>
    %cst_40 = arith.constant 1.000000e+00 : f32
    %126 = vector.broadcast %cst_40 : f32 to vector<8x128xf32>
    %127 = arith.addf %126, %125 : vector<8x128xf32>
    %128 = arith.divf %126, %127 : vector<8x128xf32>
    %129 = vector.extract_strided_slice %116 {offsets = [0, 256], sizes = [8, 128], strides = [1, 1]} : vector<8x512xf32> to vector<8x128xf32>
    %130 = math.tanh %129 : vector<8x128xf32>
    %131 = vector.extract_strided_slice %116 {offsets = [0, 384], sizes = [8, 128], strides = [1, 1]} : vector<8x512xf32> to vector<8x128xf32>
    %132 = arith.negf %131 : vector<8x128xf32>
    %133 = math.exp %132 : vector<8x128xf32>
    %cst_41 = arith.constant 1.000000e+00 : f32
    %134 = vector.broadcast %cst_41 : f32 to vector<8x128xf32>
    %135 = arith.addf %134, %133 : vector<8x128xf32>
    %136 = arith.divf %134, %135 : vector<8x128xf32>
    %137 = arith.mulf %128, %105 : vector<8x128xf32>
    %138 = arith.mulf %122, %130 : vector<8x128xf32>
    %139 = arith.addf %137, %138 : vector<8x128xf32>
    %140 = math.tanh %139 : vector<8x128xf32>
    %141 = arith.mulf %136, %140 : vector<8x128xf32>
    %142 = arith.index_cast %111 : i32 to index
    %c0_42 = arith.constant 0 : index
    %143 = vector.load %arg10[%142, %c0_42] : memref<64x128xf32, #tpu.memory_space<vmem>>, vector<8x128xf32>
    tpu.vector_store %arg10[%142, %c0_42], %141 {strides = array<i32>} : memref<64x128xf32, #tpu.memory_space<vmem>>, vector<8x128xf32>,
    %c4_i32 = arith.constant 4 : i32
    %c8_i32_43 = arith.constant 8 : i32
    %144 = arith.muli %c4_i32, %c8_i32_43 : i32
    %145 = tpu.assume_multiple %144, 8 : i32
    %146 = arith.index_cast %145 : i32 to index
    %c0_44 = arith.constant 0 : index
    %147 = vector.load %arg9[%146, %c0_44] : memref<64x512xf32, #tpu.memory_space<vmem>>, vector<8x512xf32>
    %c0_45 = arith.constant 0 : index
    %c0_46 = arith.constant 0 : index
    %148 = vector.load %arg3[%c0_45, %c0_46] : memref<128x512xf32, #tpu.memory_space<vmem>>, vector<128x512xf32>
    %cst_47 = arith.constant dense<0.000000e+00> : vector<8x512xf32>
    %149 = tpu.matmul %141, %148, %cst_47 {dimension_numbers = #tpu.dot_dimension_numbers<[1], [0], [0], [1], [0, 0, 1, 1], [], []>} : vector<8x128xf32>, vector<128x512xf32>, vector<8x512xf32> -> vector<8x512xf32>
    %150 = arith.addf %147, %149 : vector<8x512xf32>
    %151 = vector.extract_strided_slice %150 {offsets = [0, 0], sizes = [8, 128], strides = [1, 1]} : vector<8x512xf32> to vector<8x128xf32>
    %152 = arith.negf %151 : vector<8x128xf32>
    %153 = math.exp %152 : vector<8x128xf32>
    %cst_48 = arith.constant 1.000000e+00 : f32
    %154 = vector.broadcast %cst_48 : f32 to vector<8x128xf32>
    %155 = arith.addf %154, %153 : vector<8x128xf32>
    %156 = arith.divf %154, %155 : vector<8x128xf32>
    %157 = vector.extract_strided_slice %150 {offsets = [0, 128], sizes = [8, 128], strides = [1, 1]} : vector<8x512xf32> to vector<8x128xf32>
    %158 = arith.negf %157 : vector<8x128xf32>
    %159 = math.exp %158 : vector<8x128xf32>
    %cst_49 = arith.constant 1.000000e+00 : f32
    %160 = vector.broadcast %cst_49 : f32 to vector<8x128xf32>
    %161 = arith.addf %160, %159 : vector<8x128xf32>
    %162 = arith.divf %160, %161 : vector<8x128xf32>
    %163 = vector.extract_strided_slice %150 {offsets = [0, 256], sizes = [8, 128], strides = [1, 1]} : vector<8x512xf32> to vector<8x128xf32>
    %164 = math.tanh %163 : vector<8x128xf32>
    %165 = vector.extract_strided_slice %150 {offsets = [0, 384], sizes = [8, 128], strides = [1, 1]} : vector<8x512xf32> to vector<8x128xf32>
    %166 = arith.negf %165 : vector<8x128xf32>
    %167 = math.exp %166 : vector<8x128xf32>
    %cst_50 = arith.constant 1.000000e+00 : f32
    %168 = vector.broadcast %cst_50 : f32 to vector<8x128xf32>
    %169 = arith.addf %168, %167 : vector<8x128xf32>
    %170 = arith.divf %168, %169 : vector<8x128xf32>
    %171 = arith.mulf %162, %139 : vector<8x128xf32>
    %172 = arith.mulf %156, %164 : vector<8x128xf32>
    %173 = arith.addf %171, %172 : vector<8x128xf32>
    %174 = math.tanh %173 : vector<8x128xf32>
    %175 = arith.mulf %170, %174 : vector<8x128xf32>
    %176 = arith.index_cast %145 : i32 to index
    %c0_51 = arith.constant 0 : index
    %177 = vector.load %arg10[%176, %c0_51] : memref<64x128xf32, #tpu.memory_space<vmem>>, vector<8x128xf32>
    tpu.vector_store %arg10[%176, %c0_51], %175 {strides = array<i32>} : memref<64x128xf32, #tpu.memory_space<vmem>>, vector<8x128xf32>,
    %c5_i32 = arith.constant 5 : i32
    %c8_i32_52 = arith.constant 8 : i32
    %178 = arith.muli %c5_i32, %c8_i32_52 : i32
    %179 = tpu.assume_multiple %178, 8 : i32
    %180 = arith.index_cast %179 : i32 to index
    %c0_53 = arith.constant 0 : index
    %181 = vector.load %arg9[%180, %c0_53] : memref<64x512xf32, #tpu.memory_space<vmem>>, vector<8x512xf32>
    %c0_54 = arith.constant 0 : index
    %c0_55 = arith.constant 0 : index
    %182 = vector.load %arg3[%c0_54, %c0_55] : memref<128x512xf32, #tpu.memory_space<vmem>>, vector<128x512xf32>
    %cst_56 = arith.constant dense<0.000000e+00> : vector<8x512xf32>
    %183 = tpu.matmul %175, %182, %cst_56 {dimension_numbers = #tpu.dot_dimension_numbers<[1], [0], [0], [1], [0, 0, 1, 1], [], []>} : vector<8x128xf32>, vector<128x512xf32>, vector<8x512xf32> -> vector<8x512xf32>
    %184 = arith.addf %181, %183 : vector<8x512xf32>
    %185 = vector.extract_strided_slice %184 {offsets = [0, 0], sizes = [8, 128], strides = [1, 1]} : vector<8x512xf32> to vector<8x128xf32>
    %186 = arith.negf %185 : vector<8x128xf32>
    %187 = math.exp %186 : vector<8x128xf32>
    %cst_57 = arith.constant 1.000000e+00 : f32
    %188 = vector.broadcast %cst_57 : f32 to vector<8x128xf32>
    %189 = arith.addf %188, %187 : vector<8x128xf32>
    %190 = arith.divf %188, %189 : vector<8x128xf32>
    %191 = vector.extract_strided_slice %184 {offsets = [0, 128], sizes = [8, 128], strides = [1, 1]} : vector<8x512xf32> to vector<8x128xf32>
    %192 = arith.negf %191 : vector<8x128xf32>
    %193 = math.exp %192 : vector<8x128xf32>
    %cst_58 = arith.constant 1.000000e+00 : f32
    %194 = vector.broadcast %cst_58 : f32 to vector<8x128xf32>
    %195 = arith.addf %194, %193 : vector<8x128xf32>
    %196 = arith.divf %194, %195 : vector<8x128xf32>
    %197 = vector.extract_strided_slice %184 {offsets = [0, 256], sizes = [8, 128], strides = [1, 1]} : vector<8x512xf32> to vector<8x128xf32>
    %198 = math.tanh %197 : vector<8x128xf32>
    %199 = vector.extract_strided_slice %184 {offsets = [0, 384], sizes = [8, 128], strides = [1, 1]} : vector<8x512xf32> to vector<8x128xf32>
    %200 = arith.negf %199 : vector<8x128xf32>
    %201 = math.exp %200 : vector<8x128xf32>
    %cst_59 = arith.constant 1.000000e+00 : f32
    %202 = vector.broadcast %cst_59 : f32 to vector<8x128xf32>
    %203 = arith.addf %202, %201 : vector<8x128xf32>
    %204 = arith.divf %202, %203 : vector<8x128xf32>
    %205 = arith.mulf %196, %173 : vector<8x128xf32>
    %206 = arith.mulf %190, %198 : vector<8x128xf32>
    %207 = arith.addf %205, %206 : vector<8x128xf32>
    %208 = math.tanh %207 : vector<8x128xf32>
    %209 = arith.mulf %204, %208 : vector<8x128xf32>
    %210 = arith.index_cast %179 : i32 to index
    %c0_60 = arith.constant 0 : index
    %211 = vector.load %arg10[%210, %c0_60] : memref<64x128xf32, #tpu.memory_space<vmem>>, vector<8x128xf32>
    tpu.vector_store %arg10[%210, %c0_60], %209 {strides = array<i32>} : memref<64x128xf32, #tpu.memory_space<vmem>>, vector<8x128xf32>,
    %c6_i32 = arith.constant 6 : i32
    %c8_i32_61 = arith.constant 8 : i32
    %212 = arith.muli %c6_i32, %c8_i32_61 : i32
    %213 = tpu.assume_multiple %212, 8 : i32
    %214 = arith.index_cast %213 : i32 to index
    %c0_62 = arith.constant 0 : index
    %215 = vector.load %arg9[%214, %c0_62] : memref<64x512xf32, #tpu.memory_space<vmem>>, vector<8x512xf32>
    %c0_63 = arith.constant 0 : index
    %c0_64 = arith.constant 0 : index
    %216 = vector.load %arg3[%c0_63, %c0_64] : memref<128x512xf32, #tpu.memory_space<vmem>>, vector<128x512xf32>
    %cst_65 = arith.constant dense<0.000000e+00> : vector<8x512xf32>
    %217 = tpu.matmul %209, %216, %cst_65 {dimension_numbers = #tpu.dot_dimension_numbers<[1], [0], [0], [1], [0, 0, 1, 1], [], []>} : vector<8x128xf32>, vector<128x512xf32>, vector<8x512xf32> -> vector<8x512xf32>
    %218 = arith.addf %215, %217 : vector<8x512xf32>
    %219 = vector.extract_strided_slice %218 {offsets = [0, 0], sizes = [8, 128], strides = [1, 1]} : vector<8x512xf32> to vector<8x128xf32>
    %220 = arith.negf %219 : vector<8x128xf32>
    %221 = math.exp %220 : vector<8x128xf32>
    %cst_66 = arith.constant 1.000000e+00 : f32
    %222 = vector.broadcast %cst_66 : f32 to vector<8x128xf32>
    %223 = arith.addf %222, %221 : vector<8x128xf32>
    %224 = arith.divf %222, %223 : vector<8x128xf32>
    %225 = vector.extract_strided_slice %218 {offsets = [0, 128], sizes = [8, 128], strides = [1, 1]} : vector<8x512xf32> to vector<8x128xf32>
    %226 = arith.negf %225 : vector<8x128xf32>
    %227 = math.exp %226 : vector<8x128xf32>
    %cst_67 = arith.constant 1.000000e+00 : f32
    %228 = vector.broadcast %cst_67 : f32 to vector<8x128xf32>
    %229 = arith.addf %228, %227 : vector<8x128xf32>
    %230 = arith.divf %228, %229 : vector<8x128xf32>
    %231 = vector.extract_strided_slice %218 {offsets = [0, 256], sizes = [8, 128], strides = [1, 1]} : vector<8x512xf32> to vector<8x128xf32>
    %232 = math.tanh %231 : vector<8x128xf32>
    %233 = vector.extract_strided_slice %218 {offsets = [0, 384], sizes = [8, 128], strides = [1, 1]} : vector<8x512xf32> to vector<8x128xf32>
    %234 = arith.negf %233 : vector<8x128xf32>
    %235 = math.exp %234 : vector<8x128xf32>
    %cst_68 = arith.constant 1.000000e+00 : f32
    %236 = vector.broadcast %cst_68 : f32 to vector<8x128xf32>
    %237 = arith.addf %236, %235 : vector<8x128xf32>
    %238 = arith.divf %236, %237 : vector<8x128xf32>
    %239 = arith.mulf %230, %207 : vector<8x128xf32>
    %240 = arith.mulf %224, %232 : vector<8x128xf32>
    %241 = arith.addf %239, %240 : vector<8x128xf32>
    %242 = math.tanh %241 : vector<8x128xf32>
    %243 = arith.mulf %238, %242 : vector<8x128xf32>
    %244 = arith.index_cast %213 : i32 to index
    %c0_69 = arith.constant 0 : index
    %245 = vector.load %arg10[%244, %c0_69] : memref<64x128xf32, #tpu.memory_space<vmem>>, vector<8x128xf32>
    tpu.vector_store %arg10[%244, %c0_69], %243 {strides = array<i32>} : memref<64x128xf32, #tpu.memory_space<vmem>>, vector<8x128xf32>,
    %c7_i32 = arith.constant 7 : i32
    %c8_i32_70 = arith.constant 8 : i32
    %246 = arith.muli %c7_i32, %c8_i32_70 : i32
    %247 = tpu.assume_multiple %246, 8 : i32
    %248 = arith.index_cast %247 : i32 to index
    %c0_71 = arith.constant 0 : index
    %249 = vector.load %arg9[%248, %c0_71] : memref<64x512xf32, #tpu.memory_space<vmem>>, vector<8x512xf32>
    %c0_72 = arith.constant 0 : index
    %c0_73 = arith.constant 0 : index
    %250 = vector.load %arg3[%c0_72, %c0_73] : memref<128x512xf32, #tpu.memory_space<vmem>>, vector<128x512xf32>
    %cst_74 = arith.constant dense<0.000000e+00> : vector<8x512xf32>
    %251 = tpu.matmul %243, %250, %cst_74 {dimension_numbers = #tpu.dot_dimension_numbers<[1], [0], [0], [1], [0, 0, 1, 1], [], []>} : vector<8x128xf32>, vector<128x512xf32>, vector<8x512xf32> -> vector<8x512xf32>
    %252 = arith.addf %249, %251 : vector<8x512xf32>
    %253 = vector.extract_strided_slice %252 {offsets = [0, 0], sizes = [8, 128], strides = [1, 1]} : vector<8x512xf32> to vector<8x128xf32>
    %254 = arith.negf %253 : vector<8x128xf32>
    %255 = math.exp %254 : vector<8x128xf32>
    %cst_75 = arith.constant 1.000000e+00 : f32
    %256 = vector.broadcast %cst_75 : f32 to vector<8x128xf32>
    %257 = arith.addf %256, %255 : vector<8x128xf32>
    %258 = arith.divf %256, %257 : vector<8x128xf32>
    %259 = vector.extract_strided_slice %252 {offsets = [0, 128], sizes = [8, 128], strides = [1, 1]} : vector<8x512xf32> to vector<8x128xf32>
    %260 = arith.negf %259 : vector<8x128xf32>
    %261 = math.exp %260 : vector<8x128xf32>
    %cst_76 = arith.constant 1.000000e+00 : f32
    %262 = vector.broadcast %cst_76 : f32 to vector<8x128xf32>
    %263 = arith.addf %262, %261 : vector<8x128xf32>
    %264 = arith.divf %262, %263 : vector<8x128xf32>
    %265 = vector.extract_strided_slice %252 {offsets = [0, 256], sizes = [8, 128], strides = [1, 1]} : vector<8x512xf32> to vector<8x128xf32>
    %266 = math.tanh %265 : vector<8x128xf32>
    %267 = vector.extract_strided_slice %252 {offsets = [0, 384], sizes = [8, 128], strides = [1, 1]} : vector<8x512xf32> to vector<8x128xf32>
    %268 = arith.negf %267 : vector<8x128xf32>
    %269 = math.exp %268 : vector<8x128xf32>
    %cst_77 = arith.constant 1.000000e+00 : f32
    %270 = vector.broadcast %cst_77 : f32 to vector<8x128xf32>
    %271 = arith.addf %270, %269 : vector<8x128xf32>
    %272 = arith.divf %270, %271 : vector<8x128xf32>
    %273 = arith.mulf %264, %241 : vector<8x128xf32>
    %274 = arith.mulf %258, %266 : vector<8x128xf32>
    %275 = arith.addf %273, %274 : vector<8x128xf32>
    %276 = math.tanh %275 : vector<8x128xf32>
    %277 = arith.mulf %272, %276 : vector<8x128xf32>
    %278 = arith.index_cast %247 : i32 to index
    %c0_78 = arith.constant 0 : index
    %279 = vector.load %arg10[%278, %c0_78] : memref<64x128xf32, #tpu.memory_space<vmem>>, vector<8x128xf32>
    tpu.vector_store %arg10[%278, %c0_78], %277 {strides = array<i32>} : memref<64x128xf32, #tpu.memory_space<vmem>>, vector<8x128xf32>,
    %c8_i32_79 = arith.constant 8 : i32
    %c0_80 = arith.constant 0 : index
    %c0_81 = arith.constant 0 : index
    %280 = vector.load %arg10[%c0_80, %c0_81] : memref<64x128xf32, #tpu.memory_space<vmem>>, vector<64x128xf32>
    %c0_82 = arith.constant 0 : index
    %c0_83 = arith.constant 0 : index
    %281 = vector.load %arg5[%c0_82, %c0_83] : memref<128x512xf32, #tpu.memory_space<vmem>>, vector<128x512xf32>
    %cst_84 = arith.constant dense<0.000000e+00> : vector<64x512xf32>
    %282 = tpu.matmul %280, %281, %cst_84 {dimension_numbers = #tpu.dot_dimension_numbers<[1], [0], [0], [1], [0, 0, 1, 1], [], []>} : vector<64x128xf32>, vector<128x512xf32>, vector<64x512xf32> -> vector<64x512xf32>
    %c0_85 = arith.constant 0 : index
    %c0_86 = arith.constant 0 : index
    %283 = vector.load %arg7[%c0_85, %c0_86] : memref<1x512xf32, #tpu.memory_space<vmem>>, vector<1x512xf32>
    %284 = vector.broadcast %283 : vector<1x512xf32> to vector<64x512xf32>
    %285 = arith.addf %282, %284 : vector<64x512xf32>
    %c0_87 = arith.constant 0 : index
    %c0_88 = arith.constant 0 : index
    %286 = vector.load %arg9[%c0_87, %c0_88] : memref<64x512xf32, #tpu.memory_space<vmem>>, vector<64x512xf32>
    tpu.vector_store %arg9[%c0_87, %c0_88], %285 {strides = array<i32>} : memref<64x512xf32, #tpu.memory_space<vmem>>, vector<64x512xf32>,
    %c0_i32_89 = arith.constant 0 : i32
    %c8_i32_90 = arith.constant 8 : i32
    %287 = arith.muli %c0_i32_89, %c8_i32_90 : i32
    %288 = tpu.assume_multiple %287, 8 : i32
    %289 = arith.index_cast %288 : i32 to index
    %c0_91 = arith.constant 0 : index
    %290 = vector.load %arg9[%289, %c0_91] : memref<64x512xf32, #tpu.memory_space<vmem>>, vector<8x512xf32>
    %c0_92 = arith.constant 0 : index
    %c0_93 = arith.constant 0 : index
    %291 = vector.load %arg6[%c0_92, %c0_93] : memref<128x512xf32, #tpu.memory_space<vmem>>, vector<128x512xf32>
    %cst_94 = arith.constant dense<0.000000e+00> : vector<8x512xf32>
    %292 = tpu.matmul %7, %291, %cst_94 {dimension_numbers = #tpu.dot_dimension_numbers<[1], [0], [0], [1], [0, 0, 1, 1], [], []>} : vector<8x128xf32>, vector<128x512xf32>, vector<8x512xf32> -> vector<8x512xf32>
    %293 = arith.addf %290, %292 : vector<8x512xf32>
    %294 = vector.extract_strided_slice %293 {offsets = [0, 0], sizes = [8, 128], strides = [1, 1]} : vector<8x512xf32> to vector<8x128xf32>
    %295 = arith.negf %294 : vector<8x128xf32>
    %296 = math.exp %295 : vector<8x128xf32>
    %cst_95 = arith.constant 1.000000e+00 : f32
    %297 = vector.broadcast %cst_95 : f32 to vector<8x128xf32>
    %298 = arith.addf %297, %296 : vector<8x128xf32>
    %299 = arith.divf %297, %298 : vector<8x128xf32>
    %300 = vector.extract_strided_slice %293 {offsets = [0, 128], sizes = [8, 128], strides = [1, 1]} : vector<8x512xf32> to vector<8x128xf32>
    %301 = arith.negf %300 : vector<8x128xf32>
    %302 = math.exp %301 : vector<8x128xf32>
    %cst_96 = arith.constant 1.000000e+00 : f32
    %303 = vector.broadcast %cst_96 : f32 to vector<8x128xf32>
    %304 = arith.addf %303, %302 : vector<8x128xf32>
    %305 = arith.divf %303, %304 : vector<8x128xf32>
    %306 = vector.extract_strided_slice %293 {offsets = [0, 256], sizes = [8, 128], strides = [1, 1]} : vector<8x512xf32> to vector<8x128xf32>
    %307 = math.tanh %306 : vector<8x128xf32>
    %308 = vector.extract_strided_slice %293 {offsets = [0, 384], sizes = [8, 128], strides = [1, 1]} : vector<8x512xf32> to vector<8x128xf32>
    %309 = arith.negf %308 : vector<8x128xf32>
    %310 = math.exp %309 : vector<8x128xf32>
    %cst_97 = arith.constant 1.000000e+00 : f32
    %311 = vector.broadcast %cst_97 : f32 to vector<8x128xf32>
    %312 = arith.addf %311, %310 : vector<8x128xf32>
    %313 = arith.divf %311, %312 : vector<8x128xf32>
    %314 = arith.mulf %305, %7 : vector<8x128xf32>
    %315 = arith.mulf %299, %307 : vector<8x128xf32>
    %316 = arith.addf %314, %315 : vector<8x128xf32>
    %317 = math.tanh %316 : vector<8x128xf32>
    %318 = arith.mulf %313, %317 : vector<8x128xf32>
    %c1_i32_98 = arith.constant 1 : i32
    %c8_i32_99 = arith.constant 8 : i32
    %319 = arith.muli %c1_i32_98, %c8_i32_99 : i32
    %320 = tpu.assume_multiple %319, 8 : i32
    %321 = arith.index_cast %320 : i32 to index
    %c0_100 = arith.constant 0 : index
    %322 = vector.load %arg9[%321, %c0_100] : memref<64x512xf32, #tpu.memory_space<vmem>>, vector<8x512xf32>
    %c0_101 = arith.constant 0 : index
    %c0_102 = arith.constant 0 : index
    %323 = vector.load %arg6[%c0_101, %c0_102] : memref<128x512xf32, #tpu.memory_space<vmem>>, vector<128x512xf32>
    %cst_103 = arith.constant dense<0.000000e+00> : vector<8x512xf32>
    %324 = tpu.matmul %318, %323, %cst_103 {dimension_numbers = #tpu.dot_dimension_numbers<[1], [0], [0], [1], [0, 0, 1, 1], [], []>} : vector<8x128xf32>, vector<128x512xf32>, vector<8x512xf32> -> vector<8x512xf32>
    %325 = arith.addf %322, %324 : vector<8x512xf32>
    %326 = vector.extract_strided_slice %325 {offsets = [0, 0], sizes = [8, 128], strides = [1, 1]} : vector<8x512xf32> to vector<8x128xf32>
    %327 = arith.negf %326 : vector<8x128xf32>
    %328 = math.exp %327 : vector<8x128xf32>
    %cst_104 = arith.constant 1.000000e+00 : f32
    %329 = vector.broadcast %cst_104 : f32 to vector<8x128xf32>
    %330 = arith.addf %329, %328 : vector<8x128xf32>
    %331 = arith.divf %329, %330 : vector<8x128xf32>
    %332 = vector.extract_strided_slice %325 {offsets = [0, 128], sizes = [8, 128], strides = [1, 1]} : vector<8x512xf32> to vector<8x128xf32>
    %333 = arith.negf %332 : vector<8x128xf32>
    %334 = math.exp %333 : vector<8x128xf32>
    %cst_105 = arith.constant 1.000000e+00 : f32
    %335 = vector.broadcast %cst_105 : f32 to vector<8x128xf32>
    %336 = arith.addf %335, %334 : vector<8x128xf32>
    %337 = arith.divf %335, %336 : vector<8x128xf32>
    %338 = vector.extract_strided_slice %325 {offsets = [0, 256], sizes = [8, 128], strides = [1, 1]} : vector<8x512xf32> to vector<8x128xf32>
    %339 = math.tanh %338 : vector<8x128xf32>
    %340 = vector.extract_strided_slice %325 {offsets = [0, 384], sizes = [8, 128], strides = [1, 1]} : vector<8x512xf32> to vector<8x128xf32>
    %341 = arith.negf %340 : vector<8x128xf32>
    %342 = math.exp %341 : vector<8x128xf32>
    %cst_106 = arith.constant 1.000000e+00 : f32
    %343 = vector.broadcast %cst_106 : f32 to vector<8x128xf32>
    %344 = arith.addf %343, %342 : vector<8x128xf32>
    %345 = arith.divf %343, %344 : vector<8x128xf32>
    %346 = arith.mulf %337, %316 : vector<8x128xf32>
    %347 = arith.mulf %331, %339 : vector<8x128xf32>
    %348 = arith.addf %346, %347 : vector<8x128xf32>
    %349 = math.tanh %348 : vector<8x128xf32>
    %350 = arith.mulf %345, %349 : vector<8x128xf32>
    %c2_i32_107 = arith.constant 2 : i32
    %c8_i32_108 = arith.constant 8 : i32
    %351 = arith.muli %c2_i32_107, %c8_i32_108 : i32
    %352 = tpu.assume_multiple %351, 8 : i32
    %353 = arith.index_cast %352 : i32 to index
    %c0_109 = arith.constant 0 : index
    %354 = vector.load %arg9[%353, %c0_109] : memref<64x512xf32, #tpu.memory_space<vmem>>, vector<8x512xf32>
    %c0_110 = arith.constant 0 : index
    %c0_111 = arith.constant 0 : index
    %355 = vector.load %arg6[%c0_110, %c0_111] : memref<128x512xf32, #tpu.memory_space<vmem>>, vector<128x512xf32>
    %cst_112 = arith.constant dense<0.000000e+00> : vector<8x512xf32>
    %356 = tpu.matmul %350, %355, %cst_112 {dimension_numbers = #tpu.dot_dimension_numbers<[1], [0], [0], [1], [0, 0, 1, 1], [], []>} : vector<8x128xf32>, vector<128x512xf32>, vector<8x512xf32> -> vector<8x512xf32>
    %357 = arith.addf %354, %356 : vector<8x512xf32>
    %358 = vector.extract_strided_slice %357 {offsets = [0, 0], sizes = [8, 128], strides = [1, 1]} : vector<8x512xf32> to vector<8x128xf32>
    %359 = arith.negf %358 : vector<8x128xf32>
    %360 = math.exp %359 : vector<8x128xf32>
    %cst_113 = arith.constant 1.000000e+00 : f32
    %361 = vector.broadcast %cst_113 : f32 to vector<8x128xf32>
    %362 = arith.addf %361, %360 : vector<8x128xf32>
    %363 = arith.divf %361, %362 : vector<8x128xf32>
    %364 = vector.extract_strided_slice %357 {offsets = [0, 128], sizes = [8, 128], strides = [1, 1]} : vector<8x512xf32> to vector<8x128xf32>
    %365 = arith.negf %364 : vector<8x128xf32>
    %366 = math.exp %365 : vector<8x128xf32>
    %cst_114 = arith.constant 1.000000e+00 : f32
    %367 = vector.broadcast %cst_114 : f32 to vector<8x128xf32>
    %368 = arith.addf %367, %366 : vector<8x128xf32>
    %369 = arith.divf %367, %368 : vector<8x128xf32>
    %370 = vector.extract_strided_slice %357 {offsets = [0, 256], sizes = [8, 128], strides = [1, 1]} : vector<8x512xf32> to vector<8x128xf32>
    %371 = math.tanh %370 : vector<8x128xf32>
    %372 = vector.extract_strided_slice %357 {offsets = [0, 384], sizes = [8, 128], strides = [1, 1]} : vector<8x512xf32> to vector<8x128xf32>
    %373 = arith.negf %372 : vector<8x128xf32>
    %374 = math.exp %373 : vector<8x128xf32>
    %cst_115 = arith.constant 1.000000e+00 : f32
    %375 = vector.broadcast %cst_115 : f32 to vector<8x128xf32>
    %376 = arith.addf %375, %374 : vector<8x128xf32>
    %377 = arith.divf %375, %376 : vector<8x128xf32>
    %378 = arith.mulf %369, %348 : vector<8x128xf32>
    %379 = arith.mulf %363, %371 : vector<8x128xf32>
    %380 = arith.addf %378, %379 : vector<8x128xf32>
    %381 = math.tanh %380 : vector<8x128xf32>
    %382 = arith.mulf %377, %381 : vector<8x128xf32>
    %c3_i32_116 = arith.constant 3 : i32
    %c8_i32_117 = arith.constant 8 : i32
    %383 = arith.muli %c3_i32_116, %c8_i32_117 : i32
    %384 = tpu.assume_multiple %383, 8 : i32
    %385 = arith.index_cast %384 : i32 to index
    %c0_118 = arith.constant 0 : index
    %386 = vector.load %arg9[%385, %c0_118] : memref<64x512xf32, #tpu.memory_space<vmem>>, vector<8x512xf32>
    %c0_119 = arith.constant 0 : index
    %c0_120 = arith.constant 0 : index
    %387 = vector.load %arg6[%c0_119, %c0_120] : memref<128x512xf32, #tpu.memory_space<vmem>>, vector<128x512xf32>
    %cst_121 = arith.constant dense<0.000000e+00> : vector<8x512xf32>
    %388 = tpu.matmul %382, %387, %cst_121 {dimension_numbers = #tpu.dot_dimension_numbers<[1], [0], [0], [1], [0, 0, 1, 1], [], []>} : vector<8x128xf32>, vector<128x512xf32>, vector<8x512xf32> -> vector<8x512xf32>
    %389 = arith.addf %386, %388 : vector<8x512xf32>
    %390 = vector.extract_strided_slice %389 {offsets = [0, 0], sizes = [8, 128], strides = [1, 1]} : vector<8x512xf32> to vector<8x128xf32>
    %391 = arith.negf %390 : vector<8x128xf32>
    %392 = math.exp %391 : vector<8x128xf32>
    %cst_122 = arith.constant 1.000000e+00 : f32
    %393 = vector.broadcast %cst_122 : f32 to vector<8x128xf32>
    %394 = arith.addf %393, %392 : vector<8x128xf32>
    %395 = arith.divf %393, %394 : vector<8x128xf32>
    %396 = vector.extract_strided_slice %389 {offsets = [0, 128], sizes = [8, 128], strides = [1, 1]} : vector<8x512xf32> to vector<8x128xf32>
    %397 = arith.negf %396 : vector<8x128xf32>
    %398 = math.exp %397 : vector<8x128xf32>
    %cst_123 = arith.constant 1.000000e+00 : f32
    %399 = vector.broadcast %cst_123 : f32 to vector<8x128xf32>
    %400 = arith.addf %399, %398 : vector<8x128xf32>
    %401 = arith.divf %399, %400 : vector<8x128xf32>
    %402 = vector.extract_strided_slice %389 {offsets = [0, 256], sizes = [8, 128], strides = [1, 1]} : vector<8x512xf32> to vector<8x128xf32>
    %403 = math.tanh %402 : vector<8x128xf32>
    %404 = vector.extract_strided_slice %389 {offsets = [0, 384], sizes = [8, 128], strides = [1, 1]} : vector<8x512xf32> to vector<8x128xf32>
    %405 = arith.negf %404 : vector<8x128xf32>
    %406 = math.exp %405 : vector<8x128xf32>
    %cst_124 = arith.constant 1.000000e+00 : f32
    %407 = vector.broadcast %cst_124 : f32 to vector<8x128xf32>
    %408 = arith.addf %407, %406 : vector<8x128xf32>
    %409 = arith.divf %407, %408 : vector<8x128xf32>
    %410 = arith.mulf %401, %380 : vector<8x128xf32>
    %411 = arith.mulf %395, %403 : vector<8x128xf32>
    %412 = arith.addf %410, %411 : vector<8x128xf32>
    %413 = math.tanh %412 : vector<8x128xf32>
    %414 = arith.mulf %409, %413 : vector<8x128xf32>
    %c4_i32_125 = arith.constant 4 : i32
    %c8_i32_126 = arith.constant 8 : i32
    %415 = arith.muli %c4_i32_125, %c8_i32_126 : i32
    %416 = tpu.assume_multiple %415, 8 : i32
    %417 = arith.index_cast %416 : i32 to index
    %c0_127 = arith.constant 0 : index
    %418 = vector.load %arg9[%417, %c0_127] : memref<64x512xf32, #tpu.memory_space<vmem>>, vector<8x512xf32>
    %c0_128 = arith.constant 0 : index
    %c0_129 = arith.constant 0 : index
    %419 = vector.load %arg6[%c0_128, %c0_129] : memref<128x512xf32, #tpu.memory_space<vmem>>, vector<128x512xf32>
    %cst_130 = arith.constant dense<0.000000e+00> : vector<8x512xf32>
    %420 = tpu.matmul %414, %419, %cst_130 {dimension_numbers = #tpu.dot_dimension_numbers<[1], [0], [0], [1], [0, 0, 1, 1], [], []>} : vector<8x128xf32>, vector<128x512xf32>, vector<8x512xf32> -> vector<8x512xf32>
    %421 = arith.addf %418, %420 : vector<8x512xf32>
    %422 = vector.extract_strided_slice %421 {offsets = [0, 0], sizes = [8, 128], strides = [1, 1]} : vector<8x512xf32> to vector<8x128xf32>
    %423 = arith.negf %422 : vector<8x128xf32>
    %424 = math.exp %423 : vector<8x128xf32>
    %cst_131 = arith.constant 1.000000e+00 : f32
    %425 = vector.broadcast %cst_131 : f32 to vector<8x128xf32>
    %426 = arith.addf %425, %424 : vector<8x128xf32>
    %427 = arith.divf %425, %426 : vector<8x128xf32>
    %428 = vector.extract_strided_slice %421 {offsets = [0, 128], sizes = [8, 128], strides = [1, 1]} : vector<8x512xf32> to vector<8x128xf32>
    %429 = arith.negf %428 : vector<8x128xf32>
    %430 = math.exp %429 : vector<8x128xf32>
    %cst_132 = arith.constant 1.000000e+00 : f32
    %431 = vector.broadcast %cst_132 : f32 to vector<8x128xf32>
    %432 = arith.addf %431, %430 : vector<8x128xf32>
    %433 = arith.divf %431, %432 : vector<8x128xf32>
    %434 = vector.extract_strided_slice %421 {offsets = [0, 256], sizes = [8, 128], strides = [1, 1]} : vector<8x512xf32> to vector<8x128xf32>
    %435 = math.tanh %434 : vector<8x128xf32>
    %436 = vector.extract_strided_slice %421 {offsets = [0, 384], sizes = [8, 128], strides = [1, 1]} : vector<8x512xf32> to vector<8x128xf32>
    %437 = arith.negf %436 : vector<8x128xf32>
    %438 = math.exp %437 : vector<8x128xf32>
    %cst_133 = arith.constant 1.000000e+00 : f32
    %439 = vector.broadcast %cst_133 : f32 to vector<8x128xf32>
    %440 = arith.addf %439, %438 : vector<8x128xf32>
    %441 = arith.divf %439, %440 : vector<8x128xf32>
    %442 = arith.mulf %433, %412 : vector<8x128xf32>
    %443 = arith.mulf %427, %435 : vector<8x128xf32>
    %444 = arith.addf %442, %443 : vector<8x128xf32>
    %445 = math.tanh %444 : vector<8x128xf32>
    %446 = arith.mulf %441, %445 : vector<8x128xf32>
    %c5_i32_134 = arith.constant 5 : i32
    %c8_i32_135 = arith.constant 8 : i32
    %447 = arith.muli %c5_i32_134, %c8_i32_135 : i32
    %448 = tpu.assume_multiple %447, 8 : i32
    %449 = arith.index_cast %448 : i32 to index
    %c0_136 = arith.constant 0 : index
    %450 = vector.load %arg9[%449, %c0_136] : memref<64x512xf32, #tpu.memory_space<vmem>>, vector<8x512xf32>
    %c0_137 = arith.constant 0 : index
    %c0_138 = arith.constant 0 : index
    %451 = vector.load %arg6[%c0_137, %c0_138] : memref<128x512xf32, #tpu.memory_space<vmem>>, vector<128x512xf32>
    %cst_139 = arith.constant dense<0.000000e+00> : vector<8x512xf32>
    %452 = tpu.matmul %446, %451, %cst_139 {dimension_numbers = #tpu.dot_dimension_numbers<[1], [0], [0], [1], [0, 0, 1, 1], [], []>} : vector<8x128xf32>, vector<128x512xf32>, vector<8x512xf32> -> vector<8x512xf32>
    %453 = arith.addf %450, %452 : vector<8x512xf32>
    %454 = vector.extract_strided_slice %453 {offsets = [0, 0], sizes = [8, 128], strides = [1, 1]} : vector<8x512xf32> to vector<8x128xf32>
    %455 = arith.negf %454 : vector<8x128xf32>
    %456 = math.exp %455 : vector<8x128xf32>
    %cst_140 = arith.constant 1.000000e+00 : f32
    %457 = vector.broadcast %cst_140 : f32 to vector<8x128xf32>
    %458 = arith.addf %457, %456 : vector<8x128xf32>
    %459 = arith.divf %457, %458 : vector<8x128xf32>
    %460 = vector.extract_strided_slice %453 {offsets = [0, 128], sizes = [8, 128], strides = [1, 1]} : vector<8x512xf32> to vector<8x128xf32>
    %461 = arith.negf %460 : vector<8x128xf32>
    %462 = math.exp %461 : vector<8x128xf32>
    %cst_141 = arith.constant 1.000000e+00 : f32
    %463 = vector.broadcast %cst_141 : f32 to vector<8x128xf32>
    %464 = arith.addf %463, %462 : vector<8x128xf32>
    %465 = arith.divf %463, %464 : vector<8x128xf32>
    %466 = vector.extract_strided_slice %453 {offsets = [0, 256], sizes = [8, 128], strides = [1, 1]} : vector<8x512xf32> to vector<8x128xf32>
    %467 = math.tanh %466 : vector<8x128xf32>
    %468 = vector.extract_strided_slice %453 {offsets = [0, 384], sizes = [8, 128], strides = [1, 1]} : vector<8x512xf32> to vector<8x128xf32>
    %469 = arith.negf %468 : vector<8x128xf32>
    %470 = math.exp %469 : vector<8x128xf32>
    %cst_142 = arith.constant 1.000000e+00 : f32
    %471 = vector.broadcast %cst_142 : f32 to vector<8x128xf32>
    %472 = arith.addf %471, %470 : vector<8x128xf32>
    %473 = arith.divf %471, %472 : vector<8x128xf32>
    %474 = arith.mulf %465, %444 : vector<8x128xf32>
    %475 = arith.mulf %459, %467 : vector<8x128xf32>
    %476 = arith.addf %474, %475 : vector<8x128xf32>
    %477 = math.tanh %476 : vector<8x128xf32>
    %478 = arith.mulf %473, %477 : vector<8x128xf32>
    %c6_i32_143 = arith.constant 6 : i32
    %c8_i32_144 = arith.constant 8 : i32
    %479 = arith.muli %c6_i32_143, %c8_i32_144 : i32
    %480 = tpu.assume_multiple %479, 8 : i32
    %481 = arith.index_cast %480 : i32 to index
    %c0_145 = arith.constant 0 : index
    %482 = vector.load %arg9[%481, %c0_145] : memref<64x512xf32, #tpu.memory_space<vmem>>, vector<8x512xf32>
    %c0_146 = arith.constant 0 : index
    %c0_147 = arith.constant 0 : index
    %483 = vector.load %arg6[%c0_146, %c0_147] : memref<128x512xf32, #tpu.memory_space<vmem>>, vector<128x512xf32>
    %cst_148 = arith.constant dense<0.000000e+00> : vector<8x512xf32>
    %484 = tpu.matmul %478, %483, %cst_148 {dimension_numbers = #tpu.dot_dimension_numbers<[1], [0], [0], [1], [0, 0, 1, 1], [], []>} : vector<8x128xf32>, vector<128x512xf32>, vector<8x512xf32> -> vector<8x512xf32>
    %485 = arith.addf %482, %484 : vector<8x512xf32>
    %486 = vector.extract_strided_slice %485 {offsets = [0, 0], sizes = [8, 128], strides = [1, 1]} : vector<8x512xf32> to vector<8x128xf32>
    %487 = arith.negf %486 : vector<8x128xf32>
    %488 = math.exp %487 : vector<8x128xf32>
    %cst_149 = arith.constant 1.000000e+00 : f32
    %489 = vector.broadcast %cst_149 : f32 to vector<8x128xf32>
    %490 = arith.addf %489, %488 : vector<8x128xf32>
    %491 = arith.divf %489, %490 : vector<8x128xf32>
    %492 = vector.extract_strided_slice %485 {offsets = [0, 128], sizes = [8, 128], strides = [1, 1]} : vector<8x512xf32> to vector<8x128xf32>
    %493 = arith.negf %492 : vector<8x128xf32>
    %494 = math.exp %493 : vector<8x128xf32>
    %cst_150 = arith.constant 1.000000e+00 : f32
    %495 = vector.broadcast %cst_150 : f32 to vector<8x128xf32>
    %496 = arith.addf %495, %494 : vector<8x128xf32>
    %497 = arith.divf %495, %496 : vector<8x128xf32>
    %498 = vector.extract_strided_slice %485 {offsets = [0, 256], sizes = [8, 128], strides = [1, 1]} : vector<8x512xf32> to vector<8x128xf32>
    %499 = math.tanh %498 : vector<8x128xf32>
    %500 = vector.extract_strided_slice %485 {offsets = [0, 384], sizes = [8, 128], strides = [1, 1]} : vector<8x512xf32> to vector<8x128xf32>
    %501 = arith.negf %500 : vector<8x128xf32>
    %502 = math.exp %501 : vector<8x128xf32>
    %cst_151 = arith.constant 1.000000e+00 : f32
    %503 = vector.broadcast %cst_151 : f32 to vector<8x128xf32>
    %504 = arith.addf %503, %502 : vector<8x128xf32>
    %505 = arith.divf %503, %504 : vector<8x128xf32>
    %506 = arith.mulf %497, %476 : vector<8x128xf32>
    %507 = arith.mulf %491, %499 : vector<8x128xf32>
    %508 = arith.addf %506, %507 : vector<8x128xf32>
    %509 = math.tanh %508 : vector<8x128xf32>
    %510 = arith.mulf %505, %509 : vector<8x128xf32>
    %c7_i32_152 = arith.constant 7 : i32
    %c8_i32_153 = arith.constant 8 : i32
    %511 = arith.muli %c7_i32_152, %c8_i32_153 : i32
    %512 = tpu.assume_multiple %511, 8 : i32
    %513 = arith.index_cast %512 : i32 to index
    %c0_154 = arith.constant 0 : index
    %514 = vector.load %arg9[%513, %c0_154] : memref<64x512xf32, #tpu.memory_space<vmem>>, vector<8x512xf32>
    %c0_155 = arith.constant 0 : index
    %c0_156 = arith.constant 0 : index
    %515 = vector.load %arg6[%c0_155, %c0_156] : memref<128x512xf32, #tpu.memory_space<vmem>>, vector<128x512xf32>
    %cst_157 = arith.constant dense<0.000000e+00> : vector<8x512xf32>
    %516 = tpu.matmul %510, %515, %cst_157 {dimension_numbers = #tpu.dot_dimension_numbers<[1], [0], [0], [1], [0, 0, 1, 1], [], []>} : vector<8x128xf32>, vector<128x512xf32>, vector<8x512xf32> -> vector<8x512xf32>
    %517 = arith.addf %514, %516 : vector<8x512xf32>
    %518 = vector.extract_strided_slice %517 {offsets = [0, 0], sizes = [8, 128], strides = [1, 1]} : vector<8x512xf32> to vector<8x128xf32>
    %519 = arith.negf %518 : vector<8x128xf32>
    %520 = math.exp %519 : vector<8x128xf32>
    %cst_158 = arith.constant 1.000000e+00 : f32
    %521 = vector.broadcast %cst_158 : f32 to vector<8x128xf32>
    %522 = arith.addf %521, %520 : vector<8x128xf32>
    %523 = arith.divf %521, %522 : vector<8x128xf32>
    %524 = vector.extract_strided_slice %517 {offsets = [0, 128], sizes = [8, 128], strides = [1, 1]} : vector<8x512xf32> to vector<8x128xf32>
    %525 = arith.negf %524 : vector<8x128xf32>
    %526 = math.exp %525 : vector<8x128xf32>
    %cst_159 = arith.constant 1.000000e+00 : f32
    %527 = vector.broadcast %cst_159 : f32 to vector<8x128xf32>
    %528 = arith.addf %527, %526 : vector<8x128xf32>
    %529 = arith.divf %527, %528 : vector<8x128xf32>
    %530 = vector.extract_strided_slice %517 {offsets = [0, 256], sizes = [8, 128], strides = [1, 1]} : vector<8x512xf32> to vector<8x128xf32>
    %531 = math.tanh %530 : vector<8x128xf32>
    %532 = vector.extract_strided_slice %517 {offsets = [0, 384], sizes = [8, 128], strides = [1, 1]} : vector<8x512xf32> to vector<8x128xf32>
    %533 = arith.negf %532 : vector<8x128xf32>
    %534 = math.exp %533 : vector<8x128xf32>
    %cst_160 = arith.constant 1.000000e+00 : f32
    %535 = vector.broadcast %cst_160 : f32 to vector<8x128xf32>
    %536 = arith.addf %535, %534 : vector<8x128xf32>
    %537 = arith.divf %535, %536 : vector<8x128xf32>
    %538 = arith.mulf %529, %508 : vector<8x128xf32>
    %539 = arith.mulf %523, %531 : vector<8x128xf32>
    %540 = arith.addf %538, %539 : vector<8x128xf32>
    %541 = math.tanh %540 : vector<8x128xf32>
    %542 = arith.mulf %537, %541 : vector<8x128xf32>
    %c8_i32_161 = arith.constant 8 : i32
    %c0_162 = arith.constant 0 : index
    %c0_163 = arith.constant 0 : index
    %543 = vector.load %arg8[%c0_162, %c0_163] : memref<8x128xf32, #tpu.memory_space<vmem>>, vector<8x128xf32>
    tpu.vector_store %arg8[%c0_162, %c0_163], %542 {strides = array<i32>} : memref<8x128xf32, #tpu.memory_space<vmem>>, vector<8x128xf32>,
    return
  }
  func.func @transform_0(%arg0: i32) -> (i32, i32) {
    %c0_i32 = arith.constant 0 : i32
    %c0_i32_0 = arith.constant 0 : i32
    %c0_i32_1 = arith.constant 0 : i32
    return %c0_i32, %c0_i32_0 : i32, i32
  }
  func.func @transform_1(%arg0: i32) -> (i32, i32) {
    %c0_i32 = arith.constant 0 : i32
    %c0_i32_0 = arith.constant 0 : i32
    %c0_i32_1 = arith.constant 0 : i32
    return %c0_i32, %c0_i32_0 : i32, i32
  }
  func.func @transform_2(%arg0: i32) -> (i32, i32) {
    %c0_i32 = arith.constant 0 : i32
    %c0_i32_0 = arith.constant 0 : i32
    %c0_i32_1 = arith.constant 0 : i32
    return %c0_i32, %c0_i32_0 : i32, i32
  }
  func.func @transform_3(%arg0: i32) -> (i32, i32) {
    %c0_i32 = arith.constant 0 : i32
    %c0_i32_0 = arith.constant 0 : i32
    %c0_i32_1 = arith.constant 0 : i32
    return %c0_i32, %c0_i32_0 : i32, i32
  }
  func.func @transform_4(%arg0: i32) -> (i32, i32) {
    %c0_i32 = arith.constant 0 : i32
    %c0_i32_0 = arith.constant 0 : i32
    %c0_i32_1 = arith.constant 0 : i32
    return %c0_i32, %c0_i32_0 : i32, i32
  }
  func.func @transform_5(%arg0: i32) -> (i32, i32) {
    %c0_i32 = arith.constant 0 : i32
    %c0_i32_0 = arith.constant 0 : i32
    %c0_i32_1 = arith.constant 0 : i32
    return %c0_i32, %c0_i32_0 : i32, i32
  }
  func.func @transform_6(%arg0: i32) -> (i32, i32) {
    %c0_i32 = arith.constant 0 : i32
    %c0_i32_0 = arith.constant 0 : i32
    %c0_i32_1 = arith.constant 0 : i32
    return %c0_i32, %c0_i32_0 : i32, i32
  }
  func.func @transform_7(%arg0: i32) -> (i32, i32) {
    %c0_i32 = arith.constant 0 : i32
    %c0_i32_0 = arith.constant 0 : i32
    %c0_i32_1 = arith.constant 0 : i32
    return %c0_i32, %c0_i32_0 : i32, i32
  }
}

</mosaic_0001>

<llo_original>
// kernel: tpu_custom_call.1
$region0: #{tpu_custom_call.1}
  #allocation0 [shape = 'u32[]', space=smem, size = 0x4, offset = 0x4, fixed_abs, tag = 'smem constant byte address 0x4 - core index']
  #allocation1 [shape = 'u32[144,128]{1,0:T(1,128)}', space=vmem, size = 0x12000, scoped, tag = 'internal scratch']
  #allocation2 [shape = 'f32[64,512]{1,0:T(8,128)}', space=vmem, size = 0x20000, scoped, tag = 'scratch operand']
  #allocation3 [shape = 'f32[64,128]{1,0:T(8,128)}', space=vmem, size = 0x8000, scoped, tag = 'scratch operand']
  %s0 = inlined_call_operand.vmem [shape: f32[64,16], index: 0, kind: input, shape index: {}]
  %s1 = inlined_call_operand.vmem [shape: f32[16,512], index: 1, kind: input, shape index: {}]
  %s2 = inlined_call_operand.hbm [shape: f32[128,512], index: 2, kind: input, shape index: {}]
  %s3 = inlined_call_operand.vmem [shape: f32[1,512], index: 3, kind: input, shape index: {}]
  %s4 = inlined_call_operand.hbm [shape: f32[128,512], index: 4, kind: input, shape index: {}]
  %s5 = inlined_call_operand.hbm [shape: f32[128,512], index: 5, kind: input, shape index: {}]
  %s6 = inlined_call_operand.vmem [shape: f32[1,512], index: 6, kind: input, shape index: {}]
  %s7 = inlined_call_operand.hbm [shape: f32[8,128], index: 7, kind: output, shape index: {}]
  %s8 = sld [smem:[#allocation0]]
  $region50: #{tpu_custom_call.1} parent=0
    _
  %s10 = ssub.s32 1, %s8
  %s11 = scalar_select 0, %s10, %s8
  $region1: #{tpu_custom_call.1} parent=0
    #allocation4 [shape = 'u8[262144]{0}', space=vmem, size = 0x40000, scoped, tag = 'input window, operand 2, single buffered']
    #allocation5 [shape = 's32[1]{0}', space=sflag, size = 0x4, scoped, tag = 'scoped memory for tpu_custom_call.1']
    #allocation6 [shape = 's32[1]{0}', space=sflag, size = 0x4, scoped, tag = 'scoped memory for tpu_custom_call.1']
    #allocation7 [shape = 'u8[262144]{0}', space=vmem, size = 0x40000, scoped, tag = 'input window, operand 4, single buffered']
    #allocation8 [shape = 's32[1]{0}', space=sflag, size = 0x4, scoped, tag = 'scoped memory for tpu_custom_call.1']
    #allocation9 [shape = 'u8[262144]{0}', space=vmem, size = 0x40000, scoped, tag = 'input window, operand 5, single buffered']
    #allocation10 [shape = 'u8[4096]{0}', space=vmem, size = 0x1000, scoped, tag = 'output window, operand 0, single buffered']
    %12 = vsyncpa [#allocation5], 0
    %13 = vsyncpa [#allocation8], 0
    %14 = vsyncpa [#allocation6], 0
    // Predicated region
    $region2: #{tpu_custom_call.1} parent=1 // pred_check
      _
    $region3: #{tpu_custom_call.1} parent=1 // pred_check_branch
      %16 = sbr.rel (0) target = $region5
    $region4: #{tpu_custom_call.1} parent=1 // pred_region
      _
    $region5: #{tpu_custom_call.1} parent=1 // pred_fallthru
      _
    // Predicated region
    $region6: #{tpu_custom_call.1} parent=1 // pred_check
      _
    $region7: #{tpu_custom_call.1} parent=1 // pred_check_branch
      %18 = sbr.rel (0) target = $region9
    $region8: #{tpu_custom_call.1} parent=1 // pred_region
      _
    $region9: #{tpu_custom_call.1} parent=1 // pred_fallthru
      _
    // Predicated region
    $region10: #{tpu_custom_call.1} parent=1 // pred_check
      _
    $region11: #{tpu_custom_call.1} parent=1 // pred_check_branch
      %20 = sbr.rel (0) target = $region13
    $region12: #{tpu_custom_call.1} parent=1 // pred_region
      %s22 = ssub.s32 8192, 8192
      %23 = vsyncadd [#allocation5], %s22
      %s24 = sshll.u32 [#allocation4], 4
      %s25 = int_to_ptr.vmem [resolvable:$true] %s24
      %30 = dma.hbm_to_vmem [thread:$0]  %s2, 8192, %s25, [#allocation5], 512, 512, 32
    $region13: #{tpu_custom_call.1} parent=1 // pred_fallthru
      _
    // Predicated region
    $region14: #{tpu_custom_call.1} parent=1 // pred_check
      _
    $region15: #{tpu_custom_call.1} parent=1 // pred_check_branch
      %32 = sbr.rel (0) target = $region17
    $region16: #{tpu_custom_call.1} parent=1 // pred_region
      _
    $region17: #{tpu_custom_call.1} parent=1 // pred_fallthru
      _
    // Predicated region
    $region18: #{tpu_custom_call.1} parent=1 // pred_check
      _
    $region19: #{tpu_custom_call.1} parent=1 // pred_check_branch
      %34 = sbr.rel (0) target = $region21
    $region20: #{tpu_custom_call.1} parent=1 // pred_region
      %s36 = ssub.s32 8192, 8192
      %37 = vsyncadd [#allocation8], %s36
      %s38 = sshll.u32 [#allocation7], 4
      %s39 = int_to_ptr.vmem [resolvable:$true] %s38
      %44 = dma.hbm_to_vmem [thread:$0]  %s4, 8192, %s39, [#allocation8], 512, 512, 32
    $region21: #{tpu_custom_call.1} parent=1 // pred_fallthru
      _
    // Predicated region
    $region22: #{tpu_custom_call.1} parent=1 // pred_check
      _
    $region23: #{tpu_custom_call.1} parent=1 // pred_check_branch
      %46 = sbr.rel (0) target = $region25
    $region24: #{tpu_custom_call.1} parent=1 // pred_region
      %s48 = ssub.s32 8192, 8192
      %49 = vsyncadd [#allocation8], %s48
      %s50 = sshll.u32 [#allocation9], 4
      %s51 = int_to_ptr.vmem [resolvable:$true] %s50
      %56 = dma.hbm_to_vmem [thread:$0]  %s5, 8192, %s51, [#allocation8], 512, 512, 32
    $region25: #{tpu_custom_call.1} parent=1 // pred_fallthru
      _
    // Predicated region
    $region26: #{tpu_custom_call.1} parent=1 // pred_check
      _
    $region27: #{tpu_custom_call.1} parent=1 // pred_check_branch
      %58 = sbr.rel (0) target = $region29
    $region28: #{tpu_custom_call.1} parent=1 // pred_region
      _
    $region29: #{tpu_custom_call.1} parent=1 // pred_fallthru
      _
    // Predicated region
    $region30: #{tpu_custom_call.1} parent=1 // pred_check
      _
    $region31: #{tpu_custom_call.1} parent=1 // pred_check_branch
      %60 = sbr.rel (0) target = $region33
    $region32: #{tpu_custom_call.1} parent=1 // pred_region
      %61 = dma.done [#allocation5], 8192
    $region33: #{tpu_custom_call.1} parent=1 // pred_fallthru
      _
    // Predicated region
    $region34: #{tpu_custom_call.1} parent=1 // pred_check
      _
    $region35: #{tpu_custom_call.1} parent=1 // pred_check_branch
      %63 = sbr.rel (0) target = $region37
    $region36: #{tpu_custom_call.1} parent=1 // pred_region
      %64 = dma.done [#allocation8], 8192
    $region37: #{tpu_custom_call.1} parent=1 // pred_fallthru
      _
    // Predicated region
    $region38: #{tpu_custom_call.1} parent=1 // pred_check
      _
    $region39: #{tpu_custom_call.1} parent=1 // pred_check_branch
      %66 = sbr.rel (0) target = $region41
    $region40: #{tpu_custom_call.1} parent=1 // pred_region
      %67 = dma.done [#allocation8], 8192
    $region41: #{tpu_custom_call.1} parent=1 // pred_fallthru
      _
    %v68 = vld [vmem:[%s0] sm:$0xff]
    %v69 = vld [vmem:[%s0 + $0x8] sm:$0xff]
    %v70 = vld [vmem:[%s0 + $0x10] sm:$0xff]
    %v71 = vld [vmem:[%s0 + $0x18] sm:$0xff]
    %v72 = vld [vmem:[%s0 + $0x20] sm:$0xff]
    %v73 = vld [vmem:[%s0 + $0x28] sm:$0xff]
    %v74 = vld [vmem:[%s0 + $0x30] sm:$0xff]
    %v75 = vld [vmem:[%s0 + $0x38] sm:$0xff]
    %v76 = vld [vmem:[%s1] sm:$0xff]
    %v77 = vld [vmem:[%s1 + $0x8] sm:$0xff]
    %v78 = vld [vmem:[%s1 + $0x10] sm:$0xff]
    %v79 = vld [vmem:[%s1 + $0x18] sm:$0xff]
    %v80 = vld [vmem:[%s1 + $0x20] sm:$0xff]
    %v81 = vld [vmem:[%s1 + $0x28] sm:$0xff]
    %v82 = vld [vmem:[%s1 + $0x30] sm:$0xff]
    %v83 = vld [vmem:[%s1 + $0x38] sm:$0xff]
    %v84 = vld [vmem:[%s3] sm:$0xf]
    %v86 = vlaneseq
    %v87 = vshrl.u32 %v86, 7
    %v88 = vsub.s32 0, %v87
    %v89 = vrot.slane %v84, %v88
    %v90 = vlaneseq
    %v91 = vshrl.u32 %v90, 7
    %v92 = vsub.s32 1, %v91
    %v93 = vrot.slane %v84, %v92
    %v94 = vlaneseq
    %v95 = vshrl.u32 %v94, 7
    %v96 = vsub.s32 2, %v95
    %v97 = vrot.slane %v84, %v96
    %v98 = vlaneseq
    %v99 = vshrl.u32 %v98, 7
    %v100 = vsub.s32 3, %v99
    %v101 = vrot.slane %v84, %v100
    %vm106 = vcmask 130048
    %v108 = vsel %vm106, %v68, 0
    %v111 = vsel %vm106, %v69, 0
    %v114 = vsel %vm106, %v70, 0
    %v117 = vsel %vm106, %v71, 0
    %v120 = vsel %vm106, %v72, 0
    %v123 = vsel %vm106, %v73, 0
    %v126 = vsel %vm106, %v74, 0
    %v129 = vsel %vm106, %v75, 0
    %131 = vmatprep.subr.mxu0 %v77
    %132 = vmatpush1.msra.mxu0 %v76
    %133 = vmatprep.subr.mxu0 %v81
    %134 = vmatpush1.msra.mxu0 %v80
    %135 = vmatprep.subr.mxu0 0.0
    %136 = vmatpush1.msra.mxu0 0.0
    %137 = vmatprep.subr.mxu0 0.0
    %138 = vmatpush1.msra.mxu0 0.0
    %139 = vmatprep.subr.mxu0 0.0
    %140 = vmatpush1.msra.mxu0 0.0
    %141 = vmatprep.subr.mxu0 0.0
    %142 = vmatpush1.msra.mxu0 0.0
    %143 = vmatprep.subr.mxu0 0.0
    %144 = vmatpush1.msra.mxu0 0.0
    %145 = vmatprep.subr.mxu0 0.0
    %146 = vmatpush1.msra.mxu0 0.0
    %147 = vmatprep.subr.mxu0 0.0
    %148 = vmatpush1.msra.mxu0 0.0
    %149 = vmatprep.subr.mxu0 0.0
    %150 = vmatpush1.msra.mxu0 0.0
    %151 = vmatprep.subr.mxu0 0.0
    %152 = vmatpush1.msra.mxu0 0.0
    %153 = vmatprep.subr.mxu0 0.0
    %154 = vmatpush1.msra.mxu0 0.0
    %155 = vmatprep.subr.mxu0 0.0
    %156 = vmatpush1.msra.mxu0 0.0
    %157 = vmatprep.subr.mxu0 0.0
    %158 = vmatpush1.msra.mxu0 0.0
    %159 = vmatprep.subr.mxu0 0.0
    %160 = vmatpush1.msra.mxu0 0.0
    %161 = vmatprep.subr.mxu0 0.0
    %162 = vmatpush1.msra.mxu0 0.0
    %163 = vmatprep.subr.mxu0 0.0
    %164 = vmatpush1.msra.mxu0 0.0
    %165 = vmatprep.subr.mxu0 0.0
    %166 = vmatpush1.msra.mxu0 0.0
    %167 = vmatprep.subr.mxu0 0.0
    %168 = vmatpush1.msra.mxu0 0.0
    %169 = vmatprep.subr.mxu0 0.0
    %170 = vmatpush1.msra.mxu0 0.0
    %171 = vmatprep.subr.mxu0 0.0
    %172 = vmatpush1.msra.mxu0 0.0
    %173 = vmatprep.subr.mxu0 0.0
    %174 = vmatpush1.msra.mxu0 0.0
    %175 = vmatprep.subr.mxu0 0.0
    %176 = vmatpush1.msra.mxu0 0.0
    %177 = vmatprep.subr.mxu0 0.0
    %178 = vmatpush1.msra.mxu0 0.0
    %179 = vmatprep.subr.mxu0 0.0
    %180 = vmatpush1.msra.mxu0 0.0
    %181 = vmatprep.subr.mxu0 0.0
    %182 = vmatpush1.msra.mxu0 0.0
    %183 = vmatprep.subr.mxu0 0.0
    %184 = vmatpush1.msra.mxu0 0.0
    %185 = vmatprep.subr.mxu0 0.0
    %186 = vmatpush1.msra.mxu0 0.0
    %187 = vmatprep.subr.mxu0 0.0
    %188 = vmatpush1.msra.mxu0 0.0
    %189 = vmatprep.subr.mxu0 0.0
    %190 = vmatpush1.msra.mxu0 0.0
    %191 = vmatprep.subr.mxu0 0.0
    %192 = vmatpush1.msra.mxu0 0.0
    %193 = vmatprep.subr.mxu0 0.0
    %194 = vmatpush1.msra.mxu0 0.0
    %195 = vmatprep.mubr.f32.mxu0 0.0
    %196 = vmatmul.mubr.f32.gmra.mrb[0].mxu0 %v108
    %v197 = vpop.f32.mrb[0].mxu0
    %v198 = vadd.f32 %v89, %v197
    %v199 = vpop.f32.mrb[0].mxu0
    %v200 = vadd.f32 %v93, %v199
    %201 = vmatprep.mubr.f32.mxu0 0.0
    %202 = vmatmul.mubr.f32.gmra.mrb[0].mxu0 %v111
    %v203 = vpop.f32.mrb[0].mxu0
    %v204 = vadd.f32 %v89, %v203
    %v205 = vpop.f32.mrb[0].mxu0
    %v206 = vadd.f32 %v93, %v205
    %207 = vmatprep.mubr.f32.mxu0 0.0
    %208 = vmatmul.mubr.f32.gmra.mrb[0].mxu0 %v114
    %v209 = vpop.f32.mrb[0].mxu0
    %v210 = vadd.f32 %v89, %v209
    %v211 = vpop.f32.mrb[0].mxu0
    %v212 = vadd.f32 %v93, %v211
    %213 = vmatprep.mubr.f32.mxu0 0.0
    %214 = vmatmul.mubr.f32.gmra.mrb[0].mxu0 %v117
    %v215 = vpop.f32.mrb[0].mxu0
    %v216 = vadd.f32 %v89, %v215
    %v217 = vpop.f32.mrb[0].mxu0
    %v218 = vadd.f32 %v93, %v217
    %219 = vmatprep.mubr.f32.mxu0 0.0
    %220 = vmatmul.mubr.f32.gmra.mrb[0].mxu0 %v120
    %v221 = vpop.f32.mrb[0].mxu0
    %v222 = vadd.f32 %v89, %v221
    %v223 = vpop.f32.mrb[0].mxu0
    %v224 = vadd.f32 %v93, %v223
    %225 = vmatprep.mubr.f32.mxu0 0.0
    %226 = vmatmul.mubr.f32.gmra.mrb[0].mxu0 %v123
    %v227 = vpop.f32.mrb[0].mxu0
    %v228 = vadd.f32 %v89, %v227
    %v229 = vpop.f32.mrb[0].mxu0
    %v230 = vadd.f32 %v93, %v229
    %231 = vmatprep.mubr.f32.mxu0 0.0
    %232 = vmatmul.mubr.f32.gmra.mrb[0].mxu0 %v126
    %v233 = vpop.f32.mrb[0].mxu0
    %v234 = vadd.f32 %v89, %v233
    %v235 = vpop.f32.mrb[0].mxu0
    %v236 = vadd.f32 %v93, %v235
    %237 = vmatprep.mubr.f32.mxu0 0.0
    %238 = vmatmul.mubr.f32.gmra.mrb[0].mxu0 %v129
    %v239 = vpop.f32.mrb[0].mxu0
    %v240 = vadd.f32 %v89, %v239
    %v241 = vpop.f32.mrb[0].mxu0
    %v242 = vadd.f32 %v93, %v241
    %243 = vdwg.mxu0
    %244 = vmatprep.subr.mxu0 %v79
    %245 = vmatpush1.msra.mxu0 %v78
    %246 = vmatprep.subr.mxu0 %v83
    %247 = vmatpush1.msra.mxu0 %v82
    %248 = vmatprep.subr.mxu0 0.0
    %249 = vmatpush1.msra.mxu0 0.0
    %250 = vmatprep.subr.mxu0 0.0
    %251 = vmatpush1.msra.mxu0 0.0
    %252 = vmatprep.subr.mxu0 0.0
    %253 = vmatpush1.msra.mxu0 0.0
    %254 = vmatprep.subr.mxu0 0.0
    %255 = vmatpush1.msra.mxu0 0.0
    %256 = vmatprep.subr.mxu0 0.0
    %257 = vmatpush1.msra.mxu0 0.0
    %258 = vmatprep.subr.mxu0 0.0
    %259 = vmatpush1.msra.mxu0 0.0
    %260 = vmatprep.subr.mxu0 0.0
    %261 = vmatpush1.msra.mxu0 0.0
    %262 = vmatprep.subr.mxu0 0.0
    %263 = vmatpush1.msra.mxu0 0.0
    %264 = vmatprep.subr.mxu0 0.0
    %265 = vmatpush1.msra.mxu0 0.0
    %266 = vmatprep.subr.mxu0 0.0
    %267 = vmatpush1.msra.mxu0 0.0
    %268 = vmatprep.subr.mxu0 0.0
    %269 = vmatpush1.msra.mxu0 0.0
    %270 = vmatprep.subr.mxu0 0.0
    %271 = vmatpush1.msra.mxu0 0.0
    %272 = vmatprep.subr.mxu0 0.0
    %273 = vmatpush1.msra.mxu0 0.0
    %274 = vmatprep.subr.mxu0 0.0
    %275 = vmatpush1.msra.mxu0 0.0
    %276 = vmatprep.subr.mxu0 0.0
    %277 = vmatpush1.msra.mxu0 0.0
    %278 = vmatprep.subr.mxu0 0.0
    %279 = vmatpush1.msra.mxu0 0.0
    %280 = vmatprep.subr.mxu0 0.0
    %281 = vmatpush1.msra.mxu0 0.0
    %282 = vmatprep.subr.mxu0 0.0
    %283 = vmatpush1.msra.mxu0 0.0
    %284 = vmatprep.subr.mxu0 0.0
    %285 = vmatpush1.msra.mxu0 0.0
    %286 = vmatprep.subr.mxu0 0.0
    %287 = vmatpush1.msra.mxu0 0.0
    %288 = vmatprep.subr.mxu0 0.0
    %289 = vmatpush1.msra.mxu0 0.0
    %290 = vmatprep.subr.mxu0 0.0
    %291 = vmatpush1.msra.mxu0 0.0
    %292 = vmatprep.subr.mxu0 0.0
    %293 = vmatpush1.msra.mxu0 0.0
    %294 = vmatprep.subr.mxu0 0.0
    %295 = vmatpush1.msra.mxu0 0.0
    %296 = vmatprep.subr.mxu0 0.0
    %297 = vmatpush1.msra.mxu0 0.0
    %298 = vmatprep.subr.mxu0 0.0
    %299 = vmatpush1.msra.mxu0 0.0
    %300 = vmatprep.subr.mxu0 0.0
    %301 = vmatpush1.msra.mxu0 0.0
    %302 = vmatprep.subr.mxu0 0.0
    %303 = vmatpush1.msra.mxu0 0.0
    %304 = vmatprep.subr.mxu0 0.0
    %305 = vmatpush1.msra.mxu0 0.0
    %306 = vmatprep.subr.mxu0 0.0
    %307 = vmatpush1.msra.mxu0 0.0
    %308 = vmatprep.mubr.f32.mxu0 0.0
    %309 = vmatmul.mubr.f32.gmra.mrb[0].mxu0 %v108
    %v310 = vpop.f32.mrb[0].mxu0
    %v311 = vadd.f32 %v97, %v310
    %v312 = vpop.f32.mrb[0].mxu0
    %v313 = vadd.f32 %v101, %v312
    %314 = vmatprep.mubr.f32.mxu0 0.0
    %315 = vmatmul.mubr.f32.gmra.mrb[0].mxu0 %v111
    %v316 = vpop.f32.mrb[0].mxu0
    %v317 = vadd.f32 %v97, %v316
    %v318 = vpop.f32.mrb[0].mxu0
    %v319 = vadd.f32 %v101, %v318
    %320 = vmatprep.mubr.f32.mxu0 0.0
    %321 = vmatmul.mubr.f32.gmra.mrb[0].mxu0 %v114
    %v322 = vpop.f32.mrb[0].mxu0
    %v323 = vadd.f32 %v97, %v322
    %v324 = vpop.f32.mrb[0].mxu0
    %v325 = vadd.f32 %v101, %v324
    %326 = vmatprep.mubr.f32.mxu0 0.0
    %327 = vmatmul.mubr.f32.gmra.mrb[0].mxu0 %v117
    %v328 = vpop.f32.mrb[0].mxu0
    %v329 = vadd.f32 %v97, %v328
    %v330 = vpop.f32.mrb[0].mxu0
    %v331 = vadd.f32 %v101, %v330
    %332 = vmatprep.mubr.f32.mxu0 0.0
    %333 = vmatmul.mubr.f32.gmra.mrb[0].mxu0 %v120
    %v334 = vpop.f32.mrb[0].mxu0
    %v335 = vadd.f32 %v97, %v334
    %v336 = vpop.f32.mrb[0].mxu0
    %v337 = vadd.f32 %v101, %v336
    %338 = vmatprep.mubr.f32.mxu0 0.0
    %339 = vmatmul.mubr.f32.gmra.mrb[0].mxu0 %v123
    %v340 = vpop.f32.mrb[0].mxu0
    %v341 = vadd.f32 %v97, %v340
    %v342 = vpop.f32.mrb[0].mxu0
    %v343 = vadd.f32 %v101, %v342
    %344 = vmatprep.mubr.f32.mxu0 0.0
    %345 = vmatmul.mubr.f32.gmra.mrb[0].mxu0 %v126
    %v346 = vpop.f32.mrb[0].mxu0
    %v347 = vadd.f32 %v97, %v346
    %v348 = vpop.f32.mrb[0].mxu0
    %v349 = vadd.f32 %v101, %v348
    %350 = vmatprep.mubr.f32.mxu0 0.0
    %351 = vmatmul.mubr.f32.gmra.mrb[0].mxu0 %v129
    %v352 = vpop.f32.mrb[0].mxu0
    %v353 = vadd.f32 %v97, %v352
    %v354 = vpop.f32.mrb[0].mxu0
    %v355 = vadd.f32 %v101, %v354
    %356 = vdwg.mxu0
    %357 = vst [vmem:[#allocation2] sm:$0xff] %v198
    %358 = vst [vmem:[#allocation2 + $0x8] sm:$0xff] %v200
    %359 = vst [vmem:[#allocation2 + $0x10] sm:$0xff] %v311
    %360 = vst [vmem:[#allocation2 + $0x18] sm:$0xff] %v313
    %361 = vst [vmem:[#allocation2 + $0x20] sm:$0xff] %v204
    %362 = vst [vmem:[#allocation2 + $0x28] sm:$0xff] %v206
    %363 = vst [vmem:[#allocation2 + $0x30] sm:$0xff] %v317
    %364 = vst [vmem:[#allocation2 + $0x38] sm:$0xff] %v319
    %365 = vst [vmem:[#allocation2 + $0x40] sm:$0xff] %v210
    %366 = vst [vmem:[#allocation2 + $0x48] sm:$0xff] %v212
    %367 = vst [vmem:[#allocation2 + $0x50] sm:$0xff] %v323
    %368 = vst [vmem:[#allocation2 + $0x58] sm:$0xff] %v325
    %369 = vst [vmem:[#allocation2 + $0x60] sm:$0xff] %v216
    %370 = vst [vmem:[#allocation2 + $0x68] sm:$0xff] %v218
    %371 = vst [vmem:[#allocation2 + $0x70] sm:$0xff] %v329
    %372 = vst [vmem:[#allocation2 + $0x78] sm:$0xff] %v331
    %373 = vst [vmem:[#allocation2 + $0x80] sm:$0xff] %v222
    %374 = vst [vmem:[#allocation2 + $0x88] sm:$0xff] %v224
    %375 = vst [vmem:[#allocation2 + $0x90] sm:$0xff] %v335
    %376 = vst [vmem:[#allocation2 + $0x98] sm:$0xff] %v337
    %377 = vst [vmem:[#allocation2 + $0xa0] sm:$0xff] %v228
    %378 = vst [vmem:[#allocation2 + $0xa8] sm:$0xff] %v230
    %379 = vst [vmem:[#allocation2 + $0xb0] sm:$0xff] %v341
    %380 = vst [vmem:[#allocation2 + $0xb8] sm:$0xff] %v343
    %381 = vst [vmem:[#allocation2 + $0xc0] sm:$0xff] %v234
    %382 = vst [vmem:[#allocation2 + $0xc8] sm:$0xff] %v236
    %383 = vst [vmem:[#allocation2 + $0xd0] sm:$0xff] %v347
    %384 = vst [vmem:[#allocation2 + $0xd8] sm:$0xff] %v349
    %385 = vst [vmem:[#allocation2 + $0xe0] sm:$0xff] %v240
    %386 = vst [vmem:[#allocation2 + $0xe8] sm:$0xff] %v242
    %387 = vst [vmem:[#allocation2 + $0xf0] sm:$0xff] %v353
    %388 = vst [vmem:[#allocation2 + $0xf8] sm:$0xff] %v355
    %s389 = smul.u32 0, 4
    %s390 = smul.addr %s389, 8
    %s391 = scalar_lea.vmem [#allocation2], %s390
    %v392 = vld [vmem:[%s391] sm:$0xff]
    %v393 = vld [vmem:[%s391 + $0x8] sm:$0xff]
    %v394 = vld [vmem:[%s391 + $0x10] sm:$0xff]
    %v395 = vld [vmem:[%s391 + $0x18] sm:$0xff]
    %v396 = vld [vmem:[#allocation4] sm:$0xff]
    %v397 = vld [vmem:[#allocation4 + $0x8] sm:$0xff]
    %v398 = vld [vmem:[#allocation4 + $0x10] sm:$0xff]
    %v399 = vld [vmem:[#allocation4 + $0x18] sm:$0xff]
    %v400 = vld [vmem:[#allocation4 + $0x20] sm:$0xff]
    %v401 = vld [vmem:[#allocation4 + $0x28] sm:$0xff]
    %v402 = vld [vmem:[#allocation4 + $0x30] sm:$0xff]
    %v403 = vld [vmem:[#allocation4 + $0x38] sm:$0xff]
    %v404 = vld [vmem:[#allocation4 + $0x40] sm:$0xff]
    %v405 = vld [vmem:[#allocation4 + $0x48] sm:$0xff]
    %v406 = vld [vmem:[#allocation4 + $0x50] sm:$0xff]
    %v407 = vld [vmem:[#allocation4 + $0x58] sm:$0xff]
    %v408 = vld [vmem:[#allocation4 + $0x60] sm:$0xff]
    %v409 = vld [vmem:[#allocation4 + $0x68] sm:$0xff]
    %v410 = vld [vmem:[#allocation4 + $0x70] sm:$0xff]
    %v411 = vld [vmem:[#allocation4 + $0x78] sm:$0xff]
    %v412 = vld [vmem:[#allocation4 + $0x80] sm:$0xff]
    %v413 = vld [vmem:[#allocation4 + $0x88] sm:$0xff]
    %v414 = vld [vmem:[#allocation4 + $0x90] sm:$0xff]
    %v415 = vld [vmem:[#allocation4 + $0x98] sm:$0xff]
    %v416 = vld [vmem:[#allocation4 + $0xa0] sm:$0xff]
    %v417 = vld [vmem:[#allocation4 + $0xa8] sm:$0xff]
    %v418 = vld [vmem:[#allocation4 + $0xb0] sm:$0xff]
    %v419 = vld [vmem:[#allocation4 + $0xb8] sm:$0xff]
    %v420 = vld [vmem:[#allocation4 + $0xc0] sm:$0xff]
    %v421 = vld [vmem:[#allocation4 + $0xc8] sm:$0xff]
    %v422 = vld [vmem:[#allocation4 + $0xd0] sm:$0xff]
    %v423 = vld [vmem:[#allocation4 + $0xd8] sm:$0xff]
    %v424 = vld [vmem:[#allocation4 + $0xe0] sm:$0xff]
    %v425 = vld [vmem:[#allocation4 + $0xe8] sm:$0xff]
    %v426 = vld [vmem:[#allocation4 + $0xf0] sm:$0xff]
    %v427 = vld [vmem:[#allocation4 + $0xf8] sm:$0xff]
    %v428 = vld [vmem:[#allocation4 + $0x100] sm:$0xff]
    %v429 = vld [vmem:[#allocation4 + $0x108] sm:$0xff]
    %v430 = vld [vmem:[#allocation4 + $0x110] sm:$0xff]
    %v431 = vld [vmem:[#allocation4 + $0x118] sm:$0xff]
    %v432 = vld [vmem:[#allocation4 + $0x120] sm:$0xff]
    %v433 = vld [vmem:[#allocation4 + $0x128] sm:$0xff]
    %v434 = vld [vmem:[#allocation4 + $0x130] sm:$0xff]
    %v435 = vld [vmem:[#allocation4 + $0x138] sm:$0xff]
    %v436 = vld [vmem:[#allocation4 + $0x140] sm:$0xff]
    %v437 = vld [vmem:[#allocation4 + $0x148] sm:$0xff]
    %v438 = vld [vmem:[#allocation4 + $0x150] sm:$0xff]
    %v439 = vld [vmem:[#allocation4 + $0x158] sm:$0xff]
    %v440 = vld [vmem:[#allocation4 + $0x160] sm:$0xff]
    %v441 = vld [vmem:[#allocation4 + $0x168] sm:$0xff]
    %v442 = vld [vmem:[#allocation4 + $0x170] sm:$0xff]
    %v443 = vld [vmem:[#allocation4 + $0x178] sm:$0xff]
    %v444 = vld [vmem:[#allocation4 + $0x180] sm:$0xff]
    %v445 = vld [vmem:[#allocation4 + $0x188] sm:$0xff]
    %v446 = vld [vmem:[#allocation4 + $0x190] sm:$0xff]
    %v447 = vld [vmem:[#allocation4 + $0x198] sm:$0xff]
    %v448 = vld [vmem:[#allocation4 + $0x1a0] sm:$0xff]
    %v449 = vld [vmem:[#allocation4 + $0x1a8] sm:$0xff]
    %v450 = vld [vmem:[#allocation4 + $0x1b0] sm:$0xff]
    %v451 = vld [vmem:[#allocation4 + $0x1b8] sm:$0xff]
    %v452 = vld [vmem:[#allocation4 + $0x1c0] sm:$0xff]
    %v453 = vld [vmem:[#allocation4 + $0x1c8] sm:$0xff]
    %v454 = vld [vmem:[#allocation4 + $0x1d0] sm:$0xff]
    %v455 = vld [vmem:[#allocation4 + $0x1d8] sm:$0xff]
    %v456 = vld [vmem:[#allocation4 + $0x1e0] sm:$0xff]
    %v457 = vld [vmem:[#allocation4 + $0x1e8] sm:$0xff]
    %v458 = vld [vmem:[#allocation4 + $0x1f0] sm:$0xff]
    %v459 = vld [vmem:[#allocation4 + $0x1f8] sm:$0xff]
    %460 = vmatprep.subr.mxu0 %v397
    %461 = vmatpush1.msra.mxu0 %v396
    %462 = vmatprep.subr.mxu0 %v401
    %463 = vmatpush1.msra.mxu0 %v400
    %464 = vmatprep.subr.mxu0 %v405
    %465 = vmatpush1.msra.mxu0 %v404
    %466 = vmatprep.subr.mxu0 %v409
    %467 = vmatpush1.msra.mxu0 %v408
    %468 = vmatprep.subr.mxu0 %v413
    %469 = vmatpush1.msra.mxu0 %v412
    %470 = vmatprep.subr.mxu0 %v417
    %471 = vmatpush1.msra.mxu0 %v416
    %472 = vmatprep.subr.mxu0 %v421
    %473 = vmatpush1.msra.mxu0 %v420
    %474 = vmatprep.subr.mxu0 %v425
    %475 = vmatpush1.msra.mxu0 %v424
    %476 = vmatprep.subr.mxu0 %v429
    %477 = vmatpush1.msra.mxu0 %v428
    %478 = vmatprep.subr.mxu0 %v433
    %479 = vmatpush1.msra.mxu0 %v432
    %480 = vmatprep.subr.mxu0 %v437
    %481 = vmatpush1.msra.mxu0 %v436
    %482 = vmatprep.subr.mxu0 %v441
    %483 = vmatpush1.msra.mxu0 %v440
    %484 = vmatprep.subr.mxu0 %v445
    %485 = vmatpush1.msra.mxu0 %v444
    %486 = vmatprep.subr.mxu0 %v449
    %487 = vmatpush1.msra.mxu0 %v448
    %488 = vmatprep.subr.mxu0 %v453
    %489 = vmatpush1.msra.mxu0 %v452
    %490 = vmatprep.subr.mxu0 %v457
    %491 = vmatpush1.msra.mxu0 %v456
    %492 = vmatprep.subr.mxu0 0.0
    %493 = vmatpush1.msra.mxu0 0.0
    %494 = vmatprep.subr.mxu0 0.0
    %495 = vmatpush1.msra.mxu0 0.0
    %496 = vmatprep.subr.mxu0 0.0
    %497 = vmatpush1.msra.mxu0 0.0
    %498 = vmatprep.subr.mxu0 0.0
    %499 = vmatpush1.msra.mxu0 0.0
    %500 = vmatprep.subr.mxu0 0.0
    %501 = vmatpush1.msra.mxu0 0.0
    %502 = vmatprep.subr.mxu0 0.0
    %503 = vmatpush1.msra.mxu0 0.0
    %504 = vmatprep.subr.mxu0 0.0
    %505 = vmatpush1.msra.mxu0 0.0
    %506 = vmatprep.subr.mxu0 0.0
    %507 = vmatpush1.msra.mxu0 0.0
    %508 = vmatprep.subr.mxu0 0.0
    %509 = vmatpush1.msra.mxu0 0.0
    %510 = vmatprep.subr.mxu0 0.0
    %511 = vmatpush1.msra.mxu0 0.0
    %512 = vmatprep.subr.mxu0 0.0
    %513 = vmatpush1.msra.mxu0 0.0
    %514 = vmatprep.subr.mxu0 0.0
    %515 = vmatpush1.msra.mxu0 0.0
    %516 = vmatprep.subr.mxu0 0.0
    %517 = vmatpush1.msra.mxu0 0.0
    %518 = vmatprep.subr.mxu0 0.0
    %519 = vmatpush1.msra.mxu0 0.0
    %520 = vmatprep.subr.mxu0 0.0
    %521 = vmatpush1.msra.mxu0 0.0
    %522 = vmatprep.subr.mxu0 0.0
    %523 = vmatpush1.msra.mxu0 0.0
    %524 = vmatprep.mubr.f32.mxu0 0.0
    %525 = vmatmul.mubr.f32.gmra.mrb[0].mxu0 0.0
    %v526 = vpop.f32.mrb[0].mxu0
    %v527 = vadd.f32 0.0, %v526
    %v528 = vpop.f32.mrb[0].mxu0
    %v529 = vadd.f32 0.0, %v528
    %530 = vdwg.mxu0
    %531 = vmatprep.subr.mxu0 %v399
    %532 = vmatpush1.msra.mxu0 %v398
    %533 = vmatprep.subr.mxu0 %v403
    %534 = vmatpush1.msra.mxu0 %v402
    %535 = vmatprep.subr.mxu0 %v407
    %536 = vmatpush1.msra.mxu0 %v406
    %537 = vmatprep.subr.mxu0 %v411
    %538 = vmatpush1.msra.mxu0 %v410
    %539 = vmatprep.subr.mxu0 %v415
    %540 = vmatpush1.msra.mxu0 %v414
    %541 = vmatprep.subr.mxu0 %v419
    %542 = vmatpush1.msra.mxu0 %v418
    %543 = vmatprep.subr.mxu0 %v423
    %544 = vmatpush1.msra.mxu0 %v422
    %545 = vmatprep.subr.mxu0 %v427
    %546 = vmatpush1.msra.mxu0 %v426
    %547 = vmatprep.subr.mxu0 %v431
    %548 = vmatpush1.msra.mxu0 %v430
    %549 = vmatprep.subr.mxu0 %v435
    %550 = vmatpush1.msra.mxu0 %v434
    %551 = vmatprep.subr.mxu0 %v439
    %552 = vmatpush1.msra.mxu0 %v438
    %553 = vmatprep.subr.mxu0 %v443
    %554 = vmatpush1.msra.mxu0 %v442
    %555 = vmatprep.subr.mxu0 %v447
    %556 = vmatpush1.msra.mxu0 %v446
    %557 = vmatprep.subr.mxu0 %v451
    %558 = vmatpush1.msra.mxu0 %v450
    %559 = vmatprep.subr.mxu0 %v455
    %560 = vmatpush1.msra.mxu0 %v454
    %561 = vmatprep.subr.mxu0 %v459
    %562 = vmatpush1.msra.mxu0 %v458
    %563 = vmatprep.subr.mxu0 0.0
    %564 = vmatpush1.msra.mxu0 0.0
    %565 = vmatprep.subr.mxu0 0.0
    %566 = vmatpush1.msra.mxu0 0.0
    %567 = vmatprep.subr.mxu0 0.0
    %568 = vmatpush1.msra.mxu0 0.0
    %569 = vmatprep.subr.mxu0 0.0
    %570 = vmatpush1.msra.mxu0 0.0
    %571 = vmatprep.subr.mxu0 0.0
    %572 = vmatpush1.msra.mxu0 0.0
    %573 = vmatprep.subr.mxu0 0.0
    %574 = vmatpush1.msra.mxu0 0.0
    %575 = vmatprep.subr.mxu0 0.0
    %576 = vmatpush1.msra.mxu0 0.0
    %577 = vmatprep.subr.mxu0 0.0
    %578 = vmatpush1.msra.mxu0 0.0
    %579 = vmatprep.subr.mxu0 0.0
    %580 = vmatpush1.msra.mxu0 0.0
    %581 = vmatprep.subr.mxu0 0.0
    %582 = vmatpush1.msra.mxu0 0.0
    %583 = vmatprep.subr.mxu0 0.0
    %584 = vmatpush1.msra.mxu0 0.0
    %585 = vmatprep.subr.mxu0 0.0
    %586 = vmatpush1.msra.mxu0 0.0
    %587 = vmatprep.subr.mxu0 0.0
    %588 = vmatpush1.msra.mxu0 0.0
    %589 = vmatprep.subr.mxu0 0.0
    %590 = vmatpush1.msra.mxu0 0.0
    %591 = vmatprep.subr.mxu0 0.0
    %592 = vmatpush1.msra.mxu0 0.0
    %593 = vmatprep.subr.mxu0 0.0
    %594 = vmatpush1.msra.mxu0 0.0
    %595 = vmatprep.mubr.f32.mxu0 0.0
    %596 = vmatmul.mubr.f32.gmra.mrb[0].mxu0 0.0
    %v597 = vpop.f32.mrb[0].mxu0
    %v598 = vadd.f32 0.0, %v597
    %v599 = vpop.f32.mrb[0].mxu0
    %v600 = vadd.f32 0.0, %v599
    %601 = vdwg.mxu0
    %v602 = vadd.f32 %v392, %v527
    %v603 = vadd.f32 %v393, %v529
    %v604 = vadd.f32 %v394, %v598
    %v605 = vadd.f32 %v395, %v600
    %v606 = vxor.u32 %v602, 2147483648
    %v607 = vmul.f32 %v606, 1.442695
    %v608 = vpow.pop %v607
    %v609 = vadd.f32 %v608, 1.0
    %v610 = vrcp.pop %v609
    %v611 = vmul.f32 1.0, %v610
    %v612 = vxor.u32 %v603, 2147483648
    %v613 = vmul.f32 %v612, 1.442695
    %v614 = vpow.pop %v613
    %v615 = vadd.f32 %v614, 1.0
    %v616 = vrcp.pop %v615
    %v617 = vmul.f32 1.0, %v616
    %v618 = vtanh.pop %v604
    %v619 = vxor.u32 %v605, 2147483648
    %v620 = vmul.f32 %v619, 1.442695
    %v621 = vpow.pop %v620
    %v622 = vadd.f32 %v621, 1.0
    %v623 = vrcp.pop %v622
    %v624 = vmul.f32 1.0, %v623
    %v625 = vmul.f32 %v617, 0.0
    %v626 = vmul.f32 %v611, %v618
    %v627 = vadd.f32 %v625, %v626
    %v628 = vtanh.pop %v627
    %v629 = vmul.f32 %v624, %v628
    %630 = vst [vmem:[#allocation3] sm:$0xff] %v629
    %s631 = smul.u32 1, 4
    %s632 = smul.addr %s631, 8
    %s633 = scalar_lea.vmem [#allocation2], %s632
    %v634 = vld [vmem:[%s633] sm:$0xff]
    %v635 = vld [vmem:[%s633 + $0x8] sm:$0xff]
    %v636 = vld [vmem:[%s633 + $0x10] sm:$0xff]
    %v637 = vld [vmem:[%s633 + $0x18] sm:$0xff]
    %v638 = vld [vmem:[#allocation4] sm:$0xff]
    %v639 = vld [vmem:[#allocation4 + $0x8] sm:$0xff]
    %v640 = vld [vmem:[#allocation4 + $0x10] sm:$0xff]
    %v641 = vld [vmem:[#allocation4 + $0x18] sm:$0xff]
    %v642 = vld [vmem:[#allocation4 + $0x20] sm:$0xff]
    %v643 = vld [vmem:[#allocation4 + $0x28] sm:$0xff]
    %v644 = vld [vmem:[#allocation4 + $0x30] sm:$0xff]
    %v645 = vld [vmem:[#allocation4 + $0x38] sm:$0xff]
    %v646 = vld [vmem:[#allocation4 + $0x40] sm:$0xff]
    %v647 = vld [vmem:[#allocation4 + $0x48] sm:$0xff]
    %v648 = vld [vmem:[#allocation4 + $0x50] sm:$0xff]
    %v649 = vld [vmem:[#allocation4 + $0x58] sm:$0xff]
    %v650 = vld [vmem:[#allocation4 + $0x60] sm:$0xff]
    %v651 = vld [vmem:[#allocation4 + $0x68] sm:$0xff]
    %v652 = vld [vmem:[#allocation4 + $0x70] sm:$0xff]
    %v653 = vld [vmem:[#allocation4 + $0x78] sm:$0xff]
    %v654 = vld [vmem:[#allocation4 + $0x80] sm:$0xff]
    %v655 = vld [vmem:[#allocation4 + $0x88] sm:$0xff]
    %v656 = vld [vmem:[#allocation4 + $0x90] sm:$0xff]
    %v657 = vld [vmem:[#allocation4 + $0x98] sm:$0xff]
    %v658 = vld [vmem:[#allocation4 + $0xa0] sm:$0xff]
    %v659 = vld [vmem:[#allocation4 + $0xa8] sm:$0xff]
    %v660 = vld [vmem:[#allocation4 + $0xb0] sm:$0xff]
    %v661 = vld [vmem:[#allocation4 + $0xb8] sm:$0xff]
    %v662 = vld [vmem:[#allocation4 + $0xc0] sm:$0xff]
    %v663 = vld [vmem:[#allocation4 + $0xc8] sm:$0xff]
    %v664 = vld [vmem:[#allocation4 + $0xd0] sm:$0xff]
    %v665 = vld [vmem:[#allocation4 + $0xd8] sm:$0xff]
    %v666 = vld [vmem:[#allocation4 + $0xe0] sm:$0xff]
    %v667 = vld [vmem:[#allocation4 + $0xe8] sm:$0xff]
    %v668 = vld [vmem:[#allocation4 + $0xf0] sm:$0xff]
    %v669 = vld [vmem:[#allocation4 + $0xf8] sm:$0xff]
    %v670 = vld [vmem:[#allocation4 + $0x100] sm:$0xff]
    %v671 = vld [vmem:[#allocation4 + $0x108] sm:$0xff]
    %v672 = vld [vmem:[#allocation4 + $0x110] sm:$0xff]
    %v673 = vld [vmem:[#allocation4 + $0x118] sm:$0xff]
    %v674 = vld [vmem:[#allocation4 + $0x120] sm:$0xff]
    %v675 = vld [vmem:[#allocation4 + $0x128] sm:$0xff]
    %v676 = vld [vmem:[#allocation4 + $0x130] sm:$0xff]
    %v677 = vld [vmem:[#allocation4 + $0x138] sm:$0xff]
    %v678 = vld [vmem:[#allocation4 + $0x140] sm:$0xff]
    %v679 = vld [vmem:[#allocation4 + $0x148] sm:$0xff]
    %v680 = vld [vmem:[#allocation4 + $0x150] sm:$0xff]
    %v681 = vld [vmem:[#allocation4 + $0x158] sm:$0xff]
    %v682 = vld [vmem:[#allocation4 + $0x160] sm:$0xff]
    %v683 = vld [vmem:[#allocation4 + $0x168] sm:$0xff]
    %v684 = vld [vmem:[#allocation4 + $0x170] sm:$0xff]
    %v685 = vld [vmem:[#allocation4 + $0x178] sm:$0xff]
    %v686 = vld [vmem:[#allocation4 + $0x180] sm:$0xff]
    %v687 = vld [vmem:[#allocation4 + $0x188] sm:$0xff]
    %v688 = vld [vmem:[#allocation4 + $0x190] sm:$0xff]
    %v689 = vld [vmem:[#allocation4 + $0x198] sm:$0xff]
    %v690 = vld [vmem:[#allocation4 + $0x1a0] sm:$0xff]
    %v691 = vld [vmem:[#allocation4 + $0x1a8] sm:$0xff]
    %v692 = vld [vmem:[#allocation4 + $0x1b0] sm:$0xff]
    %v693 = vld [vmem:[#allocation4 + $0x1b8] sm:$0xff]
    %v694 = vld [vmem:[#allocation4 + $0x1c0] sm:$0xff]
    %v695 = vld [vmem:[#allocation4 + $0x1c8] sm:$0xff]
    %v696 = vld [vmem:[#allocation4 + $0x1d0] sm:$0xff]
    %v697 = vld [vmem:[#allocation4 + $0x1d8] sm:$0xff]
    %v698 = vld [vmem:[#allocation4 + $0x1e0] sm:$0xff]
    %v699 = vld [vmem:[#allocation4 + $0x1e8] sm:$0xff]
    %v700 = vld [vmem:[#allocation4 + $0x1f0] sm:$0xff]
    %v701 = vld [vmem:[#allocation4 + $0x1f8] sm:$0xff]
    %702 = vmatprep.subr.mxu0 %v639
    %703 = vmatpush1.msra.mxu0 %v638
    %704 = vmatprep.subr.mxu0 %v643
    %705 = vmatpush1.msra.mxu0 %v642
    %706 = vmatprep.subr.mxu0 %v647
    %707 = vmatpush1.msra.mxu0 %v646
    %708 = vmatprep.subr.mxu0 %v651
    %709 = vmatpush1.msra.mxu0 %v650
    %710 = vmatprep.subr.mxu0 %v655
    %711 = vmatpush1.msra.mxu0 %v654
    %712 = vmatprep.subr.mxu0 %v659
    %713 = vmatpush1.msra.mxu0 %v658
    %714 = vmatprep.subr.mxu0 %v663
    %715 = vmatpush1.msra.mxu0 %v662
    %716 = vmatprep.subr.mxu0 %v667
    %717 = vmatpush1.msra.mxu0 %v666
    %718 = vmatprep.subr.mxu0 %v671
    %719 = vmatpush1.msra.mxu0 %v670
    %720 = vmatprep.subr.mxu0 %v675
    %721 = vmatpush1.msra.mxu0 %v674
    %722 = vmatprep.subr.mxu0 %v679
    %723 = vmatpush1.msra.mxu0 %v678
    %724 = vmatprep.subr.mxu0 %v683
    %725 = vmatpush1.msra.mxu0 %v682
    %726 = vmatprep.subr.mxu0 %v687
    %727 = vmatpush1.msra.mxu0 %v686
    %728 = vmatprep.subr.mxu0 %v691
    %729 = vmatpush1.msra.mxu0 %v690
    %730 = vmatprep.subr.mxu0 %v695
    %731 = vmatpush1.msra.mxu0 %v694
    %732 = vmatprep.subr.mxu0 %v699
    %733 = vmatpush1.msra.mxu0 %v698
    %734 = vmatprep.subr.mxu0 0.0
    %735 = vmatpush1.msra.mxu0 0.0
    %736 = vmatprep.subr.mxu0 0.0
    %737 = vmatpush1.msra.mxu0 0.0
    %738 = vmatprep.subr.mxu0 0.0
    %739 = vmatpush1.msra.mxu0 0.0
    %740 = vmatprep.subr.mxu0 0.0
    %741 = vmatpush1.msra.mxu0 0.0
    %742 = vmatprep.subr.mxu0 0.0
    %743 = vmatpush1.msra.mxu0 0.0
    %744 = vmatprep.subr.mxu0 0.0
    %745 = vmatpush1.msra.mxu0 0.0
    %746 = vmatprep.subr.mxu0 0.0
    %747 = vmatpush1.msra.mxu0 0.0
    %748 = vmatprep.subr.mxu0 0.0
    %749 = vmatpush1.msra.mxu0 0.0
    %750 = vmatprep.subr.mxu0 0.0
    %751 = vmatpush1.msra.mxu0 0.0
    %752 = vmatprep.subr.mxu0 0.0
    %753 = vmatpush1.msra.mxu0 0.0
    %754 = vmatprep.subr.mxu0 0.0
    %755 = vmatpush1.msra.mxu0 0.0
    %756 = vmatprep.subr.mxu0 0.0
    %757 = vmatpush1.msra.mxu0 0.0
    %758 = vmatprep.subr.mxu0 0.0
    %759 = vmatpush1.msra.mxu0 0.0
    %760 = vmatprep.subr.mxu0 0.0
    %761 = vmatpush1.msra.mxu0 0.0
    %762 = vmatprep.subr.mxu0 0.0
    %763 = vmatpush1.msra.mxu0 0.0
    %764 = vmatprep.subr.mxu0 0.0
    %765 = vmatpush1.msra.mxu0 0.0
    %766 = vmatprep.mubr.f32.mxu0 0.0
    %767 = vmatmul.mubr.f32.gmra.mrb[0].mxu0 %v629
    %v768 = vpop.f32.mrb[0].mxu0
    %v769 = vadd.f32 0.0, %v768
    %v770 = vpop.f32.mrb[0].mxu0
    %v771 = vadd.f32 0.0, %v770
    %772 = vdwg.mxu0
    %773 = vmatprep.subr.mxu0 %v641
    %774 = vmatpush1.msra.mxu0 %v640
    %775 = vmatprep.subr.mxu0 %v645
    %776 = vmatpush1.msra.mxu0 %v644
    %777 = vmatprep.subr.mxu0 %v649
    %778 = vmatpush1.msra.mxu0 %v648
    %779 = vmatprep.subr.mxu0 %v653
    %780 = vmatpush1.msra.mxu0 %v652
    %781 = vmatprep.subr.mxu0 %v657
    %782 = vmatpush1.msra.mxu0 %v656
    %783 = vmatprep.subr.mxu0 %v661
    %784 = vmatpush1.msra.mxu0 %v660
    %785 = vmatprep.subr.mxu0 %v665
    %786 = vmatpush1.msra.mxu0 %v664
    %787 = vmatprep.subr.mxu0 %v669
    %788 = vmatpush1.msra.mxu0 %v668
    %789 = vmatprep.subr.mxu0 %v673
    %790 = vmatpush1.msra.mxu0 %v672
    %791 = vmatprep.subr.mxu0 %v677
    %792 = vmatpush1.msra.mxu0 %v676
    %793 = vmatprep.subr.mxu0 %v681
    %794 = vmatpush1.msra.mxu0 %v680
    %795 = vmatprep.subr.mxu0 %v685
    %796 = vmatpush1.msra.mxu0 %v684
    %797 = vmatprep.subr.mxu0 %v689
    %798 = vmatpush1.msra.mxu0 %v688
    %799 = vmatprep.subr.mxu0 %v693
    %800 = vmatpush1.msra.mxu0 %v692
    %801 = vmatprep.subr.mxu0 %v697
    %802 = vmatpush1.msra.mxu0 %v696
    %803 = vmatprep.subr.mxu0 %v701
    %804 = vmatpush1.msra.mxu0 %v700
    %805 = vmatprep.subr.mxu0 0.0
    %806 = vmatpush1.msra.mxu0 0.0
    %807 = vmatprep.subr.mxu0 0.0
    %808 = vmatpush1.msra.mxu0 0.0
    %809 = vmatprep.subr.mxu0 0.0
    %810 = vmatpush1.msra.mxu0 0.0
    %811 = vmatprep.subr.mxu0 0.0
    %812 = vmatpush1.msra.mxu0 0.0
    %813 = vmatprep.subr.mxu0 0.0
    %814 = vmatpush1.msra.mxu0 0.0
    %815 = vmatprep.subr.mxu0 0.0
    %816 = vmatpush1.msra.mxu0 0.0
    %817 = vmatprep.subr.mxu0 0.0
    %818 = vmatpush1.msra.mxu0 0.0
    %819 = vmatprep.subr.mxu0 0.0
    %820 = vmatpush1.msra.mxu0 0.0
    %821 = vmatprep.subr.mxu0 0.0
    %822 = vmatpush1.msra.mxu0 0.0
    %823 = vmatprep.subr.mxu0 0.0
    %824 = vmatpush1.msra.mxu0 0.0
    %825 = vmatprep.subr.mxu0 0.0
    %826 = vmatpush1.msra.mxu0 0.0
    %827 = vmatprep.subr.mxu0 0.0
    %828 = vmatpush1.msra.mxu0 0.0
    %829 = vmatprep.subr.mxu0 0.0
    %830 = vmatpush1.msra.mxu0 0.0
    %831 = vmatprep.subr.mxu0 0.0
    %832 = vmatpush1.msra.mxu0 0.0
    %833 = vmatprep.subr.mxu0 0.0
    %834 = vmatpush1.msra.mxu0 0.0
    %835 = vmatprep.subr.mxu0 0.0
    %836 = vmatpush1.msra.mxu0 0.0
    %837 = vmatprep.mubr.f32.mxu0 0.0
    %838 = vmatmul.mubr.f32.gmra.mrb[0].mxu0 %v629
    %v839 = vpop.f32.mrb[0].mxu0
    %v840 = vadd.f32 0.0, %v839
    %v841 = vpop.f32.mrb[0].mxu0
    %v842 = vadd.f32 0.0, %v841
    %843 = vdwg.mxu0
    %v844 = vadd.f32 %v634, %v769
    %v845 = vadd.f32 %v635, %v771
    %v846 = vadd.f32 %v636, %v840
    %v847 = vadd.f32 %v637, %v842
    %v848 = vxor.u32 %v844, 2147483648
    %v849 = vmul.f32 %v848, 1.442695
    %v850 = vpow.pop %v849
    %v851 = vadd.f32 %v850, 1.0
    %v852 = vrcp.pop %v851
    %v853 = vmul.f32 1.0, %v852
    %v854 = vxor.u32 %v845, 2147483648
    %v855 = vmul.f32 %v854, 1.442695
    %v856 = vpow.pop %v855
    %v857 = vadd.f32 %v856, 1.0
    %v858 = vrcp.pop %v857
    %v859 = vmul.f32 1.0, %v858
    %v860 = vtanh.pop %v846
    %v861 = vxor.u32 %v847, 2147483648
    %v862 = vmul.f32 %v861, 1.442695
    %v863 = vpow.pop %v862
    %v864 = vadd.f32 %v863, 1.0
    %v865 = vrcp.pop %v864
    %v866 = vmul.f32 1.0, %v865
    %v867 = vmul.f32 %v859, %v627
    %v868 = vmul.f32 %v853, %v860
    %v869 = vadd.f32 %v867, %v868
    %v870 = vtanh.pop %v869
    %v871 = vmul.f32 %v866, %v870
    %s872 = scalar_lea.vmem [#allocation3], 8
    %873 = vst [vmem:[%s872] sm:$0xff] %v871
    %s874 = smul.u32 2, 4
    %s875 = smul.addr %s874, 8
    %s876 = scalar_lea.vmem [#allocation2], %s875
    %v877 = vld [vmem:[%s876] sm:$0xff]
    %v878 = vld [vmem:[%s876 + $0x8] sm:$0xff]
    %v879 = vld [vmem:[%s876 + $0x10] sm:$0xff]
    %v880 = vld [vmem:[%s876 + $0x18] sm:$0xff]
    %v881 = vld [vmem:[#allocation4] sm:$0xff]
    %v882 = vld [vmem:[#allocation4 + $0x8] sm:$0xff]
    %v883 = vld [vmem:[#allocation4 + $0x10] sm:$0xff]
    %v884 = vld [vmem:[#allocation4 + $0x18] sm:$0xff]
    %v885 = vld [vmem:[#allocation4 + $0x20] sm:$0xff]
    %v886 = vld [vmem:[#allocation4 + $0x28] sm:$0xff]
    %v887 = vld [vmem:[#allocation4 + $0x30] sm:$0xff]
    %v888 = vld [vmem:[#allocation4 + $0x38] sm:$0xff]
    %v889 = vld [vmem:[#allocation4 + $0x40] sm:$0xff]
    %v890 = vld [vmem:[#allocation4 + $0x48] sm:$0xff]
    %v891 = vld [vmem:[#allocation4 + $0x50] sm:$0xff]
    %v892 = vld [vmem:[#allocation4 + $0x58] sm:$0xff]
    %v893 = vld [vmem:[#allocation4 + $0x60] sm:$0xff]
    %v894 = vld [vmem:[#allocation4 + $0x68] sm:$0xff]
    %v895 = vld [vmem:[#allocation4 + $0x70] sm:$0xff]
    %v896 = vld [vmem:[#allocation4 + $0x78] sm:$0xff]
    %v897 = vld [vmem:[#allocation4 + $0x80] sm:$0xff]
    %v898 = vld [vmem:[#allocation4 + $0x88] sm:$0xff]
    %v899 = vld [vmem:[#allocation4 + $0x90] sm:$0xff]
    %v900 = vld [vmem:[#allocation4 + $0x98] sm:$0xff]
    %v901 = vld [vmem:[#allocation4 + $0xa0] sm:$0xff]
    %v902 = vld [vmem:[#allocation4 + $0xa8] sm:$0xff]
    %v903 = vld [vmem:[#allocation4 + $0xb0] sm:$0xff]
    %v904 = vld [vmem:[#allocation4 + $0xb8] sm:$0xff]
    %v905 = vld [vmem:[#allocation4 + $0xc0] sm:$0xff]
    %v906 = vld [vmem:[#allocation4 + $0xc8] sm:$0xff]
    %v907 = vld [vmem:[#allocation4 + $0xd0] sm:$0xff]
    %v908 = vld [vmem:[#allocation4 + $0xd8] sm:$0xff]
    %v909 = vld [vmem:[#allocation4 + $0xe0] sm:$0xff]
    %v910 = vld [vmem:[#allocation4 + $0xe8] sm:$0xff]
    %v911 = vld [vmem:[#allocation4 + $0xf0] sm:$0xff]
    %v912 = vld [vmem:[#allocation4 + $0xf8] sm:$0xff]
    %v913 = vld [vmem:[#allocation4 + $0x100] sm:$0xff]
    %v914 = vld [vmem:[#allocation4 + $0x108] sm:$0xff]
    %v915 = vld [vmem:[#allocation4 + $0x110] sm:$0xff]
    %v916 = vld [vmem:[#allocation4 + $0x118] sm:$0xff]
    %v917 = vld [vmem:[#allocation4 + $0x120] sm:$0xff]
    %v918 = vld [vmem:[#allocation4 + $0x128] sm:$0xff]
    %v919 = vld [vmem:[#allocation4 + $0x130] sm:$0xff]
    %v920 = vld [vmem:[#allocation4 + $0x138] sm:$0xff]
    %v921 = vld [vmem:[#allocation4 + $0x140] sm:$0xff]
    %v922 = vld [vmem:[#allocation4 + $0x148] sm:$0xff]
    %v923 = vld [vmem:[#allocation4 + $0x150] sm:$0xff]
    %v924 = vld [vmem:[#allocation4 + $0x158] sm:$0xff]
    %v925 = vld [vmem:[#allocation4 + $0x160] sm:$0xff]
    %v926 = vld [vmem:[#allocation4 + $0x168] sm:$0xff]
    %v927 = vld [vmem:[#allocation4 + $0x170] sm:$0xff]
    %v928 = vld [vmem:[#allocation4 + $0x178] sm:$0xff]
    %v929 = vld [vmem:[#allocation4 + $0x180] sm:$0xff]
    %v930 = vld [vmem:[#allocation4 + $0x188] sm:$0xff]
    %v931 = vld [vmem:[#allocation4 + $0x190] sm:$0xff]
    %v932 = vld [vmem:[#allocation4 + $0x198] sm:$0xff]
    %v933 = vld [vmem:[#allocation4 + $0x1a0] sm:$0xff]
    %v934 = vld [vmem:[#allocation4 + $0x1a8] sm:$0xff]
    %v935 = vld [vmem:[#allocation4 + $0x1b0] sm:$0xff]
    %v936 = vld [vmem:[#allocation4 + $0x1b8] sm:$0xff]
    %v937 = vld [vmem:[#allocation4 + $0x1c0] sm:$0xff]
    %v938 = vld [vmem:[#allocation4 + $0x1c8] sm:$0xff]
    %v939 = vld [vmem:[#allocation4 + $0x1d0] sm:$0xff]
    %v940 = vld [vmem:[#allocation4 + $0x1d8] sm:$0xff]
    %v941 = vld [vmem:[#allocation4 + $0x1e0] sm:$0xff]
    %v942 = vld [vmem:[#allocation4 + $0x1e8] sm:$0xff]
    %v943 = vld [vmem:[#allocation4 + $0x1f0] sm:$0xff]
    %v944 = vld [vmem:[#allocation4 + $0x1f8] sm:$0xff]
    %945 = vmatprep.subr.mxu0 %v882
    %946 = vmatpush1.msra.mxu0 %v881
    %947 = vmatprep.subr.mxu0 %v886
    %948 = vmatpush1.msra.mxu0 %v885
    %949 = vmatprep.subr.mxu0 %v890
    %950 = vmatpush1.msra.mxu0 %v889
    %951 = vmatprep.subr.mxu0 %v894
    %952 = vmatpush1.msra.mxu0 %v893
    %953 = vmatprep.subr.mxu0 %v898
    %954 = vmatpush1.msra.mxu0 %v897
    %955 = vmatprep.subr.mxu0 %v902
    %956 = vmatpush1.msra.mxu0 %v901
    %957 = vmatprep.subr.mxu0 %v906
    %958 = vmatpush1.msra.mxu0 %v905
    %959 = vmatprep.subr.mxu0 %v910
    %960 = vmatpush1.msra.mxu0 %v909
    %961 = vmatprep.subr.mxu0 %v914
    %962 = vmatpush1.msra.mxu0 %v913
    %963 = vmatprep.subr.mxu0 %v918
    %964 = vmatpush1.msra.mxu0 %v917
    %965 = vmatprep.subr.mxu0 %v922
    %966 = vmatpush1.msra.mxu0 %v921
    %967 = vmatprep.subr.mxu0 %v926
    %968 = vmatpush1.msra.mxu0 %v925
    %969 = vmatprep.subr.mxu0 %v930
    %970 = vmatpush1.msra.mxu0 %v929
    %971 = vmatprep.subr.mxu0 %v934
    %972 = vmatpush1.msra.mxu0 %v933
    %973 = vmatprep.subr.mxu0 %v938
    %974 = vmatpush1.msra.mxu0 %v937
    %975 = vmatprep.subr.mxu0 %v942
    %976 = vmatpush1.msra.mxu0 %v941
    %977 = vmatprep.subr.mxu0 0.0
    %978 = vmatpush1.msra.mxu0 0.0
    %979 = vmatprep.subr.mxu0 0.0
    %980 = vmatpush1.msra.mxu0 0.0
    %981 = vmatprep.subr.mxu0 0.0
    %982 = vmatpush1.msra.mxu0 0.0
    %983 = vmatprep.subr.mxu0 0.0
    %984 = vmatpush1.msra.mxu0 0.0
    %985 = vmatprep.subr.mxu0 0.0
    %986 = vmatpush1.msra.mxu0 0.0
    %987 = vmatprep.subr.mxu0 0.0
    %988 = vmatpush1.msra.mxu0 0.0
    %989 = vmatprep.subr.mxu0 0.0
    %990 = vmatpush1.msra.mxu0 0.0
    %991 = vmatprep.subr.mxu0 0.0
    %992 = vmatpush1.msra.mxu0 0.0
    %993 = vmatprep.subr.mxu0 0.0
    %994 = vmatpush1.msra.mxu0 0.0
    %995 = vmatprep.subr.mxu0 0.0
    %996 = vmatpush1.msra.mxu0 0.0
    %997 = vmatprep.subr.mxu0 0.0
    %998 = vmatpush1.msra.mxu0 0.0
    %999 = vmatprep.subr.mxu0 0.0
    %1000 = vmatpush1.msra.mxu0 0.0
    %1001 = vmatprep.subr.mxu0 0.0
    %1002 = vmatpush1.msra.mxu0 0.0
    %1003 = vmatprep.subr.mxu0 0.0
    %1004 = vmatpush1.msra.mxu0 0.0
    %1005 = vmatprep.subr.mxu0 0.0
    %1006 = vmatpush1.msra.mxu0 0.0
    %1007 = vmatprep.subr.mxu0 0.0
    %1008 = vmatpush1.msra.mxu0 0.0
    %1009 = vmatprep.mubr.f32.mxu0 0.0
    %1010 = vmatmul.mubr.f32.gmra.mrb[0].mxu0 %v871
    %v1011 = vpop.f32.mrb[0].mxu0
    %v1012 = vadd.f32 0.0, %v1011
    %v1013 = vpop.f32.mrb[0].mxu0
    %v1014 = vadd.f32 0.0, %v1013
    %1015 = vdwg.mxu0
    %1016 = vmatprep.subr.mxu0 %v884
    %1017 = vmatpush1.msra.mxu0 %v883
    %1018 = vmatprep.subr.mxu0 %v888
    %1019 = vmatpush1.msra.mxu0 %v887
    %1020 = vmatprep.subr.mxu0 %v892
    %1021 = vmatpush1.msra.mxu0 %v891
    %1022 = vmatprep.subr.mxu0 %v896
    %1023 = vmatpush1.msra.mxu0 %v895
    %1024 = vmatprep.subr.mxu0 %v900
    %1025 = vmatpush1.msra.mxu0 %v899
    %1026 = vmatprep.subr.mxu0 %v904
    %1027 = vmatpush1.msra.mxu0 %v903
    %1028 = vmatprep.subr.mxu0 %v908
    %1029 = vmatpush1.msra.mxu0 %v907
    %1030 = vmatprep.subr.mxu0 %v912
    %1031 = vmatpush1.msra.mxu0 %v911
    %1032 = vmatprep.subr.mxu0 %v916
    %1033 = vmatpush1.msra.mxu0 %v915
    %1034 = vmatprep.subr.mxu0 %v920
    %1035 = vmatpush1.msra.mxu0 %v919
    %1036 = vmatprep.subr.mxu0 %v924
    %1037 = vmatpush1.msra.mxu0 %v923
    %1038 = vmatprep.subr.mxu0 %v928
    %1039 = vmatpush1.msra.mxu0 %v927
    %1040 = vmatprep.subr.mxu0 %v932
    %1041 = vmatpush1.msra.mxu0 %v931
    %1042 = vmatprep.subr.mxu0 %v936
    %1043 = vmatpush1.msra.mxu0 %v935
    %1044 = vmatprep.subr.mxu0 %v940
    %1045 = vmatpush1.msra.mxu0 %v939
    %1046 = vmatprep.subr.mxu0 %v944
    %1047 = vmatpush1.msra.mxu0 %v943
    %1048 = vmatprep.subr.mxu0 0.0
    %1049 = vmatpush1.msra.mxu0 0.0
    %1050 = vmatprep.subr.mxu0 0.0
    %1051 = vmatpush1.msra.mxu0 0.0
    %1052 = vmatprep.subr.mxu0 0.0
    %1053 = vmatpush1.msra.mxu0 0.0
    %1054 = vmatprep.subr.mxu0 0.0
    %1055 = vmatpush1.msra.mxu0 0.0
    %1056 = vmatprep.subr.mxu0 0.0
    %1057 = vmatpush1.msra.mxu0 0.0
    %1058 = vmatprep.subr.mxu0 0.0
    %1059 = vmatpush1.msra.mxu0 0.0
    %1060 = vmatprep.subr.mxu0 0.0
    %1061 = vmatpush1.msra.mxu0 0.0
    %1062 = vmatprep.subr.mxu0 0.0
    %1063 = vmatpush1.msra.mxu0 0.0
    %1064 = vmatprep.subr.mxu0 0.0
    %1065 = vmatpush1.msra.mxu0 0.0
    %1066 = vmatprep.subr.mxu0 0.0
    %1067 = vmatpush1.msra.mxu0 0.0
    %1068 = vmatprep.subr.mxu0 0.0
    %1069 = vmatpush1.msra.mxu0 0.0
    %1070 = vmatprep.subr.mxu0 0.0
    %1071 = vmatpush1.msra.mxu0 0.0
    %1072 = vmatprep.subr.mxu0 0.0
    %1073 = vmatpush1.msra.mxu0 0.0
    %1074 = vmatprep.subr.mxu0 0.0
    %1075 = vmatpush1.msra.mxu0 0.0
    %1076 = vmatprep.subr.mxu0 0.0
    %1077 = vmatpush1.msra.mxu0 0.0
    %1078 = vmatprep.subr.mxu0 0.0
    %1079 = vmatpush1.msra.mxu0 0.0
    %1080 = vmatprep.mubr.f32.mxu0 0.0
    %1081 = vmatmul.mubr.f32.gmra.mrb[0].mxu0 %v871
    %v1082 = vpop.f32.mrb[0].mxu0
    %v1083 = vadd.f32 0.0, %v1082
    %v1084 = vpop.f32.mrb[0].mxu0
    %v1085 = vadd.f32 0.0, %v1084
    %1086 = vdwg.mxu0
    %v1087 = vadd.f32 %v877, %v1012
    %v1088 = vadd.f32 %v878, %v1014
    %v1089 = vadd.f32 %v879, %v1083
    %v1090 = vadd.f32 %v880, %v1085
    %v1091 = vxor.u32 %v1087, 2147483648
    %v1092 = vmul.f32 %v1091, 1.442695
    %v1093 = vpow.pop %v1092
    %v1094 = vadd.f32 %v1093, 1.0
    %v1095 = vrcp.pop %v1094
    %v1096 = vmul.f32 1.0, %v1095
    %v1097 = vxor.u32 %v1088, 2147483648
    %v1098 = vmul.f32 %v1097, 1.442695
    %v1099 = vpow.pop %v1098
    %v1100 = vadd.f32 %v1099, 1.0
    %v1101 = vrcp.pop %v1100
    %v1102 = vmul.f32 1.0, %v1101
    %v1103 = vtanh.pop %v1089
    %v1104 = vxor.u32 %v1090, 2147483648
    %v1105 = vmul.f32 %v1104, 1.442695
    %v1106 = vpow.pop %v1105
    %v1107 = vadd.f32 %v1106, 1.0
    %v1108 = vrcp.pop %v1107
    %v1109 = vmul.f32 1.0, %v1108
    %v1110 = vmul.f32 %v1102, %v869
    %v1111 = vmul.f32 %v1096, %v1103
    %v1112 = vadd.f32 %v1110, %v1111
    %v1113 = vtanh.pop %v1112
    %v1114 = vmul.f32 %v1109, %v1113
    %s1115 = scalar_lea.vmem [#allocation3], 16
    %1116 = vst [vmem:[%s1115] sm:$0xff] %v1114
    %s1117 = smul.u32 3, 4
    %s1118 = smul.addr %s1117, 8
    %s1119 = scalar_lea.vmem [#allocation2], %s1118
    %v1120 = vld [vmem:[%s1119] sm:$0xff]
    %v1121 = vld [vmem:[%s1119 + $0x8] sm:$0xff]
    %v1122 = vld [vmem:[%s1119 + $0x10] sm:$0xff]
    %v1123 = vld [vmem:[%s1119 + $0x18] sm:$0xff]
    %v1124 = vld [vmem:[#allocation4] sm:$0xff]
    %v1125 = vld [vmem:[#allocation4 + $0x8] sm:$0xff]
    %v1126 = vld [vmem:[#allocation4 + $0x10] sm:$0xff]
    %v1127 = vld [vmem:[#allocation4 + $0x18] sm:$0xff]
    %v1128 = vld [vmem:[#allocation4 + $0x20] sm:$0xff]
    %v1129 = vld [vmem:[#allocation4 + $0x28] sm:$0xff]
    %v1130 = vld [vmem:[#allocation4 + $0x30] sm:$0xff]
    %v1131 = vld [vmem:[#allocation4 + $0x38] sm:$0xff]
    %v1132 = vld [vmem:[#allocation4 + $0x40] sm:$0xff]
    %v1133 = vld [vmem:[#allocation4 + $0x48] sm:$0xff]
    %v1134 = vld [vmem:[#allocation4 + $0x50] sm:$0xff]
    %v1135 = vld [vmem:[#allocation4 + $0x58] sm:$0xff]
    %v1136 = vld [vmem:[#allocation4 + $0x60] sm:$0xff]
    %v1137 = vld [vmem:[#allocation4 + $0x68] sm:$0xff]
    %v1138 = vld [vmem:[#allocation4 + $0x70] sm:$0xff]
    %v1139 = vld [vmem:[#allocation4 + $0x78] sm:$0xff]
    %v1140 = vld [vmem:[#allocation4 + $0x80] sm:$0xff]
    %v1141 = vld [vmem:[#allocation4 + $0x88] sm:$0xff]
    %v1142 = vld [vmem:[#allocation4 + $0x90] sm:$0xff]
    %v1143 = vld [vmem:[#allocation4 + $0x98] sm:$0xff]
    %v1144 = vld [vmem:[#allocation4 + $0xa0] sm:$0xff]
    %v1145 = vld [vmem:[#allocation4 + $0xa8] sm:$0xff]
    %v1146 = vld [vmem:[#allocation4 + $0xb0] sm:$0xff]
    %v1147 = vld [vmem:[#allocation4 + $0xb8] sm:$0xff]
    %v1148 = vld [vmem:[#allocation4 + $0xc0] sm:$0xff]
    %v1149 = vld [vmem:[#allocation4 + $0xc8] sm:$0xff]
    %v1150 = vld [vmem:[#allocation4 + $0xd0] sm:$0xff]
    %v1151 = vld [vmem:[#allocation4 + $0xd8] sm:$0xff]
    %v1152 = vld [vmem:[#allocation4 + $0xe0] sm:$0xff]
    %v1153 = vld [vmem:[#allocation4 + $0xe8] sm:$0xff]
    %v1154 = vld [vmem:[#allocation4 + $0xf0] sm:$0xff]
    %v1155 = vld [vmem:[#allocation4 + $0xf8] sm:$0xff]
    %v1156 = vld [vmem:[#allocation4 + $0x100] sm:$0xff]
    %v1157 = vld [vmem:[#allocation4 + $0x108] sm:$0xff]
    %v1158 = vld [vmem:[#allocation4 + $0x110] sm:$0xff]
    %v1159 = vld [vmem:[#allocation4 + $0x118] sm:$0xff]
    %v1160 = vld [vmem:[#allocation4 + $0x120] sm:$0xff]
    %v1161 = vld [vmem:[#allocation4 + $0x128] sm:$0xff]
    %v1162 = vld [vmem:[#allocation4 + $0x130] sm:$0xff]
    %v1163 = vld [vmem:[#allocation4 + $0x138] sm:$0xff]
    %v1164 = vld [vmem:[#allocation4 + $0x140] sm:$0xff]
    %v1165 = vld [vmem:[#allocation4 + $0x148] sm:$0xff]
    %v1166 = vld [vmem:[#allocation4 + $0x150] sm:$0xff]
    %v1167 = vld [vmem:[#allocation4 + $0x158] sm:$0xff]
    %v1168 = vld [vmem:[#allocation4 + $0x160] sm:$0xff]
    %v1169 = vld [vmem:[#allocation4 + $0x168] sm:$0xff]
    %v1170 = vld [vmem:[#allocation4 + $0x170] sm:$0xff]
    %v1171 = vld [vmem:[#allocation4 + $0x178] sm:$0xff]
    %v1172 = vld [vmem:[#allocation4 + $0x180] sm:$0xff]
    %v1173 = vld [vmem:[#allocation4 + $0x188] sm:$0xff]
    %v1174 = vld [vmem:[#allocation4 + $0x190] sm:$0xff]
    %v1175 = vld [vmem:[#allocation4 + $0x198] sm:$0xff]
    %v1176 = vld [vmem:[#allocation4 + $0x1a0] sm:$0xff]
    %v1177 = vld [vmem:[#allocation4 + $0x1a8] sm:$0xff]
    %v1178 = vld [vmem:[#allocation4 + $0x1b0] sm:$0xff]
    %v1179 = vld [vmem:[#allocation4 + $0x1b8] sm:$0xff]
    %v1180 = vld [vmem:[#allocation4 + $0x1c0] sm:$0xff]
    %v1181 = vld [vmem:[#allocation4 + $0x1c8] sm:$0xff]
    %v1182 = vld [vmem:[#allocation4 + $0x1d0] sm:$0xff]
    %v1183 = vld [vmem:[#allocation4 + $0x1d8] sm:$0xff]
    %v1184 = vld [vmem:[#allocation4 + $0x1e0] sm:$0xff]
    %v1185 = vld [vmem:[#allocation4 + $0x1e8] sm:$0xff]
    %v1186 = vld [vmem:[#allocation4 + $0x1f0] sm:$0xff]
    %v1187 = vld [vmem:[#allocation4 + $0x1f8] sm:$0xff]
    %1188 = vmatprep.subr.mxu0 %v1125
    %1189 = vmatpush1.msra.mxu0 %v1124
    %1190 = vmatprep.subr.mxu0 %v1129
    %1191 = vmatpush1.msra.mxu0 %v1128
    %1192 = vmatprep.subr.mxu0 %v1133
    %1193 = vmatpush1.msra.mxu0 %v1132
    %1194 = vmatprep.subr.mxu0 %v1137
    %1195 = vmatpush1.msra.mxu0 %v1136
    %1196 = vmatprep.subr.mxu0 %v1141
    %1197 = vmatpush1.msra.mxu0 %v1140
    %1198 = vmatprep.subr.mxu0 %v1145
    %1199 = vmatpush1.msra.mxu0 %v1144
    %1200 = vmatprep.subr.mxu0 %v1149
    %1201 = vmatpush1.msra.mxu0 %v1148
    %1202 = vmatprep.subr.mxu0 %v1153
    %1203 = vmatpush1.msra.mxu0 %v1152
    %1204 = vmatprep.subr.mxu0 %v1157
    %1205 = vmatpush1.msra.mxu0 %v1156
    %1206 = vmatprep.subr.mxu0 %v1161
    %1207 = vmatpush1.msra.mxu0 %v1160
    %1208 = vmatprep.subr.mxu0 %v1165
    %1209 = vmatpush1.msra.mxu0 %v1164
    %1210 = vmatprep.subr.mxu0 %v1169
    %1211 = vmatpush1.msra.mxu0 %v1168
    %1212 = vmatprep.subr.mxu0 %v1173
    %1213 = vmatpush1.msra.mxu0 %v1172
    %1214 = vmatprep.subr.mxu0 %v1177
    %1215 = vmatpush1.msra.mxu0 %v1176
    %1216 = vmatprep.subr.mxu0 %v1181
    %1217 = vmatpush1.msra.mxu0 %v1180
    %1218 = vmatprep.subr.mxu0 %v1185
    %1219 = vmatpush1.msra.mxu0 %v1184
    %1220 = vmatprep.subr.mxu0 0.0
    %1221 = vmatpush1.msra.mxu0 0.0
    %1222 = vmatprep.subr.mxu0 0.0
    %1223 = vmatpush1.msra.mxu0 0.0
    %1224 = vmatprep.subr.mxu0 0.0
    %1225 = vmatpush1.msra.mxu0 0.0
    %1226 = vmatprep.subr.mxu0 0.0
    %1227 = vmatpush1.msra.mxu0 0.0
    %1228 = vmatprep.subr.mxu0 0.0
    %1229 = vmatpush1.msra.mxu0 0.0
    %1230 = vmatprep.subr.mxu0 0.0
    %1231 = vmatpush1.msra.mxu0 0.0
    %1232 = vmatprep.subr.mxu0 0.0
    %1233 = vmatpush1.msra.mxu0 0.0
    %1234 = vmatprep.subr.mxu0 0.0
    %1235 = vmatpush1.msra.mxu0 0.0
    %1236 = vmatprep.subr.mxu0 0.0
    %1237 = vmatpush1.msra.mxu0 0.0
    %1238 = vmatprep.subr.mxu0 0.0
    %1239 = vmatpush1.msra.mxu0 0.0
    %1240 = vmatprep.subr.mxu0 0.0
    %1241 = vmatpush1.msra.mxu0 0.0
    %1242 = vmatprep.subr.mxu0 0.0
    %1243 = vmatpush1.msra.mxu0 0.0
    %1244 = vmatprep.subr.mxu0 0.0
    %1245 = vmatpush1.msra.mxu0 0.0
    %1246 = vmatprep.subr.mxu0 0.0
    %1247 = vmatpush1.msra.mxu0 0.0
    %1248 = vmatprep.subr.mxu0 0.0
    %1249 = vmatpush1.msra.mxu0 0.0
    %1250 = vmatprep.subr.mxu0 0.0
    %1251 = vmatpush1.msra.mxu0 0.0
    %1252 = vmatprep.mubr.f32.mxu0 0.0
    %1253 = vmatmul.mubr.f32.gmra.mrb[0].mxu0 %v1114
    %v1254 = vpop.f32.mrb[0].mxu0
    %v1255 = vadd.f32 0.0, %v1254
    %v1256 = vpop.f32.mrb[0].mxu0
    %v1257 = vadd.f32 0.0, %v1256
    %1258 = vdwg.mxu0
    %1259 = vmatprep.subr.mxu0 %v1127
    %1260 = vmatpush1.msra.mxu0 %v1126
    %1261 = vmatprep.subr.mxu0 %v1131
    %1262 = vmatpush1.msra.mxu0 %v1130
    %1263 = vmatprep.subr.mxu0 %v1135
    %1264 = vmatpush1.msra.mxu0 %v1134
    %1265 = vmatprep.subr.mxu0 %v1139
    %1266 = vmatpush1.msra.mxu0 %v1138
    %1267 = vmatprep.subr.mxu0 %v1143
    %1268 = vmatpush1.msra.mxu0 %v1142
    %1269 = vmatprep.subr.mxu0 %v1147
    %1270 = vmatpush1.msra.mxu0 %v1146
    %1271 = vmatprep.subr.mxu0 %v1151
    %1272 = vmatpush1.msra.mxu0 %v1150
    %1273 = vmatprep.subr.mxu0 %v1155
    %1274 = vmatpush1.msra.mxu0 %v1154
    %1275 = vmatprep.subr.mxu0 %v1159
    %1276 = vmatpush1.msra.mxu0 %v1158
    %1277 = vmatprep.subr.mxu0 %v1163
    %1278 = vmatpush1.msra.mxu0 %v1162
    %1279 = vmatprep.subr.mxu0 %v1167
    %1280 = vmatpush1.msra.mxu0 %v1166
    %1281 = vmatprep.subr.mxu0 %v1171
    %1282 = vmatpush1.msra.mxu0 %v1170
    %1283 = vmatprep.subr.mxu0 %v1175
    %1284 = vmatpush1.msra.mxu0 %v1174
    %1285 = vmatprep.subr.mxu0 %v1179
    %1286 = vmatpush1.msra.mxu0 %v1178
    %1287 = vmatprep.subr.mxu0 %v1183
    %1288 = vmatpush1.msra.mxu0 %v1182
    %1289 = vmatprep.subr.mxu0 %v1187
    %1290 = vmatpush1.msra.mxu0 %v1186
    %1291 = vmatprep.subr.mxu0 0.0
    %1292 = vmatpush1.msra.mxu0 0.0
    %1293 = vmatprep.subr.mxu0 0.0
    %1294 = vmatpush1.msra.mxu0 0.0
    %1295 = vmatprep.subr.mxu0 0.0
    %1296 = vmatpush1.msra.mxu0 0.0
    %1297 = vmatprep.subr.mxu0 0.0
    %1298 = vmatpush1.msra.mxu0 0.0
    %1299 = vmatprep.subr.mxu0 0.0
    %1300 = vmatpush1.msra.mxu0 0.0
    %1301 = vmatprep.subr.mxu0 0.0
    %1302 = vmatpush1.msra.mxu0 0.0
    %1303 = vmatprep.subr.mxu0 0.0
    %1304 = vmatpush1.msra.mxu0 0.0
    %1305 = vmatprep.subr.mxu0 0.0
    %1306 = vmatpush1.msra.mxu0 0.0
    %1307 = vmatprep.subr.mxu0 0.0
    %1308 = vmatpush1.msra.mxu0 0.0
    %1309 = vmatprep.subr.mxu0 0.0
    %1310 = vmatpush1.msra.mxu0 0.0
    %1311 = vmatprep.subr.mxu0 0.0
    %1312 = vmatpush1.msra.mxu0 0.0
    %1313 = vmatprep.subr.mxu0 0.0
    %1314 = vmatpush1.msra.mxu0 0.0
    %1315 = vmatprep.subr.mxu0 0.0
    %1316 = vmatpush1.msra.mxu0 0.0
    %1317 = vmatprep.subr.mxu0 0.0
    %1318 = vmatpush1.msra.mxu0 0.0
    %1319 = vmatprep.subr.mxu0 0.0
    %1320 = vmatpush1.msra.mxu0 0.0
    %1321 = vmatprep.subr.mxu0 0.0
    %1322 = vmatpush1.msra.mxu0 0.0
    %1323 = vmatprep.mubr.f32.mxu0 0.0
    %1324 = vmatmul.mubr.f32.gmra.mrb[0].mxu0 %v1114
    %v1325 = vpop.f32.mrb[0].mxu0
    %v1326 = vadd.f32 0.0, %v1325
    %v1327 = vpop.f32.mrb[0].mxu0
    %v1328 = vadd.f32 0.0, %v1327
    %1329 = vdwg.mxu0
    %v1330 = vadd.f32 %v1120, %v1255
    %v1331 = vadd.f32 %v1121, %v1257
    %v1332 = vadd.f32 %v1122, %v1326
    %v1333 = vadd.f32 %v1123, %v1328
    %v1334 = vxor.u32 %v1330, 2147483648
    %v1335 = vmul.f32 %v1334, 1.442695
    %v1336 = vpow.pop %v1335
    %v1337 = vadd.f32 %v1336, 1.0
    %v1338 = vrcp.pop %v1337
    %v1339 = vmul.f32 1.0, %v1338
    %v1340 = vxor.u32 %v1331, 2147483648
    %v1341 = vmul.f32 %v1340, 1.442695
    %v1342 = vpow.pop %v1341
    %v1343 = vadd.f32 %v1342, 1.0
    %v1344 = vrcp.pop %v1343
    %v1345 = vmul.f32 1.0, %v1344
    %v1346 = vtanh.pop %v1332
    %v1347 = vxor.u32 %v1333, 2147483648
    %v1348 = vmul.f32 %v1347, 1.442695
    %v1349 = vpow.pop %v1348
    %v1350 = vadd.f32 %v1349, 1.0
    %v1351 = vrcp.pop %v1350
    %v1352 = vmul.f32 1.0, %v1351
    %v1353 = vmul.f32 %v1345, %v1112
    %v1354 = vmul.f32 %v1339, %v1346
    %v1355 = vadd.f32 %v1353, %v1354
    %v1356 = vtanh.pop %v1355
    %v1357 = vmul.f32 %v1352, %v1356
    %s1358 = scalar_lea.vmem [#allocation3], 24
    %1359 = vst [vmem:[%s1358] sm:$0xff] %v1357
    %s1360 = smul.u32 4, 4
    %s1361 = smul.addr %s1360, 8
    %s1362 = scalar_lea.vmem [#allocation2], %s1361
    %v1363 = vld [vmem:[%s1362] sm:$0xff]
    %v1364 = vld [vmem:[%s1362 + $0x8] sm:$0xff]
    %v1365 = vld [vmem:[%s1362 + $0x10] sm:$0xff]
    %v1366 = vld [vmem:[%s1362 + $0x18] sm:$0xff]
    %v1367 = vld [vmem:[#allocation4] sm:$0xff]
    %v1368 = vld [vmem:[#allocation4 + $0x8] sm:$0xff]
    %v1369 = vld [vmem:[#allocation4 + $0x10] sm:$0xff]
    %v1370 = vld [vmem:[#allocation4 + $0x18] sm:$0xff]
    %v1371 = vld [vmem:[#allocation4 + $0x20] sm:$0xff]
    %v1372 = vld [vmem:[#allocation4 + $0x28] sm:$0xff]
    %v1373 = vld [vmem:[#allocation4 + $0x30] sm:$0xff]
    %v1374 = vld [vmem:[#allocation4 + $0x38] sm:$0xff]
    %v1375 = vld [vmem:[#allocation4 + $0x40] sm:$0xff]
    %v1376 = vld [vmem:[#allocation4 + $0x48] sm:$0xff]
    %v1377 = vld [vmem:[#allocation4 + $0x50] sm:$0xff]
    %v1378 = vld [vmem:[#allocation4 + $0x58] sm:$0xff]
    %v1379 = vld [vmem:[#allocation4 + $0x60] sm:$0xff]
    %v1380 = vld [vmem:[#allocation4 + $0x68] sm:$0xff]
    %v1381 = vld [vmem:[#allocation4 + $0x70] sm:$0xff]
    %v1382 = vld [vmem:[#allocation4 + $0x78] sm:$0xff]
    %v1383 = vld [vmem:[#allocation4 + $0x80] sm:$0xff]
    %v1384 = vld [vmem:[#allocation4 + $0x88] sm:$0xff]
    %v1385 = vld [vmem:[#allocation4 + $0x90] sm:$0xff]
    %v1386 = vld [vmem:[#allocation4 + $0x98] sm:$0xff]
    %v1387 = vld [vmem:[#allocation4 + $0xa0] sm:$0xff]
    %v1388 = vld [vmem:[#allocation4 + $0xa8] sm:$0xff]
    %v1389 = vld [vmem:[#allocation4 + $0xb0] sm:$0xff]
    %v1390 = vld [vmem:[#allocation4 + $0xb8] sm:$0xff]
    %v1391 = vld [vmem:[#allocation4 + $0xc0] sm:$0xff]
    %v1392 = vld [vmem:[#allocation4 + $0xc8] sm:$0xff]
    %v1393 = vld [vmem:[#allocation4 + $0xd0] sm:$0xff]
    %v1394 = vld [vmem:[#allocation4 + $0xd8] sm:$0xff]
    %v1395 = vld [vmem:[#allocation4 + $0xe0] sm:$0xff]
    %v1396 = vld [vmem:[#allocation4 + $0xe8] sm:$0xff]
    %v1397 = vld [vmem:[#allocation4 + $0xf0] sm:$0xff]
    %v1398 = vld [vmem:[#allocation4 + $0xf8] sm:$0xff]
    %v1399 = vld [vmem:[#allocation4 + $0x100] sm:$0xff]
    %v1400 = vld [vmem:[#allocation4 + $0x108] sm:$0xff]
    %v1401 = vld [vmem:[#allocation4 + $0x110] sm:$0xff]
    %v1402 = vld [vmem:[#allocation4 + $0x118] sm:$0xff]
    %v1403 = vld [vmem:[#allocation4 + $0x120] sm:$0xff]
    %v1404 = vld [vmem:[#allocation4 + $0x128] sm:$0xff]
    %v1405 = vld [vmem:[#allocation4 + $0x130] sm:$0xff]
    %v1406 = vld [vmem:[#allocation4 + $0x138] sm:$0xff]
    %v1407 = vld [vmem:[#allocation4 + $0x140] sm:$0xff]
    %v1408 = vld [vmem:[#allocation4 + $0x148] sm:$0xff]
    %v1409 = vld [vmem:[#allocation4 + $0x150] sm:$0xff]
    %v1410 = vld [vmem:[#allocation4 + $0x158] sm:$0xff]
    %v1411 = vld [vmem:[#allocation4 + $0x160] sm:$0xff]
    %v1412 = vld [vmem:[#allocation4 + $0x168] sm:$0xff]
    %v1413 = vld [vmem:[#allocation4 + $0x170] sm:$0xff]
    %v1414 = vld [vmem:[#allocation4 + $0x178] sm:$0xff]
    %v1415 = vld [vmem:[#allocation4 + $0x180] sm:$0xff]
    %v1416 = vld [vmem:[#allocation4 + $0x188] sm:$0xff]
    %v1417 = vld [vmem:[#allocation4 + $0x190] sm:$0xff]
    %v1418 = vld [vmem:[#allocation4 + $0x198] sm:$0xff]
    %v1419 = vld [vmem:[#allocation4 + $0x1a0] sm:$0xff]
    %v1420 = vld [vmem:[#allocation4 + $0x1a8] sm:$0xff]
    %v1421 = vld [vmem:[#allocation4 + $0x1b0] sm:$0xff]
    %v1422 = vld [vmem:[#allocation4 + $0x1b8] sm:$0xff]
    %v1423 = vld [vmem:[#allocation4 + $0x1c0] sm:$0xff]
    %v1424 = vld [vmem:[#allocation4 + $0x1c8] sm:$0xff]
    %v1425 = vld [vmem:[#allocation4 + $0x1d0] sm:$0xff]
    %v1426 = vld [vmem:[#allocation4 + $0x1d8] sm:$0xff]
    %v1427 = vld [vmem:[#allocation4 + $0x1e0] sm:$0xff]
    %v1428 = vld [vmem:[#allocation4 + $0x1e8] sm:$0xff]
    %v1429 = vld [vmem:[#allocation4 + $0x1f0] sm:$0xff]
    %v1430 = vld [vmem:[#allocation4 + $0x1f8] sm:$0xff]
    %1431 = vmatprep.subr.mxu0 %v1368
    %1432 = vmatpush1.msra.mxu0 %v1367
    %1433 = vmatprep.subr.mxu0 %v1372
    %1434 = vmatpush1.msra.mxu0 %v1371
    %1435 = vmatprep.subr.mxu0 %v1376
    %1436 = vmatpush1.msra.mxu0 %v1375
    %1437 = vmatprep.subr.mxu0 %v1380
    %1438 = vmatpush1.msra.mxu0 %v1379
    %1439 = vmatprep.subr.mxu0 %v1384
    %1440 = vmatpush1.msra.mxu0 %v1383
    %1441 = vmatprep.subr.mxu0 %v1388
    %1442 = vmatpush1.msra.mxu0 %v1387
    %1443 = vmatprep.subr.mxu0 %v1392
    %1444 = vmatpush1.msra.mxu0 %v1391
    %1445 = vmatprep.subr.mxu0 %v1396
    %1446 = vmatpush1.msra.mxu0 %v1395
    %1447 = vmatprep.subr.mxu0 %v1400
    %1448 = vmatpush1.msra.mxu0 %v1399
    %1449 = vmatprep.subr.mxu0 %v1404
    %1450 = vmatpush1.msra.mxu0 %v1403
    %1451 = vmatprep.subr.mxu0 %v1408
    %1452 = vmatpush1.msra.mxu0 %v1407
    %1453 = vmatprep.subr.mxu0 %v1412
    %1454 = vmatpush1.msra.mxu0 %v1411
    %1455 = vmatprep.subr.mxu0 %v1416
    %1456 = vmatpush1.msra.mxu0 %v1415
    %1457 = vmatprep.subr.mxu0 %v1420
    %1458 = vmatpush1.msra.mxu0 %v1419
    %1459 = vmatprep.subr.mxu0 %v1424
    %1460 = vmatpush1.msra.mxu0 %v1423
    %1461 = vmatprep.subr.mxu0 %v1428
    %1462 = vmatpush1.msra.mxu0 %v1427
    %1463 = vmatprep.subr.mxu0 0.0
    %1464 = vmatpush1.msra.mxu0 0.0
    %1465 = vmatprep.subr.mxu0 0.0
    %1466 = vmatpush1.msra.mxu0 0.0
    %1467 = vmatprep.subr.mxu0 0.0
    %1468 = vmatpush1.msra.mxu0 0.0
    %1469 = vmatprep.subr.mxu0 0.0
    %1470 = vmatpush1.msra.mxu0 0.0
    %1471 = vmatprep.subr.mxu0 0.0
    %1472 = vmatpush1.msra.mxu0 0.0
    %1473 = vmatprep.subr.mxu0 0.0
    %1474 = vmatpush1.msra.mxu0 0.0
    %1475 = vmatprep.subr.mxu0 0.0
    %1476 = vmatpush1.msra.mxu0 0.0
    %1477 = vmatprep.subr.mxu0 0.0
    %1478 = vmatpush1.msra.mxu0 0.0
    %1479 = vmatprep.subr.mxu0 0.0
    %1480 = vmatpush1.msra.mxu0 0.0
    %1481 = vmatprep.subr.mxu0 0.0
    %1482 = vmatpush1.msra.mxu0 0.0
    %1483 = vmatprep.subr.mxu0 0.0
    %1484 = vmatpush1.msra.mxu0 0.0
    %1485 = vmatprep.subr.mxu0 0.0
    %1486 = vmatpush1.msra.mxu0 0.0
    %1487 = vmatprep.subr.mxu0 0.0
    %1488 = vmatpush1.msra.mxu0 0.0
    %1489 = vmatprep.subr.mxu0 0.0
    %1490 = vmatpush1.msra.mxu0 0.0
    %1491 = vmatprep.subr.mxu0 0.0
    %1492 = vmatpush1.msra.mxu0 0.0
    %1493 = vmatprep.subr.mxu0 0.0
    %1494 = vmatpush1.msra.mxu0 0.0
    %1495 = vmatprep.mubr.f32.mxu0 0.0
    %1496 = vmatmul.mubr.f32.gmra.mrb[0].mxu0 %v1357
    %v1497 = vpop.f32.mrb[0].mxu0
    %v1498 = vadd.f32 0.0, %v1497
    %v1499 = vpop.f32.mrb[0].mxu0
    %v1500 = vadd.f32 0.0, %v1499
    %1501 = vdwg.mxu0
    %1502 = vmatprep.subr.mxu0 %v1370
    %1503 = vmatpush1.msra.mxu0 %v1369
    %1504 = vmatprep.subr.mxu0 %v1374
    %1505 = vmatpush1.msra.mxu0 %v1373
    %1506 = vmatprep.subr.mxu0 %v1378
    %1507 = vmatpush1.msra.mxu0 %v1377
    %1508 = vmatprep.subr.mxu0 %v1382
    %1509 = vmatpush1.msra.mxu0 %v1381
    %1510 = vmatprep.subr.mxu0 %v1386
    %1511 = vmatpush1.msra.mxu0 %v1385
    %1512 = vmatprep.subr.mxu0 %v1390
    %1513 = vmatpush1.msra.mxu0 %v1389
    %1514 = vmatprep.subr.mxu0 %v1394
    %1515 = vmatpush1.msra.mxu0 %v1393
    %1516 = vmatprep.subr.mxu0 %v1398
    %1517 = vmatpush1.msra.mxu0 %v1397
    %1518 = vmatprep.subr.mxu0 %v1402
    %1519 = vmatpush1.msra.mxu0 %v1401
    %1520 = vmatprep.subr.mxu0 %v1406
    %1521 = vmatpush1.msra.mxu0 %v1405
    %1522 = vmatprep.subr.mxu0 %v1410
    %1523 = vmatpush1.msra.mxu0 %v1409
    %1524 = vmatprep.subr.mxu0 %v1414
    %1525 = vmatpush1.msra.mxu0 %v1413
    %1526 = vmatprep.subr.mxu0 %v1418
    %1527 = vmatpush1.msra.mxu0 %v1417
    %1528 = vmatprep.subr.mxu0 %v1422
    %1529 = vmatpush1.msra.mxu0 %v1421
    %1530 = vmatprep.subr.mxu0 %v1426
    %1531 = vmatpush1.msra.mxu0 %v1425
    %1532 = vmatprep.subr.mxu0 %v1430
    %1533 = vmatpush1.msra.mxu0 %v1429
    %1534 = vmatprep.subr.mxu0 0.0
    %1535 = vmatpush1.msra.mxu0 0.0
    %1536 = vmatprep.subr.mxu0 0.0
    %1537 = vmatpush1.msra.mxu0 0.0
    %1538 = vmatprep.subr.mxu0 0.0
    %1539 = vmatpush1.msra.mxu0 0.0
    %1540 = vmatprep.subr.mxu0 0.0
    %1541 = vmatpush1.msra.mxu0 0.0
    %1542 = vmatprep.subr.mxu0 0.0
    %1543 = vmatpush1.msra.mxu0 0.0
    %1544 = vmatprep.subr.mxu0 0.0
    %1545 = vmatpush1.msra.mxu0 0.0
    %1546 = vmatprep.subr.mxu0 0.0
    %1547 = vmatpush1.msra.mxu0 0.0
    %1548 = vmatprep.subr.mxu0 0.0
    %1549 = vmatpush1.msra.mxu0 0.0
    %1550 = vmatprep.subr.mxu0 0.0
    %1551 = vmatpush1.msra.mxu0 0.0
    %1552 = vmatprep.subr.mxu0 0.0
    %1553 = vmatpush1.msra.mxu0 0.0
    %1554 = vmatprep.subr.mxu0 0.0
    %1555 = vmatpush1.msra.mxu0 0.0
    %1556 = vmatprep.subr.mxu0 0.0
    %1557 = vmatpush1.msra.mxu0 0.0
    %1558 = vmatprep.subr.mxu0 0.0
    %1559 = vmatpush1.msra.mxu0 0.0
    %1560 = vmatprep.subr.mxu0 0.0
    %1561 = vmatpush1.msra.mxu0 0.0
    %1562 = vmatprep.subr.mxu0 0.0
    %1563 = vmatpush1.msra.mxu0 0.0
    %1564 = vmatprep.subr.mxu0 0.0
    %1565 = vmatpush1.msra.mxu0 0.0
    %1566 = vmatprep.mubr.f32.mxu0 0.0
    %1567 = vmatmul.mubr.f32.gmra.mrb[0].mxu0 %v1357
    %v1568 = vpop.f32.mrb[0].mxu0
    %v1569 = vadd.f32 0.0, %v1568
    %v1570 = vpop.f32.mrb[0].mxu0
    %v1571 = vadd.f32 0.0, %v1570
    %1572 = vdwg.mxu0
    %v1573 = vadd.f32 %v1363, %v1498
    %v1574 = vadd.f32 %v1364, %v1500
    %v1575 = vadd.f32 %v1365, %v1569
    %v1576 = vadd.f32 %v1366, %v1571
    %v1577 = vxor.u32 %v1573, 2147483648
    %v1578 = vmul.f32 %v1577, 1.442695
    %v1579 = vpow.pop %v1578
    %v1580 = vadd.f32 %v1579, 1.0
    %v1581 = vrcp.pop %v1580
    %v1582 = vmul.f32 1.0, %v1581
    %v1583 = vxor.u32 %v1574, 2147483648
    %v1584 = vmul.f32 %v1583, 1.442695
    %v1585 = vpow.pop %v1584
    %v1586 = vadd.f32 %v1585, 1.0
    %v1587 = vrcp.pop %v1586
    %v1588 = vmul.f32 1.0, %v1587
    %v1589 = vtanh.pop %v1575
    %v1590 = vxor.u32 %v1576, 2147483648
    %v1591 = vmul.f32 %v1590, 1.442695
    %v1592 = vpow.pop %v1591
    %v1593 = vadd.f32 %v1592, 1.0
    %v1594 = vrcp.pop %v1593
    %v1595 = vmul.f32 1.0, %v1594
    %v1596 = vmul.f32 %v1588, %v1355
    %v1597 = vmul.f32 %v1582, %v1589
    %v1598 = vadd.f32 %v1596, %v1597
    %v1599 = vtanh.pop %v1598
    %v1600 = vmul.f32 %v1595, %v1599
    %s1601 = scalar_lea.vmem [#allocation3], 32
    %1602 = vst [vmem:[%s1601] sm:$0xff] %v1600
    %s1603 = smul.u32 5, 4
    %s1604 = smul.addr %s1603, 8
    %s1605 = scalar_lea.vmem [#allocation2], %s1604
    %v1606 = vld [vmem:[%s1605] sm:$0xff]
    %v1607 = vld [vmem:[%s1605 + $0x8] sm:$0xff]
    %v1608 = vld [vmem:[%s1605 + $0x10] sm:$0xff]
    %v1609 = vld [vmem:[%s1605 + $0x18] sm:$0xff]
    %v1610 = vld [vmem:[#allocation4] sm:$0xff]
    %v1611 = vld [vmem:[#allocation4 + $0x8] sm:$0xff]
    %v1612 = vld [vmem:[#allocation4 + $0x10] sm:$0xff]
    %v1613 = vld [vmem:[#allocation4 + $0x18] sm:$0xff]
    %v1614 = vld [vmem:[#allocation4 + $0x20] sm:$0xff]
    %v1615 = vld [vmem:[#allocation4 + $0x28] sm:$0xff]
    %v1616 = vld [vmem:[#allocation4 + $0x30] sm:$0xff]
    %v1617 = vld [vmem:[#allocation4 + $0x38] sm:$0xff]
    %v1618 = vld [vmem:[#allocation4 + $0x40] sm:$0xff]
    %v1619 = vld [vmem:[#allocation4 + $0x48] sm:$0xff]
    %v1620 = vld [vmem:[#allocation4 + $0x50] sm:$0xff]
    %v1621 = vld [vmem:[#allocation4 + $0x58] sm:$0xff]
    %v1622 = vld [vmem:[#allocation4 + $0x60] sm:$0xff]
    %v1623 = vld [vmem:[#allocation4 + $0x68] sm:$0xff]
    %v1624 = vld [vmem:[#allocation4 + $0x70] sm:$0xff]
    %v1625 = vld [vmem:[#allocation4 + $0x78] sm:$0xff]
    %v1626 = vld [vmem:[#allocation4 + $0x80] sm:$0xff]
    %v1627 = vld [vmem:[#allocation4 + $0x88] sm:$0xff]
    %v1628 = vld [vmem:[#allocation4 + $0x90] sm:$0xff]
    %v1629 = vld [vmem:[#allocation4 + $0x98] sm:$0xff]
    %v1630 = vld [vmem:[#allocation4 + $0xa0] sm:$0xff]
    %v1631 = vld [vmem:[#allocation4 + $0xa8] sm:$0xff]
    %v1632 = vld [vmem:[#allocation4 + $0xb0] sm:$0xff]
    %v1633 = vld [vmem:[#allocation4 + $0xb8] sm:$0xff]
    %v1634 = vld [vmem:[#allocation4 + $0xc0] sm:$0xff]
    %v1635 = vld [vmem:[#allocation4 + $0xc8] sm:$0xff]
    %v1636 = vld [vmem:[#allocation4 + $0xd0] sm:$0xff]
    %v1637 = vld [vmem:[#allocation4 + $0xd8] sm:$0xff]
    %v1638 = vld [vmem:[#allocation4 + $0xe0] sm:$0xff]
    %v1639 = vld [vmem:[#allocation4 + $0xe8] sm:$0xff]
    %v1640 = vld [vmem:[#allocation4 + $0xf0] sm:$0xff]
    %v1641 = vld [vmem:[#allocation4 + $0xf8] sm:$0xff]
    %v1642 = vld [vmem:[#allocation4 + $0x100] sm:$0xff]
    %v1643 = vld [vmem:[#allocation4 + $0x108] sm:$0xff]
    %v1644 = vld [vmem:[#allocation4 + $0x110] sm:$0xff]
    %v1645 = vld [vmem:[#allocation4 + $0x118] sm:$0xff]
    %v1646 = vld [vmem:[#allocation4 + $0x120] sm:$0xff]
    %v1647 = vld [vmem:[#allocation4 + $0x128] sm:$0xff]
    %v1648 = vld [vmem:[#allocation4 + $0x130] sm:$0xff]
    %v1649 = vld [vmem:[#allocation4 + $0x138] sm:$0xff]
    %v1650 = vld [vmem:[#allocation4 + $0x140] sm:$0xff]
    %v1651 = vld [vmem:[#allocation4 + $0x148] sm:$0xff]
    %v1652 = vld [vmem:[#allocation4 + $0x150] sm:$0xff]
    %v1653 = vld [vmem:[#allocation4 + $0x158] sm:$0xff]
    %v1654 = vld [vmem:[#allocation4 + $0x160] sm:$0xff]
    %v1655 = vld [vmem:[#allocation4 + $0x168] sm:$0xff]
    %v1656 = vld [vmem:[#allocation4 + $0x170] sm:$0xff]
    %v1657 = vld [vmem:[#allocation4 + $0x178] sm:$0xff]
    %v1658 = vld [vmem:[#allocation4 + $0x180] sm:$0xff]
    %v1659 = vld [vmem:[#allocation4 + $0x188] sm:$0xff]
    %v1660 = vld [vmem:[#allocation4 + $0x190] sm:$0xff]
    %v1661 = vld [vmem:[#allocation4 + $0x198] sm:$0xff]
    %v1662 = vld [vmem:[#allocation4 + $0x1a0] sm:$0xff]
    %v1663 = vld [vmem:[#allocation4 + $0x1a8] sm:$0xff]
    %v1664 = vld [vmem:[#allocation4 + $0x1b0] sm:$0xff]
    %v1665 = vld [vmem:[#allocation4 + $0x1b8] sm:$0xff]
    %v1666 = vld [vmem:[#allocation4 + $0x1c0] sm:$0xff]
    %v1667 = vld [vmem:[#allocation4 + $0x1c8] sm:$0xff]
    %v1668 = vld [vmem:[#allocation4 + $0x1d0] sm:$0xff]
    %v1669 = vld [vmem:[#allocation4 + $0x1d8] sm:$0xff]
    %v1670 = vld [vmem:[#allocation4 + $0x1e0] sm:$0xff]
    %v1671 = vld [vmem:[#allocation4 + $0x1e8] sm:$0xff]
    %v1672 = vld [vmem:[#allocation4 + $0x1f0] sm:$0xff]
    %v1673 = vld [vmem:[#allocation4 + $0x1f8] sm:$0xff]
    %1674 = vmatprep.subr.mxu0 %v1611
    %1675 = vmatpush1.msra.mxu0 %v1610
    %1676 = vmatprep.subr.mxu0 %v1615
    %1677 = vmatpush1.msra.mxu0 %v1614
    %1678 = vmatprep.subr.mxu0 %v1619
    %1679 = vmatpush1.msra.mxu0 %v1618
    %1680 = vmatprep.subr.mxu0 %v1623
    %1681 = vmatpush1.msra.mxu0 %v1622
    %1682 = vmatprep.subr.mxu0 %v1627
    %1683 = vmatpush1.msra.mxu0 %v1626
    %1684 = vmatprep.subr.mxu0 %v1631
    %1685 = vmatpush1.msra.mxu0 %v1630
    %1686 = vmatprep.subr.mxu0 %v1635
    %1687 = vmatpush1.msra.mxu0 %v1634
    %1688 = vmatprep.subr.mxu0 %v1639
    %1689 = vmatpush1.msra.mxu0 %v1638
    %1690 = vmatprep.subr.mxu0 %v1643
    %1691 = vmatpush1.msra.mxu0 %v1642
    %1692 = vmatprep.subr.mxu0 %v1647
    %1693 = vmatpush1.msra.mxu0 %v1646
    %1694 = vmatprep.subr.mxu0 %v1651
    %1695 = vmatpush1.msra.mxu0 %v1650
    %1696 = vmatprep.subr.mxu0 %v1655
    %1697 = vmatpush1.msra.mxu0 %v1654
    %1698 = vmatprep.subr.mxu0 %v1659
    %1699 = vmatpush1.msra.mxu0 %v1658
    %1700 = vmatprep.subr.mxu0 %v1663
    %1701 = vmatpush1.msra.mxu0 %v1662
    %1702 = vmatprep.subr.mxu0 %v1667
    %1703 = vmatpush1.msra.mxu0 %v1666
    %1704 = vmatprep.subr.mxu0 %v1671
    %1705 = vmatpush1.msra.mxu0 %v1670
    %1706 = vmatprep.subr.mxu0 0.0
    %1707 = vmatpush1.msra.mxu0 0.0
    %1708 = vmatprep.subr.mxu0 0.0
    %1709 = vmatpush1.msra.mxu0 0.0
    %1710 = vmatprep.subr.mxu0 0.0
    %1711 = vmatpush1.msra.mxu0 0.0
    %1712 = vmatprep.subr.mxu0 0.0
    %1713 = vmatpush1.msra.mxu0 0.0
    %1714 = vmatprep.subr.mxu0 0.0
    %1715 = vmatpush1.msra.mxu0 0.0
    %1716 = vmatprep.subr.mxu0 0.0
    %1717 = vmatpush1.msra.mxu0 0.0
    %1718 = vmatprep.subr.mxu0 0.0
    %1719 = vmatpush1.msra.mxu0 0.0
    %1720 = vmatprep.subr.mxu0 0.0
    %1721 = vmatpush1.msra.mxu0 0.0
    %1722 = vmatprep.subr.mxu0 0.0
    %1723 = vmatpush1.msra.mxu0 0.0
    %1724 = vmatprep.subr.mxu0 0.0
    %1725 = vmatpush1.msra.mxu0 0.0
    %1726 = vmatprep.subr.mxu0 0.0
    %1727 = vmatpush1.msra.mxu0 0.0
    %1728 = vmatprep.subr.mxu0 0.0
    %1729 = vmatpush1.msra.mxu0 0.0
    %1730 = vmatprep.subr.mxu0 0.0
    %1731 = vmatpush1.msra.mxu0 0.0
    %1732 = vmatprep.subr.mxu0 0.0
    %1733 = vmatpush1.msra.mxu0 0.0
    %1734 = vmatprep.subr.mxu0 0.0
    %1735 = vmatpush1.msra.mxu0 0.0
    %1736 = vmatprep.subr.mxu0 0.0
    %1737 = vmatpush1.msra.mxu0 0.0
    %1738 = vmatprep.mubr.f32.mxu0 0.0
    %1739 = vmatmul.mubr.f32.gmra.mrb[0].mxu0 %v1600
    %v1740 = vpop.f32.mrb[0].mxu0
    %v1741 = vadd.f32 0.0, %v1740
    %v1742 = vpop.f32.mrb[0].mxu0
    %v1743 = vadd.f32 0.0, %v1742
    %1744 = vdwg.mxu0
    %1745 = vmatprep.subr.mxu0 %v1613
    %1746 = vmatpush1.msra.mxu0 %v1612
    %1747 = vmatprep.subr.mxu0 %v1617
    %1748 = vmatpush1.msra.mxu0 %v1616
    %1749 = vmatprep.subr.mxu0 %v1621
    %1750 = vmatpush1.msra.mxu0 %v1620
    %1751 = vmatprep.subr.mxu0 %v1625
    %1752 = vmatpush1.msra.mxu0 %v1624
    %1753 = vmatprep.subr.mxu0 %v1629
    %1754 = vmatpush1.msra.mxu0 %v1628
    %1755 = vmatprep.subr.mxu0 %v1633
    %1756 = vmatpush1.msra.mxu0 %v1632
    %1757 = vmatprep.subr.mxu0 %v1637
    %1758 = vmatpush1.msra.mxu0 %v1636
    %1759 = vmatprep.subr.mxu0 %v1641
    %1760 = vmatpush1.msra.mxu0 %v1640
    %1761 = vmatprep.subr.mxu0 %v1645
    %1762 = vmatpush1.msra.mxu0 %v1644
    %1763 = vmatprep.subr.mxu0 %v1649
    %1764 = vmatpush1.msra.mxu0 %v1648
    %1765 = vmatprep.subr.mxu0 %v1653
    %1766 = vmatpush1.msra.mxu0 %v1652
    %1767 = vmatprep.subr.mxu0 %v1657
    %1768 = vmatpush1.msra.mxu0 %v1656
    %1769 = vmatprep.subr.mxu0 %v1661
    %1770 = vmatpush1.msra.mxu0 %v1660
    %1771 = vmatprep.subr.mxu0 %v1665
    %1772 = vmatpush1.msra.mxu0 %v1664
    %1773 = vmatprep.subr.mxu0 %v1669
    %1774 = vmatpush1.msra.mxu0 %v1668
    %1775 = vmatprep.subr.mxu0 %v1673
    %1776 = vmatpush1.msra.mxu0 %v1672
    %1777 = vmatprep.subr.mxu0 0.0
    %1778 = vmatpush1.msra.mxu0 0.0
    %1779 = vmatprep.subr.mxu0 0.0
    %1780 = vmatpush1.msra.mxu0 0.0
    %1781 = vmatprep.subr.mxu0 0.0
    %1782 = vmatpush1.msra.mxu0 0.0
    %1783 = vmatprep.subr.mxu0 0.0
    %1784 = vmatpush1.msra.mxu0 0.0
    %1785 = vmatprep.subr.mxu0 0.0
    %1786 = vmatpush1.msra.mxu0 0.0
    %1787 = vmatprep.subr.mxu0 0.0
    %1788 = vmatpush1.msra.mxu0 0.0
    %1789 = vmatprep.subr.mxu0 0.0
    %1790 = vmatpush1.msra.mxu0 0.0
    %1791 = vmatprep.subr.mxu0 0.0
    %1792 = vmatpush1.msra.mxu0 0.0
    %1793 = vmatprep.subr.mxu0 0.0
    %1794 = vmatpush1.msra.mxu0 0.0
    %1795 = vmatprep.subr.mxu0 0.0
    %1796 = vmatpush1.msra.mxu0 0.0
    %1797 = vmatprep.subr.mxu0 0.0
    %1798 = vmatpush1.msra.mxu0 0.0
    %1799 = vmatprep.subr.mxu0 0.0
    %1800 = vmatpush1.msra.mxu0 0.0
    %1801 = vmatprep.subr.mxu0 0.0
    %1802 = vmatpush1.msra.mxu0 0.0
    %1803 = vmatprep.subr.mxu0 0.0
    %1804 = vmatpush1.msra.mxu0 0.0
    %1805 = vmatprep.subr.mxu0 0.0
    %1806 = vmatpush1.msra.mxu0 0.0
    %1807 = vmatprep.subr.mxu0 0.0
    %1808 = vmatpush1.msra.mxu0 0.0
    %1809 = vmatprep.mubr.f32.mxu0 0.0
    %1810 = vmatmul.mubr.f32.gmra.mrb[0].mxu0 %v1600
    %v1811 = vpop.f32.mrb[0].mxu0
    %v1812 = vadd.f32 0.0, %v1811
    %v1813 = vpop.f32.mrb[0].mxu0
    %v1814 = vadd.f32 0.0, %v1813
    %1815 = vdwg.mxu0
    %v1816 = vadd.f32 %v1606, %v1741
    %v1817 = vadd.f32 %v1607, %v1743
    %v1818 = vadd.f32 %v1608, %v1812
    %v1819 = vadd.f32 %v1609, %v1814
    %v1820 = vxor.u32 %v1816, 2147483648
    %v1821 = vmul.f32 %v1820, 1.442695
    %v1822 = vpow.pop %v1821
    %v1823 = vadd.f32 %v1822, 1.0
    %v1824 = vrcp.pop %v1823
    %v1825 = vmul.f32 1.0, %v1824
    %v1826 = vxor.u32 %v1817, 2147483648
    %v1827 = vmul.f32 %v1826, 1.442695
    %v1828 = vpow.pop %v1827
    %v1829 = vadd.f32 %v1828, 1.0
    %v1830 = vrcp.pop %v1829
    %v1831 = vmul.f32 1.0, %v1830
    %v1832 = vtanh.pop %v1818
    %v1833 = vxor.u32 %v1819, 2147483648
    %v1834 = vmul.f32 %v1833, 1.442695
    %v1835 = vpow.pop %v1834
    %v1836 = vadd.f32 %v1835, 1.0
    %v1837 = vrcp.pop %v1836
    %v1838 = vmul.f32 1.0, %v1837
    %v1839 = vmul.f32 %v1831, %v1598
    %v1840 = vmul.f32 %v1825, %v1832
    %v1841 = vadd.f32 %v1839, %v1840
    %v1842 = vtanh.pop %v1841
    %v1843 = vmul.f32 %v1838, %v1842
    %s1844 = scalar_lea.vmem [#allocation3], 40
    %1845 = vst [vmem:[%s1844] sm:$0xff] %v1843
    %s1846 = smul.u32 6, 4
    %s1847 = smul.addr %s1846, 8
    %s1848 = scalar_lea.vmem [#allocation2], %s1847
    %v1849 = vld [vmem:[%s1848] sm:$0xff]
    %v1850 = vld [vmem:[%s1848 + $0x8] sm:$0xff]
    %v1851 = vld [vmem:[%s1848 + $0x10] sm:$0xff]
    %v1852 = vld [vmem:[%s1848 + $0x18] sm:$0xff]
    %v1853 = vld [vmem:[#allocation4] sm:$0xff]
    %v1854 = vld [vmem:[#allocation4 + $0x8] sm:$0xff]
    %v1855 = vld [vmem:[#allocation4 + $0x10] sm:$0xff]
    %v1856 = vld [vmem:[#allocation4 + $0x18] sm:$0xff]
    %v1857 = vld [vmem:[#allocation4 + $0x20] sm:$0xff]
    %v1858 = vld [vmem:[#allocation4 + $0x28] sm:$0xff]
    %v1859 = vld [vmem:[#allocation4 + $0x30] sm:$0xff]
    %v1860 = vld [vmem:[#allocation4 + $0x38] sm:$0xff]
    %v1861 = vld [vmem:[#allocation4 + $0x40] sm:$0xff]
    %v1862 = vld [vmem:[#allocation4 + $0x48] sm:$0xff]
    %v1863 = vld [vmem:[#allocation4 + $0x50] sm:$0xff]
    %v1864 = vld [vmem:[#allocation4 + $0x58] sm:$0xff]
    %v1865 = vld [vmem:[#allocation4 + $0x60] sm:$0xff]
    %v1866 = vld [vmem:[#allocation4 + $0x68] sm:$0xff]
    %v1867 = vld [vmem:[#allocation4 + $0x70] sm:$0xff]
    %v1868 = vld [vmem:[#allocation4 + $0x78] sm:$0xff]
    %v1869 = vld [vmem:[#allocation4 + $0x80] sm:$0xff]
    %v1870 = vld [vmem:[#allocation4 + $0x88] sm:$0xff]
    %v1871 = vld [vmem:[#allocation4 + $0x90] sm:$0xff]
    %v1872 = vld [vmem:[#allocation4 + $0x98] sm:$0xff]
    %v1873 = vld [vmem:[#allocation4 + $0xa0] sm:$0xff]
    %v1874 = vld [vmem:[#allocation4 + $0xa8] sm:$0xff]
    %v1875 = vld [vmem:[#allocation4 + $0xb0] sm:$0xff]
    %v1876 = vld [vmem:[#allocation4 + $0xb8] sm:$0xff]
    %v1877 = vld [vmem:[#allocation4 + $0xc0] sm:$0xff]
    %v1878 = vld [vmem:[#allocation4 + $0xc8] sm:$0xff]
    %v1879 = vld [vmem:[#allocation4 + $0xd0] sm:$0xff]
    %v1880 = vld [vmem:[#allocation4 + $0xd8] sm:$0xff]
    %v1881 = vld [vmem:[#allocation4 + $0xe0] sm:$0xff]
    %v1882 = vld [vmem:[#allocation4 + $0xe8] sm:$0xff]
    %v1883 = vld [vmem:[#allocation4 + $0xf0] sm:$0xff]
    %v1884 = vld [vmem:[#allocation4 + $0xf8] sm:$0xff]
    %v1885 = vld [vmem:[#allocation4 + $0x100] sm:$0xff]
    %v1886 = vld [vmem:[#allocation4 + $0x108] sm:$0xff]
    %v1887 = vld [vmem:[#allocation4 + $0x110] sm:$0xff]
    %v1888 = vld [vmem:[#allocation4 + $0x118] sm:$0xff]
    %v1889 = vld [vmem:[#allocation4 + $0x120] sm:$0xff]
    %v1890 = vld [vmem:[#allocation4 + $0x128] sm:$0xff]
    %v1891 = vld [vmem:[#allocation4 + $0x130] sm:$0xff]
    %v1892 = vld [vmem:[#allocation4 + $0x138] sm:$0xff]
    %v1893 = vld [vmem:[#allocation4 + $0x140] sm:$0xff]
    %v1894 = vld [vmem:[#allocation4 + $0x148] sm:$0xff]
    %v1895 = vld [vmem:[#allocation4 + $0x150] sm:$0xff]
    %v1896 = vld [vmem:[#allocation4 + $0x158] sm:$0xff]
    %v1897 = vld [vmem:[#allocation4 + $0x160] sm:$0xff]
    %v1898 = vld [vmem:[#allocation4 + $0x168] sm:$0xff]
    %v1899 = vld [vmem:[#allocation4 + $0x170] sm:$0xff]
    %v1900 = vld [vmem:[#allocation4 + $0x178] sm:$0xff]
    %v1901 = vld [vmem:[#allocation4 + $0x180] sm:$0xff]
    %v1902 = vld [vmem:[#allocation4 + $0x188] sm:$0xff]
    %v1903 = vld [vmem:[#allocation4 + $0x190] sm:$0xff]
    %v1904 = vld [vmem:[#allocation4 + $0x198] sm:$0xff]
    %v1905 = vld [vmem:[#allocation4 + $0x1a0] sm:$0xff]
    %v1906 = vld [vmem:[#allocation4 + $0x1a8] sm:$0xff]
    %v1907 = vld [vmem:[#allocation4 + $0x1b0] sm:$0xff]
    %v1908 = vld [vmem:[#allocation4 + $0x1b8] sm:$0xff]
    %v1909 = vld [vmem:[#allocation4 + $0x1c0] sm:$0xff]
    %v1910 = vld [vmem:[#allocation4 + $0x1c8] sm:$0xff]
    %v1911 = vld [vmem:[#allocation4 + $0x1d0] sm:$0xff]
    %v1912 = vld [vmem:[#allocation4 + $0x1d8] sm:$0xff]
    %v1913 = vld [vmem:[#allocation4 + $0x1e0] sm:$0xff]
    %v1914 = vld [vmem:[#allocation4 + $0x1e8] sm:$0xff]
    %v1915 = vld [vmem:[#allocation4 + $0x1f0] sm:$0xff]
    %v1916 = vld [vmem:[#allocation4 + $0x1f8] sm:$0xff]
    %1917 = vmatprep.subr.mxu0 %v1854
    %1918 = vmatpush1.msra.mxu0 %v1853
    %1919 = vmatprep.subr.mxu0 %v1858
    %1920 = vmatpush1.msra.mxu0 %v1857
    %1921 = vmatprep.subr.mxu0 %v1862
    %1922 = vmatpush1.msra.mxu0 %v1861
    %1923 = vmatprep.subr.mxu0 %v1866
    %1924 = vmatpush1.msra.mxu0 %v1865
    %1925 = vmatprep.subr.mxu0 %v1870
    %1926 = vmatpush1.msra.mxu0 %v1869
    %1927 = vmatprep.subr.mxu0 %v1874
    %1928 = vmatpush1.msra.mxu0 %v1873
    %1929 = vmatprep.subr.mxu0 %v1878
    %1930 = vmatpush1.msra.mxu0 %v1877
    %1931 = vmatprep.subr.mxu0 %v1882
    %1932 = vmatpush1.msra.mxu0 %v1881
    %1933 = vmatprep.subr.mxu0 %v1886
    %1934 = vmatpush1.msra.mxu0 %v1885
    %1935 = vmatprep.subr.mxu0 %v1890
    %1936 = vmatpush1.msra.mxu0 %v1889
    %1937 = vmatprep.subr.mxu0 %v1894
    %1938 = vmatpush1.msra.mxu0 %v1893
    %1939 = vmatprep.subr.mxu0 %v1898
    %1940 = vmatpush1.msra.mxu0 %v1897
    %1941 = vmatprep.subr.mxu0 %v1902
    %1942 = vmatpush1.msra.mxu0 %v1901
    %1943 = vmatprep.subr.mxu0 %v1906
    %1944 = vmatpush1.msra.mxu0 %v1905
    %1945 = vmatprep.subr.mxu0 %v1910
    %1946 = vmatpush1.msra.mxu0 %v1909
    %1947 = vmatprep.subr.mxu0 %v1914
    %1948 = vmatpush1.msra.mxu0 %v1913
    %1949 = vmatprep.subr.mxu0 0.0
    %1950 = vmatpush1.msra.mxu0 0.0
    %1951 = vmatprep.subr.mxu0 0.0
    %1952 = vmatpush1.msra.mxu0 0.0
    %1953 = vmatprep.subr.mxu0 0.0
    %1954 = vmatpush1.msra.mxu0 0.0
    %1955 = vmatprep.subr.mxu0 0.0
    %1956 = vmatpush1.msra.mxu0 0.0
    %1957 = vmatprep.subr.mxu0 0.0
    %1958 = vmatpush1.msra.mxu0 0.0
    %1959 = vmatprep.subr.mxu0 0.0
    %1960 = vmatpush1.msra.mxu0 0.0
    %1961 = vmatprep.subr.mxu0 0.0
    %1962 = vmatpush1.msra.mxu0 0.0
    %1963 = vmatprep.subr.mxu0 0.0
    %1964 = vmatpush1.msra.mxu0 0.0
    %1965 = vmatprep.subr.mxu0 0.0
    %1966 = vmatpush1.msra.mxu0 0.0
    %1967 = vmatprep.subr.mxu0 0.0
    %1968 = vmatpush1.msra.mxu0 0.0
    %1969 = vmatprep.subr.mxu0 0.0
    %1970 = vmatpush1.msra.mxu0 0.0
    %1971 = vmatprep.subr.mxu0 0.0
    %1972 = vmatpush1.msra.mxu0 0.0
    %1973 = vmatprep.subr.mxu0 0.0
    %1974 = vmatpush1.msra.mxu0 0.0
    %1975 = vmatprep.subr.mxu0 0.0
    %1976 = vmatpush1.msra.mxu0 0.0
    %1977 = vmatprep.subr.mxu0 0.0
    %1978 = vmatpush1.msra.mxu0 0.0
    %1979 = vmatprep.subr.mxu0 0.0
    %1980 = vmatpush1.msra.mxu0 0.0
    %1981 = vmatprep.mubr.f32.mxu0 0.0
    %1982 = vmatmul.mubr.f32.gmra.mrb[0].mxu0 %v1843
    %v1983 = vpop.f32.mrb[0].mxu0
    %v1984 = vadd.f32 0.0, %v1983
    %v1985 = vpop.f32.mrb[0].mxu0
    %v1986 = vadd.f32 0.0, %v1985
    %1987 = vdwg.mxu0
    %1988 = vmatprep.subr.mxu0 %v1856
    %1989 = vmatpush1.msra.mxu0 %v1855
    %1990 = vmatprep.subr.mxu0 %v1860
    %1991 = vmatpush1.msra.mxu0 %v1859
    %1992 = vmatprep.subr.mxu0 %v1864
    %1993 = vmatpush1.msra.mxu0 %v1863
    %1994 = vmatprep.subr.mxu0 %v1868
    %1995 = vmatpush1.msra.mxu0 %v1867
    %1996 = vmatprep.subr.mxu0 %v1872
    %1997 = vmatpush1.msra.mxu0 %v1871
    %1998 = vmatprep.subr.mxu0 %v1876
    %1999 = vmatpush1.msra.mxu0 %v1875
    %2000 = vmatprep.subr.mxu0 %v1880
    %2001 = vmatpush1.msra.mxu0 %v1879
    %2002 = vmatprep.subr.mxu0 %v1884
    %2003 = vmatpush1.msra.mxu0 %v1883
    %2004 = vmatprep.subr.mxu0 %v1888
    %2005 = vmatpush1.msra.mxu0 %v1887
    %2006 = vmatprep.subr.mxu0 %v1892
    %2007 = vmatpush1.msra.mxu0 %v1891
    %2008 = vmatprep.subr.mxu0 %v1896
    %2009 = vmatpush1.msra.mxu0 %v1895
    %2010 = vmatprep.subr.mxu0 %v1900
    %2011 = vmatpush1.msra.mxu0 %v1899
    %2012 = vmatprep.subr.mxu0 %v1904
    %2013 = vmatpush1.msra.mxu0 %v1903
    %2014 = vmatprep.subr.mxu0 %v1908
    %2015 = vmatpush1.msra.mxu0 %v1907
    %2016 = vmatprep.subr.mxu0 %v1912
    %2017 = vmatpush1.msra.mxu0 %v1911
    %2018 = vmatprep.subr.mxu0 %v1916
    %2019 = vmatpush1.msra.mxu0 %v1915
    %2020 = vmatprep.subr.mxu0 0.0
    %2021 = vmatpush1.msra.mxu0 0.0
    %2022 = vmatprep.subr.mxu0 0.0
    %2023 = vmatpush1.msra.mxu0 0.0
    %2024 = vmatprep.subr.mxu0 0.0
    %2025 = vmatpush1.msra.mxu0 0.0
    %2026 = vmatprep.subr.mxu0 0.0
    %2027 = vmatpush1.msra.mxu0 0.0
    %2028 = vmatprep.subr.mxu0 0.0
    %2029 = vmatpush1.msra.mxu0 0.0
    %2030 = vmatprep.subr.mxu0 0.0
    %2031 = vmatpush1.msra.mxu0 0.0
    %2032 = vmatprep.subr.mxu0 0.0
    %2033 = vmatpush1.msra.mxu0 0.0
    %2034 = vmatprep.subr.mxu0 0.0
    %2035 = vmatpush1.msra.mxu0 0.0
    %2036 = vmatprep.subr.mxu0 0.0
    %2037 = vmatpush1.msra.mxu0 0.0
    %2038 = vmatprep.subr.mxu0 0.0
    %2039 = vmatpush1.msra.mxu0 0.0
    %2040 = vmatprep.subr.mxu0 0.0
    %2041 = vmatpush1.msra.mxu0 0.0
    %2042 = vmatprep.subr.mxu0 0.0
    %2043 = vmatpush1.msra.mxu0 0.0
    %2044 = vmatprep.subr.mxu0 0.0
    %2045 = vmatpush1.msra.mxu0 0.0
    %2046 = vmatprep.subr.mxu0 0.0
    %2047 = vmatpush1.msra.mxu0 0.0
    %2048 = vmatprep.subr.mxu0 0.0
    %2049 = vmatpush1.msra.mxu0 0.0
    %2050 = vmatprep.subr.mxu0 0.0
    %2051 = vmatpush1.msra.mxu0 0.0
    %2052 = vmatprep.mubr.f32.mxu0 0.0
    %2053 = vmatmul.mubr.f32.gmra.mrb[0].mxu0 %v1843
    %v2054 = vpop.f32.mrb[0].mxu0
    %v2055 = vadd.f32 0.0, %v2054
    %v2056 = vpop.f32.mrb[0].mxu0
    %v2057 = vadd.f32 0.0, %v2056
    %2058 = vdwg.mxu0
    %v2059 = vadd.f32 %v1849, %v1984
    %v2060 = vadd.f32 %v1850, %v1986
    %v2061 = vadd.f32 %v1851, %v2055
    %v2062 = vadd.f32 %v1852, %v2057
    %v2063 = vxor.u32 %v2059, 2147483648
    %v2064 = vmul.f32 %v2063, 1.442695
    %v2065 = vpow.pop %v2064
    %v2066 = vadd.f32 %v2065, 1.0
    %v2067 = vrcp.pop %v2066
    %v2068 = vmul.f32 1.0, %v2067
    %v2069 = vxor.u32 %v2060, 2147483648
    %v2070 = vmul.f32 %v2069, 1.442695
    %v2071 = vpow.pop %v2070
    %v2072 = vadd.f32 %v2071, 1.0
    %v2073 = vrcp.pop %v2072
    %v2074 = vmul.f32 1.0, %v2073
    %v2075 = vtanh.pop %v2061
    %v2076 = vxor.u32 %v2062, 2147483648
    %v2077 = vmul.f32 %v2076, 1.442695
    %v2078 = vpow.pop %v2077
    %v2079 = vadd.f32 %v2078, 1.0
    %v2080 = vrcp.pop %v2079
    %v2081 = vmul.f32 1.0, %v2080
    %v2082 = vmul.f32 %v2074, %v1841
    %v2083 = vmul.f32 %v2068, %v2075
    %v2084 = vadd.f32 %v2082, %v2083
    %v2085 = vtanh.pop %v2084
    %v2086 = vmul.f32 %v2081, %v2085
    %s2087 = scalar_lea.vmem [#allocation3], 48
    %2088 = vst [vmem:[%s2087] sm:$0xff] %v2086
    %s2089 = smul.u32 7, 4
    %s2090 = smul.addr %s2089, 8
    %s2091 = scalar_lea.vmem [#allocation2], %s2090
    %v2092 = vld [vmem:[%s2091] sm:$0xff]
    %v2093 = vld [vmem:[%s2091 + $0x8] sm:$0xff]
    %v2094 = vld [vmem:[%s2091 + $0x10] sm:$0xff]
    %v2095 = vld [vmem:[%s2091 + $0x18] sm:$0xff]
    %v2096 = vld [vmem:[#allocation4] sm:$0xff]
    %v2097 = vld [vmem:[#allocation4 + $0x8] sm:$0xff]
    %v2098 = vld [vmem:[#allocation4 + $0x10] sm:$0xff]
    %v2099 = vld [vmem:[#allocation4 + $0x18] sm:$0xff]
    %v2100 = vld [vmem:[#allocation4 + $0x20] sm:$0xff]
    %v2101 = vld [vmem:[#allocation4 + $0x28] sm:$0xff]
    %v2102 = vld [vmem:[#allocation4 + $0x30] sm:$0xff]
    %v2103 = vld [vmem:[#allocation4 + $0x38] sm:$0xff]
    %v2104 = vld [vmem:[#allocation4 + $0x40] sm:$0xff]
    %v2105 = vld [vmem:[#allocation4 + $0x48] sm:$0xff]
    %v2106 = vld [vmem:[#allocation4 + $0x50] sm:$0xff]
    %v2107 = vld [vmem:[#allocation4 + $0x58] sm:$0xff]
    %v2108 = vld [vmem:[#allocation4 + $0x60] sm:$0xff]
    %v2109 = vld [vmem:[#allocation4 + $0x68] sm:$0xff]
    %v2110 = vld [vmem:[#allocation4 + $0x70] sm:$0xff]
    %v2111 = vld [vmem:[#allocation4 + $0x78] sm:$0xff]
    %v2112 = vld [vmem:[#allocation4 + $0x80] sm:$0xff]
    %v2113 = vld [vmem:[#allocation4 + $0x88] sm:$0xff]
    %v2114 = vld [vmem:[#allocation4 + $0x90] sm:$0xff]
    %v2115 = vld [vmem:[#allocation4 + $0x98] sm:$0xff]
    %v2116 = vld [vmem:[#allocation4 + $0xa0] sm:$0xff]
    %v2117 = vld [vmem:[#allocation4 + $0xa8] sm:$0xff]
    %v2118 = vld [vmem:[#allocation4 + $0xb0] sm:$0xff]
    %v2119 = vld [vmem:[#allocation4 + $0xb8] sm:$0xff]
    %v2120 = vld [vmem:[#allocation4 + $0xc0] sm:$0xff]
    %v2121 = vld [vmem:[#allocation4 + $0xc8] sm:$0xff]
    %v2122 = vld [vmem:[#allocation4 + $0xd0] sm:$0xff]
    %v2123 = vld [vmem:[#allocation4 + $0xd8] sm:$0xff]
    %v2124 = vld [vmem:[#allocation4 + $0xe0] sm:$0xff]
    %v2125 = vld [vmem:[#allocation4 + $0xe8] sm:$0xff]
    %v2126 = vld [vmem:[#allocation4 + $0xf0] sm:$0xff]
    %v2127 = vld [vmem:[#allocation4 + $0xf8] sm:$0xff]
    %v2128 = vld [vmem:[#allocation4 + $0x100] sm:$0xff]
    %v2129 = vld [vmem:[#allocation4 + $0x108] sm:$0xff]
    %v2130 = vld [vmem:[#allocation4 + $0x110] sm:$0xff]
    %v2131 = vld [vmem:[#allocation4 + $0x118] sm:$0xff]
    %v2132 = vld [vmem:[#allocation4 + $0x120] sm:$0xff]
    %v2133 = vld [vmem:[#allocation4 + $0x128] sm:$0xff]
    %v2134 = vld [vmem:[#allocation4 + $0x130] sm:$0xff]
    %v2135 = vld [vmem:[#allocation4 + $0x138] sm:$0xff]
    %v2136 = vld [vmem:[#allocation4 + $0x140] sm:$0xff]
    %v2137 = vld [vmem:[#allocation4 + $0x148] sm:$0xff]
    %v2138 = vld [vmem:[#allocation4 + $0x150] sm:$0xff]
    %v2139 = vld [vmem:[#allocation4 + $0x158] sm:$0xff]
    %v2140 = vld [vmem:[#allocation4 + $0x160] sm:$0xff]
    %v2141 = vld [vmem:[#allocation4 + $0x168] sm:$0xff]
    %v2142 = vld [vmem:[#allocation4 + $0x170] sm:$0xff]
    %v2143 = vld [vmem:[#allocation4 + $0x178] sm:$0xff]
    %v2144 = vld [vmem:[#allocation4 + $0x180] sm:$0xff]
    %v2145 = vld [vmem:[#allocation4 + $0x188] sm:$0xff]
    %v2146 = vld [vmem:[#allocation4 + $0x190] sm:$0xff]
    %v2147 = vld [vmem:[#allocation4 + $0x198] sm:$0xff]
    %v2148 = vld [vmem:[#allocation4 + $0x1a0] sm:$0xff]
    %v2149 = vld [vmem:[#allocation4 + $0x1a8] sm:$0xff]
    %v2150 = vld [vmem:[#allocation4 + $0x1b0] sm:$0xff]
    %v2151 = vld [vmem:[#allocation4 + $0x1b8] sm:$0xff]
    %v2152 = vld [vmem:[#allocation4 + $0x1c0] sm:$0xff]
    %v2153 = vld [vmem:[#allocation4 + $0x1c8] sm:$0xff]
    %v2154 = vld [vmem:[#allocation4 + $0x1d0] sm:$0xff]
    %v2155 = vld [vmem:[#allocation4 + $0x1d8] sm:$0xff]
    %v2156 = vld [vmem:[#allocation4 + $0x1e0] sm:$0xff]
    %v2157 = vld [vmem:[#allocation4 + $0x1e8] sm:$0xff]
    %v2158 = vld [vmem:[#allocation4 + $0x1f0] sm:$0xff]
    %v2159 = vld [vmem:[#allocation4 + $0x1f8] sm:$0xff]
    %2160 = vmatprep.subr.mxu0 %v2097
    %2161 = vmatpush1.msra.mxu0 %v2096
    %2162 = vmatprep.subr.mxu0 %v2101
    %2163 = vmatpush1.msra.mxu0 %v2100
    %2164 = vmatprep.subr.mxu0 %v2105
    %2165 = vmatpush1.msra.mxu0 %v2104
    %2166 = vmatprep.subr.mxu0 %v2109
    %2167 = vmatpush1.msra.mxu0 %v2108
    %2168 = vmatprep.subr.mxu0 %v2113
    %2169 = vmatpush1.msra.mxu0 %v2112
    %2170 = vmatprep.subr.mxu0 %v2117
    %2171 = vmatpush1.msra.mxu0 %v2116
    %2172 = vmatprep.subr.mxu0 %v2121
    %2173 = vmatpush1.msra.mxu0 %v2120
    %2174 = vmatprep.subr.mxu0 %v2125
    %2175 = vmatpush1.msra.mxu0 %v2124
    %2176 = vmatprep.subr.mxu0 %v2129
    %2177 = vmatpush1.msra.mxu0 %v2128
    %2178 = vmatprep.subr.mxu0 %v2133
    %2179 = vmatpush1.msra.mxu0 %v2132
    %2180 = vmatprep.subr.mxu0 %v2137
    %2181 = vmatpush1.msra.mxu0 %v2136
    %2182 = vmatprep.subr.mxu0 %v2141
    %2183 = vmatpush1.msra.mxu0 %v2140
    %2184 = vmatprep.subr.mxu0 %v2145
    %2185 = vmatpush1.msra.mxu0 %v2144
    %2186 = vmatprep.subr.mxu0 %v2149
    %2187 = vmatpush1.msra.mxu0 %v2148
    %2188 = vmatprep.subr.mxu0 %v2153
    %2189 = vmatpush1.msra.mxu0 %v2152
    %2190 = vmatprep.subr.mxu0 %v2157
    %2191 = vmatpush1.msra.mxu0 %v2156
    %2192 = vmatprep.subr.mxu0 0.0
    %2193 = vmatpush1.msra.mxu0 0.0
    %2194 = vmatprep.subr.mxu0 0.0
    %2195 = vmatpush1.msra.mxu0 0.0
    %2196 = vmatprep.subr.mxu0 0.0
    %2197 = vmatpush1.msra.mxu0 0.0
    %2198 = vmatprep.subr.mxu0 0.0
    %2199 = vmatpush1.msra.mxu0 0.0
    %2200 = vmatprep.subr.mxu0 0.0
    %2201 = vmatpush1.msra.mxu0 0.0
    %2202 = vmatprep.subr.mxu0 0.0
    %2203 = vmatpush1.msra.mxu0 0.0
    %2204 = vmatprep.subr.mxu0 0.0
    %2205 = vmatpush1.msra.mxu0 0.0
    %2206 = vmatprep.subr.mxu0 0.0
    %2207 = vmatpush1.msra.mxu0 0.0
    %2208 = vmatprep.subr.mxu0 0.0
    %2209 = vmatpush1.msra.mxu0 0.0
    %2210 = vmatprep.subr.mxu0 0.0
    %2211 = vmatpush1.msra.mxu0 0.0
    %2212 = vmatprep.subr.mxu0 0.0
    %2213 = vmatpush1.msra.mxu0 0.0
    %2214 = vmatprep.subr.mxu0 0.0
    %2215 = vmatpush1.msra.mxu0 0.0
    %2216 = vmatprep.subr.mxu0 0.0
    %2217 = vmatpush1.msra.mxu0 0.0
    %2218 = vmatprep.subr.mxu0 0.0
    %2219 = vmatpush1.msra.mxu0 0.0
    %2220 = vmatprep.subr.mxu0 0.0
    %2221 = vmatpush1.msra.mxu0 0.0
    %2222 = vmatprep.subr.mxu0 0.0
    %2223 = vmatpush1.msra.mxu0 0.0
    %2224 = vmatprep.mubr.f32.mxu0 0.0
    %2225 = vmatmul.mubr.f32.gmra.mrb[0].mxu0 %v2086
    %v2226 = vpop.f32.mrb[0].mxu0
    %v2227 = vadd.f32 0.0, %v2226
    %v2228 = vpop.f32.mrb[0].mxu0
    %v2229 = vadd.f32 0.0, %v2228
    %2230 = vdwg.mxu0
    %2231 = vmatprep.subr.mxu0 %v2099
    %2232 = vmatpush1.msra.mxu0 %v2098
    %2233 = vmatprep.subr.mxu0 %v2103
    %2234 = vmatpush1.msra.mxu0 %v2102
    %2235 = vmatprep.subr.mxu0 %v2107
    %2236 = vmatpush1.msra.mxu0 %v2106
    %2237 = vmatprep.subr.mxu0 %v2111
    %2238 = vmatpush1.msra.mxu0 %v2110
    %2239 = vmatprep.subr.mxu0 %v2115
    %2240 = vmatpush1.msra.mxu0 %v2114
    %2241 = vmatprep.subr.mxu0 %v2119
    %2242 = vmatpush1.msra.mxu0 %v2118
    %2243 = vmatprep.subr.mxu0 %v2123
    %2244 = vmatpush1.msra.mxu0 %v2122
    %2245 = vmatprep.subr.mxu0 %v2127
    %2246 = vmatpush1.msra.mxu0 %v2126
    %2247 = vmatprep.subr.mxu0 %v2131
    %2248 = vmatpush1.msra.mxu0 %v2130
    %2249 = vmatprep.subr.mxu0 %v2135
    %2250 = vmatpush1.msra.mxu0 %v2134
    %2251 = vmatprep.subr.mxu0 %v2139
    %2252 = vmatpush1.msra.mxu0 %v2138
    %2253 = vmatprep.subr.mxu0 %v2143
    %2254 = vmatpush1.msra.mxu0 %v2142
    %2255 = vmatprep.subr.mxu0 %v2147
    %2256 = vmatpush1.msra.mxu0 %v2146
    %2257 = vmatprep.subr.mxu0 %v2151
    %2258 = vmatpush1.msra.mxu0 %v2150
    %2259 = vmatprep.subr.mxu0 %v2155
    %2260 = vmatpush1.msra.mxu0 %v2154
    %2261 = vmatprep.subr.mxu0 %v2159
    %2262 = vmatpush1.msra.mxu0 %v2158
    %2263 = vmatprep.subr.mxu0 0.0
    %2264 = vmatpush1.msra.mxu0 0.0
    %2265 = vmatprep.subr.mxu0 0.0
    %2266 = vmatpush1.msra.mxu0 0.0
    %2267 = vmatprep.subr.mxu0 0.0
    %2268 = vmatpush1.msra.mxu0 0.0
    %2269 = vmatprep.subr.mxu0 0.0
    %2270 = vmatpush1.msra.mxu0 0.0
    %2271 = vmatprep.subr.mxu0 0.0
    %2272 = vmatpush1.msra.mxu0 0.0
    %2273 = vmatprep.subr.mxu0 0.0
    %2274 = vmatpush1.msra.mxu0 0.0
    %2275 = vmatprep.subr.mxu0 0.0
    %2276 = vmatpush1.msra.mxu0 0.0
    %2277 = vmatprep.subr.mxu0 0.0
    %2278 = vmatpush1.msra.mxu0 0.0
    %2279 = vmatprep.subr.mxu0 0.0
    %2280 = vmatpush1.msra.mxu0 0.0
    %2281 = vmatprep.subr.mxu0 0.0
    %2282 = vmatpush1.msra.mxu0 0.0
    %2283 = vmatprep.subr.mxu0 0.0
    %2284 = vmatpush1.msra.mxu0 0.0
    %2285 = vmatprep.subr.mxu0 0.0
    %2286 = vmatpush1.msra.mxu0 0.0
    %2287 = vmatprep.subr.mxu0 0.0
    %2288 = vmatpush1.msra.mxu0 0.0
    %2289 = vmatprep.subr.mxu0 0.0
    %2290 = vmatpush1.msra.mxu0 0.0
    %2291 = vmatprep.subr.mxu0 0.0
    %2292 = vmatpush1.msra.mxu0 0.0
    %2293 = vmatprep.subr.mxu0 0.0
    %2294 = vmatpush1.msra.mxu0 0.0
    %2295 = vmatprep.mubr.f32.mxu0 0.0
    %2296 = vmatmul.mubr.f32.gmra.mrb[0].mxu0 %v2086
    %v2297 = vpop.f32.mrb[0].mxu0
    %v2298 = vadd.f32 0.0, %v2297
    %v2299 = vpop.f32.mrb[0].mxu0
    %v2300 = vadd.f32 0.0, %v2299
    %2301 = vdwg.mxu0
    %v2302 = vadd.f32 %v2092, %v2227
    %v2303 = vadd.f32 %v2093, %v2229
    %v2304 = vadd.f32 %v2094, %v2298
    %v2305 = vadd.f32 %v2095, %v2300
    %v2306 = vxor.u32 %v2302, 2147483648
    %v2307 = vmul.f32 %v2306, 1.442695
    %v2308 = vpow.pop %v2307
    %v2309 = vadd.f32 %v2308, 1.0
    %v2310 = vrcp.pop %v2309
    %v2311 = vmul.f32 1.0, %v2310
    %v2312 = vxor.u32 %v2303, 2147483648
    %v2313 = vmul.f32 %v2312, 1.442695
    %v2314 = vpow.pop %v2313
    %v2315 = vadd.f32 %v2314, 1.0
    %v2316 = vrcp.pop %v2315
    %v2317 = vmul.f32 1.0, %v2316
    %v2318 = vtanh.pop %v2304
    %v2319 = vxor.u32 %v2305, 2147483648
    %v2320 = vmul.f32 %v2319, 1.442695
    %v2321 = vpow.pop %v2320
    %v2322 = vadd.f32 %v2321, 1.0
    %v2323 = vrcp.pop %v2322
    %v2324 = vmul.f32 1.0, %v2323
    %v2325 = vmul.f32 %v2317, %v2084
    %v2326 = vmul.f32 %v2311, %v2318
    %v2327 = vadd.f32 %v2325, %v2326
    %v2328 = vtanh.pop %v2327
    %v2329 = vmul.f32 %v2324, %v2328
    %s2330 = scalar_lea.vmem [#allocation3], 56
    %2331 = vst [vmem:[%s2330] sm:$0xff] %v2329
    %v2332 = vld [vmem:[#allocation3] sm:$0xff]
    %v2333 = vld [vmem:[#allocation3 + $0x8] sm:$0xff]
    %v2334 = vld [vmem:[#allocation3 + $0x10] sm:$0xff]
    %v2335 = vld [vmem:[#allocation3 + $0x18] sm:$0xff]
    %v2336 = vld [vmem:[#allocation3 + $0x20] sm:$0xff]
    %v2337 = vld [vmem:[#allocation3 + $0x28] sm:$0xff]
    %v2338 = vld [vmem:[#allocation3 + $0x30] sm:$0xff]
    %v2339 = vld [vmem:[#allocation3 + $0x38] sm:$0xff]
    %v2340 = vld [vmem:[#allocation7] sm:$0xff]
    %v2341 = vld [vmem:[#allocation7 + $0x8] sm:$0xff]
    %v2342 = vld [vmem:[#allocation7 + $0x10] sm:$0xff]
    %v2343 = vld [vmem:[#allocation7 + $0x18] sm:$0xff]
    %v2344 = vld [vmem:[#allocation7 + $0x20] sm:$0xff]
    %v2345 = vld [vmem:[#allocation7 + $0x28] sm:$0xff]
    %v2346 = vld [vmem:[#allocation7 + $0x30] sm:$0xff]
    %v2347 = vld [vmem:[#allocation7 + $0x38] sm:$0xff]
    %v2348 = vld [vmem:[#allocation7 + $0x40] sm:$0xff]
    %v2349 = vld [vmem:[#allocation7 + $0x48] sm:$0xff]
    %v2350 = vld [vmem:[#allocation7 + $0x50] sm:$0xff]
    %v2351 = vld [vmem:[#allocation7 + $0x58] sm:$0xff]
    %v2352 = vld [vmem:[#allocation7 + $0x60] sm:$0xff]
    %v2353 = vld [vmem:[#allocation7 + $0x68] sm:$0xff]
    %v2354 = vld [vmem:[#allocation7 + $0x70] sm:$0xff]
    %v2355 = vld [vmem:[#allocation7 + $0x78] sm:$0xff]
    %v2356 = vld [vmem:[#allocation7 + $0x80] sm:$0xff]
    %v2357 = vld [vmem:[#allocation7 + $0x88] sm:$0xff]
    %v2358 = vld [vmem:[#allocation7 + $0x90] sm:$0xff]
    %v2359 = vld [vmem:[#allocation7 + $0x98] sm:$0xff]
    %v2360 = vld [vmem:[#allocation7 + $0xa0] sm:$0xff]
    %v2361 = vld [vmem:[#allocation7 + $0xa8] sm:$0xff]
    %v2362 = vld [vmem:[#allocation7 + $0xb0] sm:$0xff]
    %v2363 = vld [vmem:[#allocation7 + $0xb8] sm:$0xff]
    %v2364 = vld [vmem:[#allocation7 + $0xc0] sm:$0xff]
    %v2365 = vld [vmem:[#allocation7 + $0xc8] sm:$0xff]
    %v2366 = vld [vmem:[#allocation7 + $0xd0] sm:$0xff]
    %v2367 = vld [vmem:[#allocation7 + $0xd8] sm:$0xff]
    %v2368 = vld [vmem:[#allocation7 + $0xe0] sm:$0xff]
    %v2369 = vld [vmem:[#allocation7 + $0xe8] sm:$0xff]
    %v2370 = vld [vmem:[#allocation7 + $0xf0] sm:$0xff]
    %v2371 = vld [vmem:[#allocation7 + $0xf8] sm:$0xff]
    %v2372 = vld [vmem:[#allocation7 + $0x100] sm:$0xff]
    %v2373 = vld [vmem:[#allocation7 + $0x108] sm:$0xff]
    %v2374 = vld [vmem:[#allocation7 + $0x110] sm:$0xff]
    %v2375 = vld [vmem:[#allocation7 + $0x118] sm:$0xff]
    %v2376 = vld [vmem:[#allocation7 + $0x120] sm:$0xff]
    %v2377 = vld [vmem:[#allocation7 + $0x128] sm:$0xff]
    %v2378 = vld [vmem:[#allocation7 + $0x130] sm:$0xff]
    %v2379 = vld [vmem:[#allocation7 + $0x138] sm:$0xff]
    %v2380 = vld [vmem:[#allocation7 + $0x140] sm:$0xff]
    %v2381 = vld [vmem:[#allocation7 + $0x148] sm:$0xff]
    %v2382 = vld [vmem:[#allocation7 + $0x150] sm:$0xff]
    %v2383 = vld [vmem:[#allocation7 + $0x158] sm:$0xff]
    %v2384 = vld [vmem:[#allocation7 + $0x160] sm:$0xff]
    %v2385 = vld [vmem:[#allocation7 + $0x168] sm:$0xff]
    %v2386 = vld [vmem:[#allocation7 + $0x170] sm:$0xff]
    %v2387 = vld [vmem:[#allocation7 + $0x178] sm:$0xff]
    %v2388 = vld [vmem:[#allocation7 + $0x180] sm:$0xff]
    %v2389 = vld [vmem:[#allocation7 + $0x188] sm:$0xff]
    %v2390 = vld [vmem:[#allocation7 + $0x190] sm:$0xff]
    %v2391 = vld [vmem:[#allocation7 + $0x198] sm:$0xff]
    %v2392 = vld [vmem:[#allocation7 + $0x1a0] sm:$0xff]
    %v2393 = vld [vmem:[#allocation7 + $0x1a8] sm:$0xff]
    %v2394 = vld [vmem:[#allocation7 + $0x1b0] sm:$0xff]
    %v2395 = vld [vmem:[#allocation7 + $0x1b8] sm:$0xff]
    %v2396 = vld [vmem:[#allocation7 + $0x1c0] sm:$0xff]
    %v2397 = vld [vmem:[#allocation7 + $0x1c8] sm:$0xff]
    %v2398 = vld [vmem:[#allocation7 + $0x1d0] sm:$0xff]
    %v2399 = vld [vmem:[#allocation7 + $0x1d8] sm:$0xff]
    %v2400 = vld [vmem:[#allocation7 + $0x1e0] sm:$0xff]
    %v2401 = vld [vmem:[#allocation7 + $0x1e8] sm:$0xff]
    %v2402 = vld [vmem:[#allocation7 + $0x1f0] sm:$0xff]
    %v2403 = vld [vmem:[#allocation7 + $0x1f8] sm:$0xff]
    %v2404 = vld [vmem:[%s6] sm:$0xf]
    %v2406 = vlaneseq
    %v2407 = vshrl.u32 %v2406, 7
    %v2408 = vsub.s32 0, %v2407
    %v2409 = vrot.slane %v2404, %v2408
    %v2410 = vlaneseq
    %v2411 = vshrl.u32 %v2410, 7
    %v2412 = vsub.s32 1, %v2411
    %v2413 = vrot.slane %v2404, %v2412
    %v2414 = vlaneseq
    %v2415 = vshrl.u32 %v2414, 7
    %v2416 = vsub.s32 2, %v2415
    %v2417 = vrot.slane %v2404, %v2416
    %v2418 = vlaneseq
    %v2419 = vshrl.u32 %v2418, 7
    %v2420 = vsub.s32 3, %v2419
    %v2421 = vrot.slane %v2404, %v2420
    %2426 = vmatprep.subr.mxu0 %v2341
    %2427 = vmatpush1.msra.mxu0 %v2340
    %2428 = vmatprep.subr.mxu0 %v2345
    %2429 = vmatpush1.msra.mxu0 %v2344
    %2430 = vmatprep.subr.mxu0 %v2349
    %2431 = vmatpush1.msra.mxu0 %v2348
    %2432 = vmatprep.subr.mxu0 %v2353
    %2433 = vmatpush1.msra.mxu0 %v2352
    %2434 = vmatprep.subr.mxu0 %v2357
    %2435 = vmatpush1.msra.mxu0 %v2356
    %2436 = vmatprep.subr.mxu0 %v2361
    %2437 = vmatpush1.msra.mxu0 %v2360
    %2438 = vmatprep.subr.mxu0 %v2365
    %2439 = vmatpush1.msra.mxu0 %v2364
    %2440 = vmatprep.subr.mxu0 %v2369
    %2441 = vmatpush1.msra.mxu0 %v2368
    %2442 = vmatprep.subr.mxu0 %v2373
    %2443 = vmatpush1.msra.mxu0 %v2372
    %2444 = vmatprep.subr.mxu0 %v2377
    %2445 = vmatpush1.msra.mxu0 %v2376
    %2446 = vmatprep.subr.mxu0 %v2381
    %2447 = vmatpush1.msra.mxu0 %v2380
    %2448 = vmatprep.subr.mxu0 %v2385
    %2449 = vmatpush1.msra.mxu0 %v2384
    %2450 = vmatprep.subr.mxu0 %v2389
    %2451 = vmatpush1.msra.mxu0 %v2388
    %2452 = vmatprep.subr.mxu0 %v2393
    %2453 = vmatpush1.msra.mxu0 %v2392
    %2454 = vmatprep.subr.mxu0 %v2397
    %2455 = vmatpush1.msra.mxu0 %v2396
    %2456 = vmatprep.subr.mxu0 %v2401
    %2457 = vmatpush1.msra.mxu0 %v2400
    %2458 = vmatprep.subr.mxu0 0.0
    %2459 = vmatpush1.msra.mxu0 0.0
    %2460 = vmatprep.subr.mxu0 0.0
    %2461 = vmatpush1.msra.mxu0 0.0
    %2462 = vmatprep.subr.mxu0 0.0
    %2463 = vmatpush1.msra.mxu0 0.0
    %2464 = vmatprep.subr.mxu0 0.0
    %2465 = vmatpush1.msra.mxu0 0.0
    %2466 = vmatprep.subr.mxu0 0.0
    %2467 = vmatpush1.msra.mxu0 0.0
    %2468 = vmatprep.subr.mxu0 0.0
    %2469 = vmatpush1.msra.mxu0 0.0
    %2470 = vmatprep.subr.mxu0 0.0
    %2471 = vmatpush1.msra.mxu0 0.0
    %2472 = vmatprep.subr.mxu0 0.0
    %2473 = vmatpush1.msra.mxu0 0.0
    %2474 = vmatprep.subr.mxu0 0.0
    %2475 = vmatpush1.msra.mxu0 0.0
    %2476 = vmatprep.subr.mxu0 0.0
    %2477 = vmatpush1.msra.mxu0 0.0
    %2478 = vmatprep.subr.mxu0 0.0
    %2479 = vmatpush1.msra.mxu0 0.0
    %2480 = vmatprep.subr.mxu0 0.0
    %2481 = vmatpush1.msra.mxu0 0.0
    %2482 = vmatprep.subr.mxu0 0.0
    %2483 = vmatpush1.msra.mxu0 0.0
    %2484 = vmatprep.subr.mxu0 0.0
    %2485 = vmatpush1.msra.mxu0 0.0
    %2486 = vmatprep.subr.mxu0 0.0
    %2487 = vmatpush1.msra.mxu0 0.0
    %2488 = vmatprep.subr.mxu0 0.0
    %2489 = vmatpush1.msra.mxu0 0.0
    %2490 = vmatprep.mubr.f32.mxu0 0.0
    %2491 = vmatmul.mubr.f32.gmra.mrb[0].mxu0 %v2332
    %v2492 = vpop.f32.mrb[0].mxu0
    %v2493 = vadd.f32 %v2409, %v2492
    %v2494 = vpop.f32.mrb[0].mxu0
    %v2495 = vadd.f32 %v2413, %v2494
    %2496 = vmatprep.mubr.f32.mxu0 0.0
    %2497 = vmatmul.mubr.f32.gmra.mrb[0].mxu0 %v2333
    %v2498 = vpop.f32.mrb[0].mxu0
    %v2499 = vadd.f32 %v2409, %v2498
    %v2500 = vpop.f32.mrb[0].mxu0
    %v2501 = vadd.f32 %v2413, %v2500
    %2502 = vmatprep.mubr.f32.mxu0 0.0
    %2503 = vmatmul.mubr.f32.gmra.mrb[0].mxu0 %v2334
    %v2504 = vpop.f32.mrb[0].mxu0
    %v2505 = vadd.f32 %v2409, %v2504
    %v2506 = vpop.f32.mrb[0].mxu0
    %v2507 = vadd.f32 %v2413, %v2506
    %2508 = vmatprep.mubr.f32.mxu0 0.0
    %2509 = vmatmul.mubr.f32.gmra.mrb[0].mxu0 %v2335
    %v2510 = vpop.f32.mrb[0].mxu0
    %v2511 = vadd.f32 %v2409, %v2510
    %v2512 = vpop.f32.mrb[0].mxu0
    %v2513 = vadd.f32 %v2413, %v2512
    %2514 = vmatprep.mubr.f32.mxu0 0.0
    %2515 = vmatmul.mubr.f32.gmra.mrb[0].mxu0 %v2336
    %v2516 = vpop.f32.mrb[0].mxu0
    %v2517 = vadd.f32 %v2409, %v2516
    %v2518 = vpop.f32.mrb[0].mxu0
    %v2519 = vadd.f32 %v2413, %v2518
    %2520 = vmatprep.mubr.f32.mxu0 0.0
    %2521 = vmatmul.mubr.f32.gmra.mrb[0].mxu0 %v2337
    %v2522 = vpop.f32.mrb[0].mxu0
    %v2523 = vadd.f32 %v2409, %v2522
    %v2524 = vpop.f32.mrb[0].mxu0
    %v2525 = vadd.f32 %v2413, %v2524
    %2526 = vmatprep.mubr.f32.mxu0 0.0
    %2527 = vmatmul.mubr.f32.gmra.mrb[0].mxu0 %v2338
    %v2528 = vpop.f32.mrb[0].mxu0
    %v2529 = vadd.f32 %v2409, %v2528
    %v2530 = vpop.f32.mrb[0].mxu0
    %v2531 = vadd.f32 %v2413, %v2530
    %2532 = vmatprep.mubr.f32.mxu0 0.0
    %2533 = vmatmul.mubr.f32.gmra.mrb[0].mxu0 %v2339
    %v2534 = vpop.f32.mrb[0].mxu0
    %v2535 = vadd.f32 %v2409, %v2534
    %v2536 = vpop.f32.mrb[0].mxu0
    %v2537 = vadd.f32 %v2413, %v2536
    %2538 = vdwg.mxu0
    %2539 = vmatprep.subr.mxu0 %v2343
    %2540 = vmatpush1.msra.mxu0 %v2342
    %2541 = vmatprep.subr.mxu0 %v2347
    %2542 = vmatpush1.msra.mxu0 %v2346
    %2543 = vmatprep.subr.mxu0 %v2351
    %2544 = vmatpush1.msra.mxu0 %v2350
    %2545 = vmatprep.subr.mxu0 %v2355
    %2546 = vmatpush1.msra.mxu0 %v2354
    %2547 = vmatprep.subr.mxu0 %v2359
    %2548 = vmatpush1.msra.mxu0 %v2358
    %2549 = vmatprep.subr.mxu0 %v2363
    %2550 = vmatpush1.msra.mxu0 %v2362
    %2551 = vmatprep.subr.mxu0 %v2367
    %2552 = vmatpush1.msra.mxu0 %v2366
    %2553 = vmatprep.subr.mxu0 %v2371
    %2554 = vmatpush1.msra.mxu0 %v2370
    %2555 = vmatprep.subr.mxu0 %v2375
    %2556 = vmatpush1.msra.mxu0 %v2374
    %2557 = vmatprep.subr.mxu0 %v2379
    %2558 = vmatpush1.msra.mxu0 %v2378
    %2559 = vmatprep.subr.mxu0 %v2383
    %2560 = vmatpush1.msra.mxu0 %v2382
    %2561 = vmatprep.subr.mxu0 %v2387
    %2562 = vmatpush1.msra.mxu0 %v2386
    %2563 = vmatprep.subr.mxu0 %v2391
    %2564 = vmatpush1.msra.mxu0 %v2390
    %2565 = vmatprep.subr.mxu0 %v2395
    %2566 = vmatpush1.msra.mxu0 %v2394
    %2567 = vmatprep.subr.mxu0 %v2399
    %2568 = vmatpush1.msra.mxu0 %v2398
    %2569 = vmatprep.subr.mxu0 %v2403
    %2570 = vmatpush1.msra.mxu0 %v2402
    %2571 = vmatprep.subr.mxu0 0.0
    %2572 = vmatpush1.msra.mxu0 0.0
    %2573 = vmatprep.subr.mxu0 0.0
    %2574 = vmatpush1.msra.mxu0 0.0
    %2575 = vmatprep.subr.mxu0 0.0
    %2576 = vmatpush1.msra.mxu0 0.0
    %2577 = vmatprep.subr.mxu0 0.0
    %2578 = vmatpush1.msra.mxu0 0.0
    %2579 = vmatprep.subr.mxu0 0.0
    %2580 = vmatpush1.msra.mxu0 0.0
    %2581 = vmatprep.subr.mxu0 0.0
    %2582 = vmatpush1.msra.mxu0 0.0
    %2583 = vmatprep.subr.mxu0 0.0
    %2584 = vmatpush1.msra.mxu0 0.0
    %2585 = vmatprep.subr.mxu0 0.0
    %2586 = vmatpush1.msra.mxu0 0.0
    %2587 = vmatprep.subr.mxu0 0.0
    %2588 = vmatpush1.msra.mxu0 0.0
    %2589 = vmatprep.subr.mxu0 0.0
    %2590 = vmatpush1.msra.mxu0 0.0
    %2591 = vmatprep.subr.mxu0 0.0
    %2592 = vmatpush1.msra.mxu0 0.0
    %2593 = vmatprep.subr.mxu0 0.0
    %2594 = vmatpush1.msra.mxu0 0.0
    %2595 = vmatprep.subr.mxu0 0.0
    %2596 = vmatpush1.msra.mxu0 0.0
    %2597 = vmatprep.subr.mxu0 0.0
    %2598 = vmatpush1.msra.mxu0 0.0
    %2599 = vmatprep.subr.mxu0 0.0
    %2600 = vmatpush1.msra.mxu0 0.0
    %2601 = vmatprep.subr.mxu0 0.0
    %2602 = vmatpush1.msra.mxu0 0.0
    %2603 = vmatprep.mubr.f32.mxu0 0.0
    %2604 = vmatmul.mubr.f32.gmra.mrb[0].mxu0 %v2332
    %v2605 = vpop.f32.mrb[0].mxu0
    %v2606 = vadd.f32 %v2417, %v2605
    %v2607 = vpop.f32.mrb[0].mxu0
    %v2608 = vadd.f32 %v2421, %v2607
    %2609 = vmatprep.mubr.f32.mxu0 0.0
    %2610 = vmatmul.mubr.f32.gmra.mrb[0].mxu0 %v2333
    %v2611 = vpop.f32.mrb[0].mxu0
    %v2612 = vadd.f32 %v2417, %v2611
    %v2613 = vpop.f32.mrb[0].mxu0
    %v2614 = vadd.f32 %v2421, %v2613
    %2615 = vmatprep.mubr.f32.mxu0 0.0
    %2616 = vmatmul.mubr.f32.gmra.mrb[0].mxu0 %v2334
    %v2617 = vpop.f32.mrb[0].mxu0
    %v2618 = vadd.f32 %v2417, %v2617
    %v2619 = vpop.f32.mrb[0].mxu0
    %v2620 = vadd.f32 %v2421, %v2619
    %2621 = vmatprep.mubr.f32.mxu0 0.0
    %2622 = vmatmul.mubr.f32.gmra.mrb[0].mxu0 %v2335
    %v2623 = vpop.f32.mrb[0].mxu0
    %v2624 = vadd.f32 %v2417, %v2623
    %v2625 = vpop.f32.mrb[0].mxu0
    %v2626 = vadd.f32 %v2421, %v2625
    %2627 = vmatprep.mubr.f32.mxu0 0.0
    %2628 = vmatmul.mubr.f32.gmra.mrb[0].mxu0 %v2336
    %v2629 = vpop.f32.mrb[0].mxu0
    %v2630 = vadd.f32 %v2417, %v2629
    %v2631 = vpop.f32.mrb[0].mxu0
    %v2632 = vadd.f32 %v2421, %v2631
    %2633 = vmatprep.mubr.f32.mxu0 0.0
    %2634 = vmatmul.mubr.f32.gmra.mrb[0].mxu0 %v2337
    %v2635 = vpop.f32.mrb[0].mxu0
    %v2636 = vadd.f32 %v2417, %v2635
    %v2637 = vpop.f32.mrb[0].mxu0
    %v2638 = vadd.f32 %v2421, %v2637
    %2639 = vmatprep.mubr.f32.mxu0 0.0
    %2640 = vmatmul.mubr.f32.gmra.mrb[0].mxu0 %v2338
    %v2641 = vpop.f32.mrb[0].mxu0
    %v2642 = vadd.f32 %v2417, %v2641
    %v2643 = vpop.f32.mrb[0].mxu0
    %v2644 = vadd.f32 %v2421, %v2643
    %2645 = vmatprep.mubr.f32.mxu0 0.0
    %2646 = vmatmul.mubr.f32.gmra.mrb[0].mxu0 %v2339
    %v2647 = vpop.f32.mrb[0].mxu0
    %v2648 = vadd.f32 %v2417, %v2647
    %v2649 = vpop.f32.mrb[0].mxu0
    %v2650 = vadd.f32 %v2421, %v2649
    %2651 = vdwg.mxu0
    %2652 = vst [vmem:[#allocation2] sm:$0xff] %v2493
    %2653 = vst [vmem:[#allocation2 + $0x8] sm:$0xff] %v2495
    %2654 = vst [vmem:[#allocation2 + $0x10] sm:$0xff] %v2606
    %2655 = vst [vmem:[#allocation2 + $0x18] sm:$0xff] %v2608
    %2656 = vst [vmem:[#allocation2 + $0x20] sm:$0xff] %v2499
    %2657 = vst [vmem:[#allocation2 + $0x28] sm:$0xff] %v2501
    %2658 = vst [vmem:[#allocation2 + $0x30] sm:$0xff] %v2612
    %2659 = vst [vmem:[#allocation2 + $0x38] sm:$0xff] %v2614
    %2660 = vst [vmem:[#allocation2 + $0x40] sm:$0xff] %v2505
    %2661 = vst [vmem:[#allocation2 + $0x48] sm:$0xff] %v2507
    %2662 = vst [vmem:[#allocation2 + $0x50] sm:$0xff] %v2618
    %2663 = vst [vmem:[#allocation2 + $0x58] sm:$0xff] %v2620
    %2664 = vst [vmem:[#allocation2 + $0x60] sm:$0xff] %v2511
    %2665 = vst [vmem:[#allocation2 + $0x68] sm:$0xff] %v2513
    %2666 = vst [vmem:[#allocation2 + $0x70] sm:$0xff] %v2624
    %2667 = vst [vmem:[#allocation2 + $0x78] sm:$0xff] %v2626
    %2668 = vst [vmem:[#allocation2 + $0x80] sm:$0xff] %v2517
    %2669 = vst [vmem:[#allocation2 + $0x88] sm:$0xff] %v2519
    %2670 = vst [vmem:[#allocation2 + $0x90] sm:$0xff] %v2630
    %2671 = vst [vmem:[#allocation2 + $0x98] sm:$0xff] %v2632
    %2672 = vst [vmem:[#allocation2 + $0xa0] sm:$0xff] %v2523
    %2673 = vst [vmem:[#allocation2 + $0xa8] sm:$0xff] %v2525
    %2674 = vst [vmem:[#allocation2 + $0xb0] sm:$0xff] %v2636
    %2675 = vst [vmem:[#allocation2 + $0xb8] sm:$0xff] %v2638
    %2676 = vst [vmem:[#allocation2 + $0xc0] sm:$0xff] %v2529
    %2677 = vst [vmem:[#allocation2 + $0xc8] sm:$0xff] %v2531
    %2678 = vst [vmem:[#allocation2 + $0xd0] sm:$0xff] %v2642
    %2679 = vst [vmem:[#allocation2 + $0xd8] sm:$0xff] %v2644
    %2680 = vst [vmem:[#allocation2 + $0xe0] sm:$0xff] %v2535
    %2681 = vst [vmem:[#allocation2 + $0xe8] sm:$0xff] %v2537
    %2682 = vst [vmem:[#allocation2 + $0xf0] sm:$0xff] %v2648
    %2683 = vst [vmem:[#allocation2 + $0xf8] sm:$0xff] %v2650
    %v2684 = vld [vmem:[%s391] sm:$0xff]
    %v2685 = vld [vmem:[%s391 + $0x8] sm:$0xff]
    %v2686 = vld [vmem:[%s391 + $0x10] sm:$0xff]
    %v2687 = vld [vmem:[%s391 + $0x18] sm:$0xff]
    %v2688 = vld [vmem:[#allocation9] sm:$0xff]
    %v2689 = vld [vmem:[#allocation9 + $0x8] sm:$0xff]
    %v2690 = vld [vmem:[#allocation9 + $0x10] sm:$0xff]
    %v2691 = vld [vmem:[#allocation9 + $0x18] sm:$0xff]
    %v2692 = vld [vmem:[#allocation9 + $0x20] sm:$0xff]
    %v2693 = vld [vmem:[#allocation9 + $0x28] sm:$0xff]
    %v2694 = vld [vmem:[#allocation9 + $0x30] sm:$0xff]
    %v2695 = vld [vmem:[#allocation9 + $0x38] sm:$0xff]
    %v2696 = vld [vmem:[#allocation9 + $0x40] sm:$0xff]
    %v2697 = vld [vmem:[#allocation9 + $0x48] sm:$0xff]
    %v2698 = vld [vmem:[#allocation9 + $0x50] sm:$0xff]
    %v2699 = vld [vmem:[#allocation9 + $0x58] sm:$0xff]
    %v2700 = vld [vmem:[#allocation9 + $0x60] sm:$0xff]
    %v2701 = vld [vmem:[#allocation9 + $0x68] sm:$0xff]
    %v2702 = vld [vmem:[#allocation9 + $0x70] sm:$0xff]
    %v2703 = vld [vmem:[#allocation9 + $0x78] sm:$0xff]
    %v2704 = vld [vmem:[#allocation9 + $0x80] sm:$0xff]
    %v2705 = vld [vmem:[#allocation9 + $0x88] sm:$0xff]
    %v2706 = vld [vmem:[#allocation9 + $0x90] sm:$0xff]
    %v2707 = vld [vmem:[#allocation9 + $0x98] sm:$0xff]
    %v2708 = vld [vmem:[#allocation9 + $0xa0] sm:$0xff]
    %v2709 = vld [vmem:[#allocation9 + $0xa8] sm:$0xff]
    %v2710 = vld [vmem:[#allocation9 + $0xb0] sm:$0xff]
    %v2711 = vld [vmem:[#allocation9 + $0xb8] sm:$0xff]
    %v2712 = vld [vmem:[#allocation9 + $0xc0] sm:$0xff]
    %v2713 = vld [vmem:[#allocation9 + $0xc8] sm:$0xff]
    %v2714 = vld [vmem:[#allocation9 + $0xd0] sm:$0xff]
    %v2715 = vld [vmem:[#allocation9 + $0xd8] sm:$0xff]
    %v2716 = vld [vmem:[#allocation9 + $0xe0] sm:$0xff]
    %v2717 = vld [vmem:[#allocation9 + $0xe8] sm:$0xff]
    %v2718 = vld [vmem:[#allocation9 + $0xf0] sm:$0xff]
    %v2719 = vld [vmem:[#allocation9 + $0xf8] sm:$0xff]
    %v2720 = vld [vmem:[#allocation9 + $0x100] sm:$0xff]
    %v2721 = vld [vmem:[#allocation9 + $0x108] sm:$0xff]
    %v2722 = vld [vmem:[#allocation9 + $0x110] sm:$0xff]
    %v2723 = vld [vmem:[#allocation9 + $0x118] sm:$0xff]
    %v2724 = vld [vmem:[#allocation9 + $0x120] sm:$0xff]
    %v2725 = vld [vmem:[#allocation9 + $0x128] sm:$0xff]
    %v2726 = vld [vmem:[#allocation9 + $0x130] sm:$0xff]
    %v2727 = vld [vmem:[#allocation9 + $0x138] sm:$0xff]
    %v2728 = vld [vmem:[#allocation9 + $0x140] sm:$0xff]
    %v2729 = vld [vmem:[#allocation9 + $0x148] sm:$0xff]
    %v2730 = vld [vmem:[#allocation9 + $0x150] sm:$0xff]
    %v2731 = vld [vmem:[#allocation9 + $0x158] sm:$0xff]
    %v2732 = vld [vmem:[#allocation9 + $0x160] sm:$0xff]
    %v2733 = vld [vmem:[#allocation9 + $0x168] sm:$0xff]
    %v2734 = vld [vmem:[#allocation9 + $0x170] sm:$0xff]
    %v2735 = vld [vmem:[#allocation9 + $0x178] sm:$0xff]
    %v2736 = vld [vmem:[#allocation9 + $0x180] sm:$0xff]
    %v2737 = vld [vmem:[#allocation9 + $0x188] sm:$0xff]
    %v2738 = vld [vmem:[#allocation9 + $0x190] sm:$0xff]
    %v2739 = vld [vmem:[#allocation9 + $0x198] sm:$0xff]
    %v2740 = vld [vmem:[#allocation9 + $0x1a0] sm:$0xff]
    %v2741 = vld [vmem:[#allocation9 + $0x1a8] sm:$0xff]
    %v2742 = vld [vmem:[#allocation9 + $0x1b0] sm:$0xff]
    %v2743 = vld [vmem:[#allocation9 + $0x1b8] sm:$0xff]
    %v2744 = vld [vmem:[#allocation9 + $0x1c0] sm:$0xff]
    %v2745 = vld [vmem:[#allocation9 + $0x1c8] sm:$0xff]
    %v2746 = vld [vmem:[#allocation9 + $0x1d0] sm:$0xff]
    %v2747 = vld [vmem:[#allocation9 + $0x1d8] sm:$0xff]
    %v2748 = vld [vmem:[#allocation9 + $0x1e0] sm:$0xff]
    %v2749 = vld [vmem:[#allocation9 + $0x1e8] sm:$0xff]
    %v2750 = vld [vmem:[#allocation9 + $0x1f0] sm:$0xff]
    %v2751 = vld [vmem:[#allocation9 + $0x1f8] sm:$0xff]
    %2752 = vmatprep.subr.mxu0 %v2689
    %2753 = vmatpush1.msra.mxu0 %v2688
    %2754 = vmatprep.subr.mxu0 %v2693
    %2755 = vmatpush1.msra.mxu0 %v2692
    %2756 = vmatprep.subr.mxu0 %v2697
    %2757 = vmatpush1.msra.mxu0 %v2696
    %2758 = vmatprep.subr.mxu0 %v2701
    %2759 = vmatpush1.msra.mxu0 %v2700
    %2760 = vmatprep.subr.mxu0 %v2705
    %2761 = vmatpush1.msra.mxu0 %v2704
    %2762 = vmatprep.subr.mxu0 %v2709
    %2763 = vmatpush1.msra.mxu0 %v2708
    %2764 = vmatprep.subr.mxu0 %v2713
    %2765 = vmatpush1.msra.mxu0 %v2712
    %2766 = vmatprep.subr.mxu0 %v2717
    %2767 = vmatpush1.msra.mxu0 %v2716
    %2768 = vmatprep.subr.mxu0 %v2721
    %2769 = vmatpush1.msra.mxu0 %v2720
    %2770 = vmatprep.subr.mxu0 %v2725
    %2771 = vmatpush1.msra.mxu0 %v2724
    %2772 = vmatprep.subr.mxu0 %v2729
    %2773 = vmatpush1.msra.mxu0 %v2728
    %2774 = vmatprep.subr.mxu0 %v2733
    %2775 = vmatpush1.msra.mxu0 %v2732
    %2776 = vmatprep.subr.mxu0 %v2737
    %2777 = vmatpush1.msra.mxu0 %v2736
    %2778 = vmatprep.subr.mxu0 %v2741
    %2779 = vmatpush1.msra.mxu0 %v2740
    %2780 = vmatprep.subr.mxu0 %v2745
    %2781 = vmatpush1.msra.mxu0 %v2744
    %2782 = vmatprep.subr.mxu0 %v2749
    %2783 = vmatpush1.msra.mxu0 %v2748
    %2784 = vmatprep.subr.mxu0 0.0
    %2785 = vmatpush1.msra.mxu0 0.0
    %2786 = vmatprep.subr.mxu0 0.0
    %2787 = vmatpush1.msra.mxu0 0.0
    %2788 = vmatprep.subr.mxu0 0.0
    %2789 = vmatpush1.msra.mxu0 0.0
    %2790 = vmatprep.subr.mxu0 0.0
    %2791 = vmatpush1.msra.mxu0 0.0
    %2792 = vmatprep.subr.mxu0 0.0
    %2793 = vmatpush1.msra.mxu0 0.0
    %2794 = vmatprep.subr.mxu0 0.0
    %2795 = vmatpush1.msra.mxu0 0.0
    %2796 = vmatprep.subr.mxu0 0.0
    %2797 = vmatpush1.msra.mxu0 0.0
    %2798 = vmatprep.subr.mxu0 0.0
    %2799 = vmatpush1.msra.mxu0 0.0
    %2800 = vmatprep.subr.mxu0 0.0
    %2801 = vmatpush1.msra.mxu0 0.0
    %2802 = vmatprep.subr.mxu0 0.0
    %2803 = vmatpush1.msra.mxu0 0.0
    %2804 = vmatprep.subr.mxu0 0.0
    %2805 = vmatpush1.msra.mxu0 0.0
    %2806 = vmatprep.subr.mxu0 0.0
    %2807 = vmatpush1.msra.mxu0 0.0
    %2808 = vmatprep.subr.mxu0 0.0
    %2809 = vmatpush1.msra.mxu0 0.0
    %2810 = vmatprep.subr.mxu0 0.0
    %2811 = vmatpush1.msra.mxu0 0.0
    %2812 = vmatprep.subr.mxu0 0.0
    %2813 = vmatpush1.msra.mxu0 0.0
    %2814 = vmatprep.subr.mxu0 0.0
    %2815 = vmatpush1.msra.mxu0 0.0
    %2816 = vmatprep.mubr.f32.mxu0 0.0
    %2817 = vmatmul.mubr.f32.gmra.mrb[0].mxu0 0.0
    %v2818 = vpop.f32.mrb[0].mxu0
    %v2819 = vadd.f32 0.0, %v2818
    %v2820 = vpop.f32.mrb[0].mxu0
    %v2821 = vadd.f32 0.0, %v2820
    %2822 = vdwg.mxu0
    %2823 = vmatprep.subr.mxu0 %v2691
    %2824 = vmatpush1.msra.mxu0 %v2690
    %2825 = vmatprep.subr.mxu0 %v2695
    %2826 = vmatpush1.msra.mxu0 %v2694
    %2827 = vmatprep.subr.mxu0 %v2699
    %2828 = vmatpush1.msra.mxu0 %v2698
    %2829 = vmatprep.subr.mxu0 %v2703
    %2830 = vmatpush1.msra.mxu0 %v2702
    %2831 = vmatprep.subr.mxu0 %v2707
    %2832 = vmatpush1.msra.mxu0 %v2706
    %2833 = vmatprep.subr.mxu0 %v2711
    %2834 = vmatpush1.msra.mxu0 %v2710
    %2835 = vmatprep.subr.mxu0 %v2715
    %2836 = vmatpush1.msra.mxu0 %v2714
    %2837 = vmatprep.subr.mxu0 %v2719
    %2838 = vmatpush1.msra.mxu0 %v2718
    %2839 = vmatprep.subr.mxu0 %v2723
    %2840 = vmatpush1.msra.mxu0 %v2722
    %2841 = vmatprep.subr.mxu0 %v2727
    %2842 = vmatpush1.msra.mxu0 %v2726
    %2843 = vmatprep.subr.mxu0 %v2731
    %2844 = vmatpush1.msra.mxu0 %v2730
    %2845 = vmatprep.subr.mxu0 %v2735
    %2846 = vmatpush1.msra.mxu0 %v2734
    %2847 = vmatprep.subr.mxu0 %v2739
    %2848 = vmatpush1.msra.mxu0 %v2738
    %2849 = vmatprep.subr.mxu0 %v2743
    %2850 = vmatpush1.msra.mxu0 %v2742
    %2851 = vmatprep.subr.mxu0 %v2747
    %2852 = vmatpush1.msra.mxu0 %v2746
    %2853 = vmatprep.subr.mxu0 %v2751
    %2854 = vmatpush1.msra.mxu0 %v2750
    %2855 = vmatprep.subr.mxu0 0.0
    %2856 = vmatpush1.msra.mxu0 0.0
    %2857 = vmatprep.subr.mxu0 0.0
    %2858 = vmatpush1.msra.mxu0 0.0
    %2859 = vmatprep.subr.mxu0 0.0
    %2860 = vmatpush1.msra.mxu0 0.0
    %2861 = vmatprep.subr.mxu0 0.0
    %2862 = vmatpush1.msra.mxu0 0.0
    %2863 = vmatprep.subr.mxu0 0.0
    %2864 = vmatpush1.msra.mxu0 0.0
    %2865 = vmatprep.subr.mxu0 0.0
    %2866 = vmatpush1.msra.mxu0 0.0
    %2867 = vmatprep.subr.mxu0 0.0
    %2868 = vmatpush1.msra.mxu0 0.0
    %2869 = vmatprep.subr.mxu0 0.0
    %2870 = vmatpush1.msra.mxu0 0.0
    %2871 = vmatprep.subr.mxu0 0.0
    %2872 = vmatpush1.msra.mxu0 0.0
    %2873 = vmatprep.subr.mxu0 0.0
    %2874 = vmatpush1.msra.mxu0 0.0
    %2875 = vmatprep.subr.mxu0 0.0
    %2876 = vmatpush1.msra.mxu0 0.0
    %2877 = vmatprep.subr.mxu0 0.0
    %2878 = vmatpush1.msra.mxu0 0.0
    %2879 = vmatprep.subr.mxu0 0.0
    %2880 = vmatpush1.msra.mxu0 0.0
    %2881 = vmatprep.subr.mxu0 0.0
    %2882 = vmatpush1.msra.mxu0 0.0
    %2883 = vmatprep.subr.mxu0 0.0
    %2884 = vmatpush1.msra.mxu0 0.0
    %2885 = vmatprep.subr.mxu0 0.0
    %2886 = vmatpush1.msra.mxu0 0.0
    %2887 = vmatprep.mubr.f32.mxu0 0.0
    %2888 = vmatmul.mubr.f32.gmra.mrb[0].mxu0 0.0
    %v2889 = vpop.f32.mrb[0].mxu0
    %v2890 = vadd.f32 0.0, %v2889
    %v2891 = vpop.f32.mrb[0].mxu0
    %v2892 = vadd.f32 0.0, %v2891
    %2893 = vdwg.mxu0
    %v2894 = vadd.f32 %v2684, %v2819
    %v2895 = vadd.f32 %v2685, %v2821
    %v2896 = vadd.f32 %v2686, %v2890
    %v2897 = vadd.f32 %v2687, %v2892
    %v2898 = vxor.u32 %v2894, 2147483648
    %v2899 = vmul.f32 %v2898, 1.442695
    %v2900 = vpow.pop %v2899
    %v2901 = vadd.f32 %v2900, 1.0
    %v2902 = vrcp.pop %v2901
    %v2903 = vmul.f32 1.0, %v2902
    %v2904 = vxor.u32 %v2895, 2147483648
    %v2905 = vmul.f32 %v2904, 1.442695
    %v2906 = vpow.pop %v2905
    %v2907 = vadd.f32 %v2906, 1.0
    %v2908 = vrcp.pop %v2907
    %v2909 = vmul.f32 1.0, %v2908
    %v2910 = vtanh.pop %v2896
    %v2911 = vxor.u32 %v2897, 2147483648
    %v2912 = vmul.f32 %v2911, 1.442695
    %v2913 = vpow.pop %v2912
    %v2914 = vadd.f32 %v2913, 1.0
    %v2915 = vrcp.pop %v2914
    %v2916 = vmul.f32 1.0, %v2915
    %v2917 = vmul.f32 %v2909, 0.0
    %v2918 = vmul.f32 %v2903, %v2910
    %v2919 = vadd.f32 %v2917, %v2918
    %v2920 = vtanh.pop %v2919
    %v2921 = vmul.f32 %v2916, %v2920
    %v2922 = vld [vmem:[%s633] sm:$0xff]
    %v2923 = vld [vmem:[%s633 + $0x8] sm:$0xff]
    %v2924 = vld [vmem:[%s633 + $0x10] sm:$0xff]
    %v2925 = vld [vmem:[%s633 + $0x18] sm:$0xff]
    %2926 = vmatprep.subr.mxu0 %v2689
    %2927 = vmatpush1.msra.mxu0 %v2688
    %2928 = vmatprep.subr.mxu0 %v2693
    %2929 = vmatpush1.msra.mxu0 %v2692
    %2930 = vmatprep.subr.mxu0 %v2697
    %2931 = vmatpush1.msra.mxu0 %v2696
    %2932 = vmatprep.subr.mxu0 %v2701
    %2933 = vmatpush1.msra.mxu0 %v2700
    %2934 = vmatprep.subr.mxu0 %v2705
    %2935 = vmatpush1.msra.mxu0 %v2704
    %2936 = vmatprep.subr.mxu0 %v2709
    %2937 = vmatpush1.msra.mxu0 %v2708
    %2938 = vmatprep.subr.mxu0 %v2713
    %2939 = vmatpush1.msra.mxu0 %v2712
    %2940 = vmatprep.subr.mxu0 %v2717
    %2941 = vmatpush1.msra.mxu0 %v2716
    %2942 = vmatprep.subr.mxu0 %v2721
    %2943 = vmatpush1.msra.mxu0 %v2720
    %2944 = vmatprep.subr.mxu0 %v2725
    %2945 = vmatpush1.msra.mxu0 %v2724
    %2946 = vmatprep.subr.mxu0 %v2729
    %2947 = vmatpush1.msra.mxu0 %v2728
    %2948 = vmatprep.subr.mxu0 %v2733
    %2949 = vmatpush1.msra.mxu0 %v2732
    %2950 = vmatprep.subr.mxu0 %v2737
    %2951 = vmatpush1.msra.mxu0 %v2736
    %2952 = vmatprep.subr.mxu0 %v2741
    %2953 = vmatpush1.msra.mxu0 %v2740
    %2954 = vmatprep.subr.mxu0 %v2745
    %2955 = vmatpush1.msra.mxu0 %v2744
    %2956 = vmatprep.subr.mxu0 %v2749
    %2957 = vmatpush1.msra.mxu0 %v2748
    %2958 = vmatprep.subr.mxu0 0.0
    %2959 = vmatpush1.msra.mxu0 0.0
    %2960 = vmatprep.subr.mxu0 0.0
    %2961 = vmatpush1.msra.mxu0 0.0
    %2962 = vmatprep.subr.mxu0 0.0
    %2963 = vmatpush1.msra.mxu0 0.0
    %2964 = vmatprep.subr.mxu0 0.0
    %2965 = vmatpush1.msra.mxu0 0.0
    %2966 = vmatprep.subr.mxu0 0.0
    %2967 = vmatpush1.msra.mxu0 0.0
    %2968 = vmatprep.subr.mxu0 0.0
    %2969 = vmatpush1.msra.mxu0 0.0
    %2970 = vmatprep.subr.mxu0 0.0
    %2971 = vmatpush1.msra.mxu0 0.0
    %2972 = vmatprep.subr.mxu0 0.0
    %2973 = vmatpush1.msra.mxu0 0.0
    %2974 = vmatprep.subr.mxu0 0.0
    %2975 = vmatpush1.msra.mxu0 0.0
    %2976 = vmatprep.subr.mxu0 0.0
    %2977 = vmatpush1.msra.mxu0 0.0
    %2978 = vmatprep.subr.mxu0 0.0
    %2979 = vmatpush1.msra.mxu0 0.0
    %2980 = vmatprep.subr.mxu0 0.0
    %2981 = vmatpush1.msra.mxu0 0.0
    %2982 = vmatprep.subr.mxu0 0.0
    %2983 = vmatpush1.msra.mxu0 0.0
    %2984 = vmatprep.subr.mxu0 0.0
    %2985 = vmatpush1.msra.mxu0 0.0
    %2986 = vmatprep.subr.mxu0 0.0
    %2987 = vmatpush1.msra.mxu0 0.0
    %2988 = vmatprep.subr.mxu0 0.0
    %2989 = vmatpush1.msra.mxu0 0.0
    %2990 = vmatprep.mubr.f32.mxu0 0.0
    %2991 = vmatmul.mubr.f32.gmra.mrb[0].mxu0 %v2921
    %v2992 = vpop.f32.mrb[0].mxu0
    %v2993 = vadd.f32 0.0, %v2992
    %v2994 = vpop.f32.mrb[0].mxu0
    %v2995 = vadd.f32 0.0, %v2994
    %2996 = vdwg.mxu0
    %2997 = vmatprep.subr.mxu0 %v2691
    %2998 = vmatpush1.msra.mxu0 %v2690
    %2999 = vmatprep.subr.mxu0 %v2695
    %3000 = vmatpush1.msra.mxu0 %v2694
    %3001 = vmatprep.subr.mxu0 %v2699
    %3002 = vmatpush1.msra.mxu0 %v2698
    %3003 = vmatprep.subr.mxu0 %v2703
    %3004 = vmatpush1.msra.mxu0 %v2702
    %3005 = vmatprep.subr.mxu0 %v2707
    %3006 = vmatpush1.msra.mxu0 %v2706
    %3007 = vmatprep.subr.mxu0 %v2711
    %3008 = vmatpush1.msra.mxu0 %v2710
    %3009 = vmatprep.subr.mxu0 %v2715
    %3010 = vmatpush1.msra.mxu0 %v2714
    %3011 = vmatprep.subr.mxu0 %v2719
    %3012 = vmatpush1.msra.mxu0 %v2718
    %3013 = vmatprep.subr.mxu0 %v2723
    %3014 = vmatpush1.msra.mxu0 %v2722
    %3015 = vmatprep.subr.mxu0 %v2727
    %3016 = vmatpush1.msra.mxu0 %v2726
    %3017 = vmatprep.subr.mxu0 %v2731
    %3018 = vmatpush1.msra.mxu0 %v2730
    %3019 = vmatprep.subr.mxu0 %v2735
    %3020 = vmatpush1.msra.mxu0 %v2734
    %3021 = vmatprep.subr.mxu0 %v2739
    %3022 = vmatpush1.msra.mxu0 %v2738
    %3023 = vmatprep.subr.mxu0 %v2743
    %3024 = vmatpush1.msra.mxu0 %v2742
    %3025 = vmatprep.subr.mxu0 %v2747
    %3026 = vmatpush1.msra.mxu0 %v2746
    %3027 = vmatprep.subr.mxu0 %v2751
    %3028 = vmatpush1.msra.mxu0 %v2750
    %3029 = vmatprep.subr.mxu0 0.0
    %3030 = vmatpush1.msra.mxu0 0.0
    %3031 = vmatprep.subr.mxu0 0.0
    %3032 = vmatpush1.msra.mxu0 0.0
    %3033 = vmatprep.subr.mxu0 0.0
    %3034 = vmatpush1.msra.mxu0 0.0
    %3035 = vmatprep.subr.mxu0 0.0
    %3036 = vmatpush1.msra.mxu0 0.0
    %3037 = vmatprep.subr.mxu0 0.0
    %3038 = vmatpush1.msra.mxu0 0.0
    %3039 = vmatprep.subr.mxu0 0.0
    %3040 = vmatpush1.msra.mxu0 0.0
    %3041 = vmatprep.subr.mxu0 0.0
    %3042 = vmatpush1.msra.mxu0 0.0
    %3043 = vmatprep.subr.mxu0 0.0
    %3044 = vmatpush1.msra.mxu0 0.0
    %3045 = vmatprep.subr.mxu0 0.0
    %3046 = vmatpush1.msra.mxu0 0.0
    %3047 = vmatprep.subr.mxu0 0.0
    %3048 = vmatpush1.msra.mxu0 0.0
    %3049 = vmatprep.subr.mxu0 0.0
    %3050 = vmatpush1.msra.mxu0 0.0
    %3051 = vmatprep.subr.mxu0 0.0
    %3052 = vmatpush1.msra.mxu0 0.0
    %3053 = vmatprep.subr.mxu0 0.0
    %3054 = vmatpush1.msra.mxu0 0.0
    %3055 = vmatprep.subr.mxu0 0.0
    %3056 = vmatpush1.msra.mxu0 0.0
    %3057 = vmatprep.subr.mxu0 0.0
    %3058 = vmatpush1.msra.mxu0 0.0
    %3059 = vmatprep.subr.mxu0 0.0
    %3060 = vmatpush1.msra.mxu0 0.0
    %3061 = vmatprep.mubr.f32.mxu0 0.0
    %3062 = vmatmul.mubr.f32.gmra.mrb[0].mxu0 %v2921
    %v3063 = vpop.f32.mrb[0].mxu0
    %v3064 = vadd.f32 0.0, %v3063
    %v3065 = vpop.f32.mrb[0].mxu0
    %v3066 = vadd.f32 0.0, %v3065
    %3067 = vdwg.mxu0
    %v3068 = vadd.f32 %v2922, %v2993
    %v3069 = vadd.f32 %v2923, %v2995
    %v3070 = vadd.f32 %v2924, %v3064
    %v3071 = vadd.f32 %v2925, %v3066
    %v3072 = vxor.u32 %v3068, 2147483648
    %v3073 = vmul.f32 %v3072, 1.442695
    %v3074 = vpow.pop %v3073
    %v3075 = vadd.f32 %v3074, 1.0
    %v3076 = vrcp.pop %v3075
    %v3077 = vmul.f32 1.0, %v3076
    %v3078 = vxor.u32 %v3069, 2147483648
    %v3079 = vmul.f32 %v3078, 1.442695
    %v3080 = vpow.pop %v3079
    %v3081 = vadd.f32 %v3080, 1.0
    %v3082 = vrcp.pop %v3081
    %v3083 = vmul.f32 1.0, %v3082
    %v3084 = vtanh.pop %v3070
    %v3085 = vxor.u32 %v3071, 2147483648
    %v3086 = vmul.f32 %v3085, 1.442695
    %v3087 = vpow.pop %v3086
    %v3088 = vadd.f32 %v3087, 1.0
    %v3089 = vrcp.pop %v3088
    %v3090 = vmul.f32 1.0, %v3089
    %v3091 = vmul.f32 %v3083, %v2919
    %v3092 = vmul.f32 %v3077, %v3084
    %v3093 = vadd.f32 %v3091, %v3092
    %v3094 = vtanh.pop %v3093
    %v3095 = vmul.f32 %v3090, %v3094
    %v3096 = vld [vmem:[%s876] sm:$0xff]
    %v3097 = vld [vmem:[%s876 + $0x8] sm:$0xff]
    %v3098 = vld [vmem:[%s876 + $0x10] sm:$0xff]
    %v3099 = vld [vmem:[%s876 + $0x18] sm:$0xff]
    %3100 = vmatprep.subr.mxu0 %v2689
    %3101 = vmatpush1.msra.mxu0 %v2688
    %3102 = vmatprep.subr.mxu0 %v2693
    %3103 = vmatpush1.msra.mxu0 %v2692
    %3104 = vmatprep.subr.mxu0 %v2697
    %3105 = vmatpush1.msra.mxu0 %v2696
    %3106 = vmatprep.subr.mxu0 %v2701
    %3107 = vmatpush1.msra.mxu0 %v2700
    %3108 = vmatprep.subr.mxu0 %v2705
    %3109 = vmatpush1.msra.mxu0 %v2704
    %3110 = vmatprep.subr.mxu0 %v2709
    %3111 = vmatpush1.msra.mxu0 %v2708
    %3112 = vmatprep.subr.mxu0 %v2713
    %3113 = vmatpush1.msra.mxu0 %v2712
    %3114 = vmatprep.subr.mxu0 %v2717
    %3115 = vmatpush1.msra.mxu0 %v2716
    %3116 = vmatprep.subr.mxu0 %v2721
    %3117 = vmatpush1.msra.mxu0 %v2720
    %3118 = vmatprep.subr.mxu0 %v2725
    %3119 = vmatpush1.msra.mxu0 %v2724
    %3120 = vmatprep.subr.mxu0 %v2729
    %3121 = vmatpush1.msra.mxu0 %v2728
    %3122 = vmatprep.subr.mxu0 %v2733
    %3123 = vmatpush1.msra.mxu0 %v2732
    %3124 = vmatprep.subr.mxu0 %v2737
    %3125 = vmatpush1.msra.mxu0 %v2736
    %3126 = vmatprep.subr.mxu0 %v2741
    %3127 = vmatpush1.msra.mxu0 %v2740
    %3128 = vmatprep.subr.mxu0 %v2745
    %3129 = vmatpush1.msra.mxu0 %v2744
    %3130 = vmatprep.subr.mxu0 %v2749
    %3131 = vmatpush1.msra.mxu0 %v2748
    %3132 = vmatprep.subr.mxu0 0.0
    %3133 = vmatpush1.msra.mxu0 0.0
    %3134 = vmatprep.subr.mxu0 0.0
    %3135 = vmatpush1.msra.mxu0 0.0
    %3136 = vmatprep.subr.mxu0 0.0
    %3137 = vmatpush1.msra.mxu0 0.0
    %3138 = vmatprep.subr.mxu0 0.0
    %3139 = vmatpush1.msra.mxu0 0.0
    %3140 = vmatprep.subr.mxu0 0.0
    %3141 = vmatpush1.msra.mxu0 0.0
    %3142 = vmatprep.subr.mxu0 0.0
    %3143 = vmatpush1.msra.mxu0 0.0
    %3144 = vmatprep.subr.mxu0 0.0
    %3145 = vmatpush1.msra.mxu0 0.0
    %3146 = vmatprep.subr.mxu0 0.0
    %3147 = vmatpush1.msra.mxu0 0.0
    %3148 = vmatprep.subr.mxu0 0.0
    %3149 = vmatpush1.msra.mxu0 0.0
    %3150 = vmatprep.subr.mxu0 0.0
    %3151 = vmatpush1.msra.mxu0 0.0
    %3152 = vmatprep.subr.mxu0 0.0
    %3153 = vmatpush1.msra.mxu0 0.0
    %3154 = vmatprep.subr.mxu0 0.0
    %3155 = vmatpush1.msra.mxu0 0.0
    %3156 = vmatprep.subr.mxu0 0.0
    %3157 = vmatpush1.msra.mxu0 0.0
    %3158 = vmatprep.subr.mxu0 0.0
    %3159 = vmatpush1.msra.mxu0 0.0
    %3160 = vmatprep.subr.mxu0 0.0
    %3161 = vmatpush1.msra.mxu0 0.0
    %3162 = vmatprep.subr.mxu0 0.0
    %3163 = vmatpush1.msra.mxu0 0.0
    %3164 = vmatprep.mubr.f32.mxu0 0.0
    %3165 = vmatmul.mubr.f32.gmra.mrb[0].mxu0 %v3095
    %v3166 = vpop.f32.mrb[0].mxu0
    %v3167 = vadd.f32 0.0, %v3166
    %v3168 = vpop.f32.mrb[0].mxu0
    %v3169 = vadd.f32 0.0, %v3168
    %3170 = vdwg.mxu0
    %3171 = vmatprep.subr.mxu0 %v2691
    %3172 = vmatpush1.msra.mxu0 %v2690
    %3173 = vmatprep.subr.mxu0 %v2695
    %3174 = vmatpush1.msra.mxu0 %v2694
    %3175 = vmatprep.subr.mxu0 %v2699
    %3176 = vmatpush1.msra.mxu0 %v2698
    %3177 = vmatprep.subr.mxu0 %v2703
    %3178 = vmatpush1.msra.mxu0 %v2702
    %3179 = vmatprep.subr.mxu0 %v2707
    %3180 = vmatpush1.msra.mxu0 %v2706
    %3181 = vmatprep.subr.mxu0 %v2711
    %3182 = vmatpush1.msra.mxu0 %v2710
    %3183 = vmatprep.subr.mxu0 %v2715
    %3184 = vmatpush1.msra.mxu0 %v2714
    %3185 = vmatprep.subr.mxu0 %v2719
    %3186 = vmatpush1.msra.mxu0 %v2718
    %3187 = vmatprep.subr.mxu0 %v2723
    %3188 = vmatpush1.msra.mxu0 %v2722
    %3189 = vmatprep.subr.mxu0 %v2727
    %3190 = vmatpush1.msra.mxu0 %v2726
    %3191 = vmatprep.subr.mxu0 %v2731
    %3192 = vmatpush1.msra.mxu0 %v2730
    %3193 = vmatprep.subr.mxu0 %v2735
    %3194 = vmatpush1.msra.mxu0 %v2734
    %3195 = vmatprep.subr.mxu0 %v2739
    %3196 = vmatpush1.msra.mxu0 %v2738
    %3197 = vmatprep.subr.mxu0 %v2743
    %3198 = vmatpush1.msra.mxu0 %v2742
    %3199 = vmatprep.subr.mxu0 %v2747
    %3200 = vmatpush1.msra.mxu0 %v2746
    %3201 = vmatprep.subr.mxu0 %v2751
    %3202 = vmatpush1.msra.mxu0 %v2750
    %3203 = vmatprep.subr.mxu0 0.0
    %3204 = vmatpush1.msra.mxu0 0.0
    %3205 = vmatprep.subr.mxu0 0.0
    %3206 = vmatpush1.msra.mxu0 0.0
    %3207 = vmatprep.subr.mxu0 0.0
    %3208 = vmatpush1.msra.mxu0 0.0
    %3209 = vmatprep.subr.mxu0 0.0
    %3210 = vmatpush1.msra.mxu0 0.0
    %3211 = vmatprep.subr.mxu0 0.0
    %3212 = vmatpush1.msra.mxu0 0.0
    %3213 = vmatprep.subr.mxu0 0.0
    %3214 = vmatpush1.msra.mxu0 0.0
    %3215 = vmatprep.subr.mxu0 0.0
    %3216 = vmatpush1.msra.mxu0 0.0
    %3217 = vmatprep.subr.mxu0 0.0
    %3218 = vmatpush1.msra.mxu0 0.0
    %3219 = vmatprep.subr.mxu0 0.0
    %3220 = vmatpush1.msra.mxu0 0.0
    %3221 = vmatprep.subr.mxu0 0.0
    %3222 = vmatpush1.msra.mxu0 0.0
    %3223 = vmatprep.subr.mxu0 0.0
    %3224 = vmatpush1.msra.mxu0 0.0
    %3225 = vmatprep.subr.mxu0 0.0
    %3226 = vmatpush1.msra.mxu0 0.0
    %3227 = vmatprep.subr.mxu0 0.0
    %3228 = vmatpush1.msra.mxu0 0.0
    %3229 = vmatprep.subr.mxu0 0.0
    %3230 = vmatpush1.msra.mxu0 0.0
    %3231 = vmatprep.subr.mxu0 0.0
    %3232 = vmatpush1.msra.mxu0 0.0
    %3233 = vmatprep.subr.mxu0 0.0
    %3234 = vmatpush1.msra.mxu0 0.0
    %3235 = vmatprep.mubr.f32.mxu0 0.0
    %3236 = vmatmul.mubr.f32.gmra.mrb[0].mxu0 %v3095
    %v3237 = vpop.f32.mrb[0].mxu0
    %v3238 = vadd.f32 0.0, %v3237
    %v3239 = vpop.f32.mrb[0].mxu0
    %v3240 = vadd.f32 0.0, %v3239
    %3241 = vdwg.mxu0
    %v3242 = vadd.f32 %v3096, %v3167
    %v3243 = vadd.f32 %v3097, %v3169
    %v3244 = vadd.f32 %v3098, %v3238
    %v3245 = vadd.f32 %v3099, %v3240
    %v3246 = vxor.u32 %v3242, 2147483648
    %v3247 = vmul.f32 %v3246, 1.442695
    %v3248 = vpow.pop %v3247
    %v3249 = vadd.f32 %v3248, 1.0
    %v3250 = vrcp.pop %v3249
    %v3251 = vmul.f32 1.0, %v3250
    %v3252 = vxor.u32 %v3243, 2147483648
    %v3253 = vmul.f32 %v3252, 1.442695
    %v3254 = vpow.pop %v3253
    %v3255 = vadd.f32 %v3254, 1.0
    %v3256 = vrcp.pop %v3255
    %v3257 = vmul.f32 1.0, %v3256
    %v3258 = vtanh.pop %v3244
    %v3259 = vxor.u32 %v3245, 2147483648
    %v3260 = vmul.f32 %v3259, 1.442695
    %v3261 = vpow.pop %v3260
    %v3262 = vadd.f32 %v3261, 1.0
    %v3263 = vrcp.pop %v3262
    %v3264 = vmul.f32 1.0, %v3263
    %v3265 = vmul.f32 %v3257, %v3093
    %v3266 = vmul.f32 %v3251, %v3258
    %v3267 = vadd.f32 %v3265, %v3266
    %v3268 = vtanh.pop %v3267
    %v3269 = vmul.f32 %v3264, %v3268
    %v3270 = vld [vmem:[%s1119] sm:$0xff]
    %v3271 = vld [vmem:[%s1119 + $0x8] sm:$0xff]
    %v3272 = vld [vmem:[%s1119 + $0x10] sm:$0xff]
    %v3273 = vld [vmem:[%s1119 + $0x18] sm:$0xff]
    %3274 = vmatprep.subr.mxu0 %v2689
    %3275 = vmatpush1.msra.mxu0 %v2688
    %3276 = vmatprep.subr.mxu0 %v2693
    %3277 = vmatpush1.msra.mxu0 %v2692
    %3278 = vmatprep.subr.mxu0 %v2697
    %3279 = vmatpush1.msra.mxu0 %v2696
    %3280 = vmatprep.subr.mxu0 %v2701
    %3281 = vmatpush1.msra.mxu0 %v2700
    %3282 = vmatprep.subr.mxu0 %v2705
    %3283 = vmatpush1.msra.mxu0 %v2704
    %3284 = vmatprep.subr.mxu0 %v2709
    %3285 = vmatpush1.msra.mxu0 %v2708
    %3286 = vmatprep.subr.mxu0 %v2713
    %3287 = vmatpush1.msra.mxu0 %v2712
    %3288 = vmatprep.subr.mxu0 %v2717
    %3289 = vmatpush1.msra.mxu0 %v2716
    %3290 = vmatprep.subr.mxu0 %v2721
    %3291 = vmatpush1.msra.mxu0 %v2720
    %3292 = vmatprep.subr.mxu0 %v2725
    %3293 = vmatpush1.msra.mxu0 %v2724
    %3294 = vmatprep.subr.mxu0 %v2729
    %3295 = vmatpush1.msra.mxu0 %v2728
    %3296 = vmatprep.subr.mxu0 %v2733
    %3297 = vmatpush1.msra.mxu0 %v2732
    %3298 = vmatprep.subr.mxu0 %v2737
    %3299 = vmatpush1.msra.mxu0 %v2736
    %3300 = vmatprep.subr.mxu0 %v2741
    %3301 = vmatpush1.msra.mxu0 %v2740
    %3302 = vmatprep.subr.mxu0 %v2745
    %3303 = vmatpush1.msra.mxu0 %v2744
    %3304 = vmatprep.subr.mxu0 %v2749
    %3305 = vmatpush1.msra.mxu0 %v2748
    %3306 = vmatprep.subr.mxu0 0.0
    %3307 = vmatpush1.msra.mxu0 0.0
    %3308 = vmatprep.subr.mxu0 0.0
    %3309 = vmatpush1.msra.mxu0 0.0
    %3310 = vmatprep.subr.mxu0 0.0
    %3311 = vmatpush1.msra.mxu0 0.0
    %3312 = vmatprep.subr.mxu0 0.0
    %3313 = vmatpush1.msra.mxu0 0.0
    %3314 = vmatprep.subr.mxu0 0.0
    %3315 = vmatpush1.msra.mxu0 0.0
    %3316 = vmatprep.subr.mxu0 0.0
    %3317 = vmatpush1.msra.mxu0 0.0
    %3318 = vmatprep.subr.mxu0 0.0
    %3319 = vmatpush1.msra.mxu0 0.0
    %3320 = vmatprep.subr.mxu0 0.0
    %3321 = vmatpush1.msra.mxu0 0.0
    %3322 = vmatprep.subr.mxu0 0.0
    %3323 = vmatpush1.msra.mxu0 0.0
    %3324 = vmatprep.subr.mxu0 0.0
    %3325 = vmatpush1.msra.mxu0 0.0
    %3326 = vmatprep.subr.mxu0 0.0
    %3327 = vmatpush1.msra.mxu0 0.0
    %3328 = vmatprep.subr.mxu0 0.0
    %3329 = vmatpush1.msra.mxu0 0.0
    %3330 = vmatprep.subr.mxu0 0.0
    %3331 = vmatpush1.msra.mxu0 0.0
    %3332 = vmatprep.subr.mxu0 0.0
    %3333 = vmatpush1.msra.mxu0 0.0
    %3334 = vmatprep.subr.mxu0 0.0
    %3335 = vmatpush1.msra.mxu0 0.0
    %3336 = vmatprep.subr.mxu0 0.0
    %3337 = vmatpush1.msra.mxu0 0.0
    %3338 = vmatprep.mubr.f32.mxu0 0.0
    %3339 = vmatmul.mubr.f32.gmra.mrb[0].mxu0 %v3269
    %v3340 = vpop.f32.mrb[0].mxu0
    %v3341 = vadd.f32 0.0, %v3340
    %v3342 = vpop.f32.mrb[0].mxu0
    %v3343 = vadd.f32 0.0, %v3342
    %3344 = vdwg.mxu0
    %3345 = vmatprep.subr.mxu0 %v2691
    %3346 = vmatpush1.msra.mxu0 %v2690
    %3347 = vmatprep.subr.mxu0 %v2695
    %3348 = vmatpush1.msra.mxu0 %v2694
    %3349 = vmatprep.subr.mxu0 %v2699
    %3350 = vmatpush1.msra.mxu0 %v2698
    %3351 = vmatprep.subr.mxu0 %v2703
    %3352 = vmatpush1.msra.mxu0 %v2702
    %3353 = vmatprep.subr.mxu0 %v2707
    %3354 = vmatpush1.msra.mxu0 %v2706
    %3355 = vmatprep.subr.mxu0 %v2711
    %3356 = vmatpush1.msra.mxu0 %v2710
    %3357 = vmatprep.subr.mxu0 %v2715
    %3358 = vmatpush1.msra.mxu0 %v2714
    %3359 = vmatprep.subr.mxu0 %v2719
    %3360 = vmatpush1.msra.mxu0 %v2718
    %3361 = vmatprep.subr.mxu0 %v2723
    %3362 = vmatpush1.msra.mxu0 %v2722
    %3363 = vmatprep.subr.mxu0 %v2727
    %3364 = vmatpush1.msra.mxu0 %v2726
    %3365 = vmatprep.subr.mxu0 %v2731
    %3366 = vmatpush1.msra.mxu0 %v2730
    %3367 = vmatprep.subr.mxu0 %v2735
    %3368 = vmatpush1.msra.mxu0 %v2734
    %3369 = vmatprep.subr.mxu0 %v2739
    %3370 = vmatpush1.msra.mxu0 %v2738
    %3371 = vmatprep.subr.mxu0 %v2743
    %3372 = vmatpush1.msra.mxu0 %v2742
    %3373 = vmatprep.subr.mxu0 %v2747
    %3374 = vmatpush1.msra.mxu0 %v2746
    %3375 = vmatprep.subr.mxu0 %v2751
    %3376 = vmatpush1.msra.mxu0 %v2750
    %3377 = vmatprep.subr.mxu0 0.0
    %3378 = vmatpush1.msra.mxu0 0.0
    %3379 = vmatprep.subr.mxu0 0.0
    %3380 = vmatpush1.msra.mxu0 0.0
    %3381 = vmatprep.subr.mxu0 0.0
    %3382 = vmatpush1.msra.mxu0 0.0
    %3383 = vmatprep.subr.mxu0 0.0
    %3384 = vmatpush1.msra.mxu0 0.0
    %3385 = vmatprep.subr.mxu0 0.0
    %3386 = vmatpush1.msra.mxu0 0.0
    %3387 = vmatprep.subr.mxu0 0.0
    %3388 = vmatpush1.msra.mxu0 0.0
    %3389 = vmatprep.subr.mxu0 0.0
    %3390 = vmatpush1.msra.mxu0 0.0
    %3391 = vmatprep.subr.mxu0 0.0
    %3392 = vmatpush1.msra.mxu0 0.0
    %3393 = vmatprep.subr.mxu0 0.0
    %3394 = vmatpush1.msra.mxu0 0.0
    %3395 = vmatprep.subr.mxu0 0.0
    %3396 = vmatpush1.msra.mxu0 0.0
    %3397 = vmatprep.subr.mxu0 0.0
    %3398 = vmatpush1.msra.mxu0 0.0
    %3399 = vmatprep.subr.mxu0 0.0
    %3400 = vmatpush1.msra.mxu0 0.0
    %3401 = vmatprep.subr.mxu0 0.0
    %3402 = vmatpush1.msra.mxu0 0.0
    %3403 = vmatprep.subr.mxu0 0.0
    %3404 = vmatpush1.msra.mxu0 0.0
    %3405 = vmatprep.subr.mxu0 0.0
    %3406 = vmatpush1.msra.mxu0 0.0
    %3407 = vmatprep.subr.mxu0 0.0
    %3408 = vmatpush1.msra.mxu0 0.0
    %3409 = vmatprep.mubr.f32.mxu0 0.0
    %3410 = vmatmul.mubr.f32.gmra.mrb[0].mxu0 %v3269
    %v3411 = vpop.f32.mrb[0].mxu0
    %v3412 = vadd.f32 0.0, %v3411
    %v3413 = vpop.f32.mrb[0].mxu0
    %v3414 = vadd.f32 0.0, %v3413
    %3415 = vdwg.mxu0
    %v3416 = vadd.f32 %v3270, %v3341
    %v3417 = vadd.f32 %v3271, %v3343
    %v3418 = vadd.f32 %v3272, %v3412
    %v3419 = vadd.f32 %v3273, %v3414
    %v3420 = vxor.u32 %v3416, 2147483648
    %v3421 = vmul.f32 %v3420, 1.442695
    %v3422 = vpow.pop %v3421
    %v3423 = vadd.f32 %v3422, 1.0
    %v3424 = vrcp.pop %v3423
    %v3425 = vmul.f32 1.0, %v3424
    %v3426 = vxor.u32 %v3417, 2147483648
    %v3427 = vmul.f32 %v3426, 1.442695
    %v3428 = vpow.pop %v3427
    %v3429 = vadd.f32 %v3428, 1.0
    %v3430 = vrcp.pop %v3429
    %v3431 = vmul.f32 1.0, %v3430
    %v3432 = vtanh.pop %v3418
    %v3433 = vxor.u32 %v3419, 2147483648
    %v3434 = vmul.f32 %v3433, 1.442695
    %v3435 = vpow.pop %v3434
    %v3436 = vadd.f32 %v3435, 1.0
    %v3437 = vrcp.pop %v3436
    %v3438 = vmul.f32 1.0, %v3437
    %v3439 = vmul.f32 %v3431, %v3267
    %v3440 = vmul.f32 %v3425, %v3432
    %v3441 = vadd.f32 %v3439, %v3440
    %v3442 = vtanh.pop %v3441
    %v3443 = vmul.f32 %v3438, %v3442
    %v3444 = vld [vmem:[%s1362] sm:$0xff]
    %v3445 = vld [vmem:[%s1362 + $0x8] sm:$0xff]
    %v3446 = vld [vmem:[%s1362 + $0x10] sm:$0xff]
    %v3447 = vld [vmem:[%s1362 + $0x18] sm:$0xff]
    %3448 = vmatprep.subr.mxu0 %v2689
    %3449 = vmatpush1.msra.mxu0 %v2688
    %3450 = vmatprep.subr.mxu0 %v2693
    %3451 = vmatpush1.msra.mxu0 %v2692
    %3452 = vmatprep.subr.mxu0 %v2697
    %3453 = vmatpush1.msra.mxu0 %v2696
    %3454 = vmatprep.subr.mxu0 %v2701
    %3455 = vmatpush1.msra.mxu0 %v2700
    %3456 = vmatprep.subr.mxu0 %v2705
    %3457 = vmatpush1.msra.mxu0 %v2704
    %3458 = vmatprep.subr.mxu0 %v2709
    %3459 = vmatpush1.msra.mxu0 %v2708
    %3460 = vmatprep.subr.mxu0 %v2713
    %3461 = vmatpush1.msra.mxu0 %v2712
    %3462 = vmatprep.subr.mxu0 %v2717
    %3463 = vmatpush1.msra.mxu0 %v2716
    %3464 = vmatprep.subr.mxu0 %v2721
    %3465 = vmatpush1.msra.mxu0 %v2720
    %3466 = vmatprep.subr.mxu0 %v2725
    %3467 = vmatpush1.msra.mxu0 %v2724
    %3468 = vmatprep.subr.mxu0 %v2729
    %3469 = vmatpush1.msra.mxu0 %v2728
    %3470 = vmatprep.subr.mxu0 %v2733
    %3471 = vmatpush1.msra.mxu0 %v2732
    %3472 = vmatprep.subr.mxu0 %v2737
    %3473 = vmatpush1.msra.mxu0 %v2736
    %3474 = vmatprep.subr.mxu0 %v2741
    %3475 = vmatpush1.msra.mxu0 %v2740
    %3476 = vmatprep.subr.mxu0 %v2745
    %3477 = vmatpush1.msra.mxu0 %v2744
    %3478 = vmatprep.subr.mxu0 %v2749
    %3479 = vmatpush1.msra.mxu0 %v2748
    %3480 = vmatprep.subr.mxu0 0.0
    %3481 = vmatpush1.msra.mxu0 0.0
    %3482 = vmatprep.subr.mxu0 0.0
    %3483 = vmatpush1.msra.mxu0 0.0
    %3484 = vmatprep.subr.mxu0 0.0
    %3485 = vmatpush1.msra.mxu0 0.0
    %3486 = vmatprep.subr.mxu0 0.0
    %3487 = vmatpush1.msra.mxu0 0.0
    %3488 = vmatprep.subr.mxu0 0.0
    %3489 = vmatpush1.msra.mxu0 0.0
    %3490 = vmatprep.subr.mxu0 0.0
    %3491 = vmatpush1.msra.mxu0 0.0
    %3492 = vmatprep.subr.mxu0 0.0
    %3493 = vmatpush1.msra.mxu0 0.0
    %3494 = vmatprep.subr.mxu0 0.0
    %3495 = vmatpush1.msra.mxu0 0.0
    %3496 = vmatprep.subr.mxu0 0.0
    %3497 = vmatpush1.msra.mxu0 0.0
    %3498 = vmatprep.subr.mxu0 0.0
    %3499 = vmatpush1.msra.mxu0 0.0
    %3500 = vmatprep.subr.mxu0 0.0
    %3501 = vmatpush1.msra.mxu0 0.0
    %3502 = vmatprep.subr.mxu0 0.0
    %3503 = vmatpush1.msra.mxu0 0.0
    %3504 = vmatprep.subr.mxu0 0.0
    %3505 = vmatpush1.msra.mxu0 0.0
    %3506 = vmatprep.subr.mxu0 0.0
    %3507 = vmatpush1.msra.mxu0 0.0
    %3508 = vmatprep.subr.mxu0 0.0
    %3509 = vmatpush1.msra.mxu0 0.0
    %3510 = vmatprep.subr.mxu0 0.0
    %3511 = vmatpush1.msra.mxu0 0.0
    %3512 = vmatprep.mubr.f32.mxu0 0.0
    %3513 = vmatmul.mubr.f32.gmra.mrb[0].mxu0 %v3443
    %v3514 = vpop.f32.mrb[0].mxu0
    %v3515 = vadd.f32 0.0, %v3514
    %v3516 = vpop.f32.mrb[0].mxu0
    %v3517 = vadd.f32 0.0, %v3516
    %3518 = vdwg.mxu0
    %3519 = vmatprep.subr.mxu0 %v2691
    %3520 = vmatpush1.msra.mxu0 %v2690
    %3521 = vmatprep.subr.mxu0 %v2695
    %3522 = vmatpush1.msra.mxu0 %v2694
    %3523 = vmatprep.subr.mxu0 %v2699
    %3524 = vmatpush1.msra.mxu0 %v2698
    %3525 = vmatprep.subr.mxu0 %v2703
    %3526 = vmatpush1.msra.mxu0 %v2702
    %3527 = vmatprep.subr.mxu0 %v2707
    %3528 = vmatpush1.msra.mxu0 %v2706
    %3529 = vmatprep.subr.mxu0 %v2711
    %3530 = vmatpush1.msra.mxu0 %v2710
    %3531 = vmatprep.subr.mxu0 %v2715
    %3532 = vmatpush1.msra.mxu0 %v2714
    %3533 = vmatprep.subr.mxu0 %v2719
    %3534 = vmatpush1.msra.mxu0 %v2718
    %3535 = vmatprep.subr.mxu0 %v2723
    %3536 = vmatpush1.msra.mxu0 %v2722
    %3537 = vmatprep.subr.mxu0 %v2727
    %3538 = vmatpush1.msra.mxu0 %v2726
    %3539 = vmatprep.subr.mxu0 %v2731
    %3540 = vmatpush1.msra.mxu0 %v2730
    %3541 = vmatprep.subr.mxu0 %v2735
    %3542 = vmatpush1.msra.mxu0 %v2734
    %3543 = vmatprep.subr.mxu0 %v2739
    %3544 = vmatpush1.msra.mxu0 %v2738
    %3545 = vmatprep.subr.mxu0 %v2743
    %3546 = vmatpush1.msra.mxu0 %v2742
    %3547 = vmatprep.subr.mxu0 %v2747
    %3548 = vmatpush1.msra.mxu0 %v2746
    %3549 = vmatprep.subr.mxu0 %v2751
    %3550 = vmatpush1.msra.mxu0 %v2750
    %3551 = vmatprep.subr.mxu0 0.0
    %3552 = vmatpush1.msra.mxu0 0.0
    %3553 = vmatprep.subr.mxu0 0.0
    %3554 = vmatpush1.msra.mxu0 0.0
    %3555 = vmatprep.subr.mxu0 0.0
    %3556 = vmatpush1.msra.mxu0 0.0
    %3557 = vmatprep.subr.mxu0 0.0
    %3558 = vmatpush1.msra.mxu0 0.0
    %3559 = vmatprep.subr.mxu0 0.0
    %3560 = vmatpush1.msra.mxu0 0.0
    %3561 = vmatprep.subr.mxu0 0.0
    %3562 = vmatpush1.msra.mxu0 0.0
    %3563 = vmatprep.subr.mxu0 0.0
    %3564 = vmatpush1.msra.mxu0 0.0
    %3565 = vmatprep.subr.mxu0 0.0
    %3566 = vmatpush1.msra.mxu0 0.0
    %3567 = vmatprep.subr.mxu0 0.0
    %3568 = vmatpush1.msra.mxu0 0.0
    %3569 = vmatprep.subr.mxu0 0.0
    %3570 = vmatpush1.msra.mxu0 0.0
    %3571 = vmatprep.subr.mxu0 0.0
    %3572 = vmatpush1.msra.mxu0 0.0
    %3573 = vmatprep.subr.mxu0 0.0
    %3574 = vmatpush1.msra.mxu0 0.0
    %3575 = vmatprep.subr.mxu0 0.0
    %3576 = vmatpush1.msra.mxu0 0.0
    %3577 = vmatprep.subr.mxu0 0.0
    %3578 = vmatpush1.msra.mxu0 0.0
    %3579 = vmatprep.subr.mxu0 0.0
    %3580 = vmatpush1.msra.mxu0 0.0
    %3581 = vmatprep.subr.mxu0 0.0
    %3582 = vmatpush1.msra.mxu0 0.0
    %3583 = vmatprep.mubr.f32.mxu0 0.0
    %3584 = vmatmul.mubr.f32.gmra.mrb[0].mxu0 %v3443
    %v3585 = vpop.f32.mrb[0].mxu0
    %v3586 = vadd.f32 0.0, %v3585
    %v3587 = vpop.f32.mrb[0].mxu0
    %v3588 = vadd.f32 0.0, %v3587
    %3589 = vdwg.mxu0
    %v3590 = vadd.f32 %v3444, %v3515
    %v3591 = vadd.f32 %v3445, %v3517
    %v3592 = vadd.f32 %v3446, %v3586
    %v3593 = vadd.f32 %v3447, %v3588
    %v3594 = vxor.u32 %v3590, 2147483648
    %v3595 = vmul.f32 %v3594, 1.442695
    %v3596 = vpow.pop %v3595
    %v3597 = vadd.f32 %v3596, 1.0
    %v3598 = vrcp.pop %v3597
    %v3599 = vmul.f32 1.0, %v3598
    %v3600 = vxor.u32 %v3591, 2147483648
    %v3601 = vmul.f32 %v3600, 1.442695
    %v3602 = vpow.pop %v3601
    %v3603 = vadd.f32 %v3602, 1.0
    %v3604 = vrcp.pop %v3603
    %v3605 = vmul.f32 1.0, %v3604
    %v3606 = vtanh.pop %v3592
    %v3607 = vxor.u32 %v3593, 2147483648
    %v3608 = vmul.f32 %v3607, 1.442695
    %v3609 = vpow.pop %v3608
    %v3610 = vadd.f32 %v3609, 1.0
    %v3611 = vrcp.pop %v3610
    %v3612 = vmul.f32 1.0, %v3611
    %v3613 = vmul.f32 %v3605, %v3441
    %v3614 = vmul.f32 %v3599, %v3606
    %v3615 = vadd.f32 %v3613, %v3614
    %v3616 = vtanh.pop %v3615
    %v3617 = vmul.f32 %v3612, %v3616
    %v3618 = vld [vmem:[%s1605] sm:$0xff]
    %v3619 = vld [vmem:[%s1605 + $0x8] sm:$0xff]
    %v3620 = vld [vmem:[%s1605 + $0x10] sm:$0xff]
    %v3621 = vld [vmem:[%s1605 + $0x18] sm:$0xff]
    %3622 = vmatprep.subr.mxu0 %v2689
    %3623 = vmatpush1.msra.mxu0 %v2688
    %3624 = vmatprep.subr.mxu0 %v2693
    %3625 = vmatpush1.msra.mxu0 %v2692
    %3626 = vmatprep.subr.mxu0 %v2697
    %3627 = vmatpush1.msra.mxu0 %v2696
    %3628 = vmatprep.subr.mxu0 %v2701
    %3629 = vmatpush1.msra.mxu0 %v2700
    %3630 = vmatprep.subr.mxu0 %v2705
    %3631 = vmatpush1.msra.mxu0 %v2704
    %3632 = vmatprep.subr.mxu0 %v2709
    %3633 = vmatpush1.msra.mxu0 %v2708
    %3634 = vmatprep.subr.mxu0 %v2713
    %3635 = vmatpush1.msra.mxu0 %v2712
    %3636 = vmatprep.subr.mxu0 %v2717
    %3637 = vmatpush1.msra.mxu0 %v2716
    %3638 = vmatprep.subr.mxu0 %v2721
    %3639 = vmatpush1.msra.mxu0 %v2720
    %3640 = vmatprep.subr.mxu0 %v2725
    %3641 = vmatpush1.msra.mxu0 %v2724
    %3642 = vmatprep.subr.mxu0 %v2729
    %3643 = vmatpush1.msra.mxu0 %v2728
    %3644 = vmatprep.subr.mxu0 %v2733
    %3645 = vmatpush1.msra.mxu0 %v2732
    %3646 = vmatprep.subr.mxu0 %v2737
    %3647 = vmatpush1.msra.mxu0 %v2736
    %3648 = vmatprep.subr.mxu0 %v2741
    %3649 = vmatpush1.msra.mxu0 %v2740
    %3650 = vmatprep.subr.mxu0 %v2745
    %3651 = vmatpush1.msra.mxu0 %v2744
    %3652 = vmatprep.subr.mxu0 %v2749
    %3653 = vmatpush1.msra.mxu0 %v2748
    %3654 = vmatprep.subr.mxu0 0.0
    %3655 = vmatpush1.msra.mxu0 0.0
    %3656 = vmatprep.subr.mxu0 0.0
    %3657 = vmatpush1.msra.mxu0 0.0
    %3658 = vmatprep.subr.mxu0 0.0
    %3659 = vmatpush1.msra.mxu0 0.0
    %3660 = vmatprep.subr.mxu0 0.0
    %3661 = vmatpush1.msra.mxu0 0.0
    %3662 = vmatprep.subr.mxu0 0.0
    %3663 = vmatpush1.msra.mxu0 0.0
    %3664 = vmatprep.subr.mxu0 0.0
    %3665 = vmatpush1.msra.mxu0 0.0
    %3666 = vmatprep.subr.mxu0 0.0
    %3667 = vmatpush1.msra.mxu0 0.0
    %3668 = vmatprep.subr.mxu0 0.0
    %3669 = vmatpush1.msra.mxu0 0.0
    %3670 = vmatprep.subr.mxu0 0.0
    %3671 = vmatpush1.msra.mxu0 0.0
    %3672 = vmatprep.subr.mxu0 0.0
    %3673 = vmatpush1.msra.mxu0 0.0
    %3674 = vmatprep.subr.mxu0 0.0
    %3675 = vmatpush1.msra.mxu0 0.0
    %3676 = vmatprep.subr.mxu0 0.0
    %3677 = vmatpush1.msra.mxu0 0.0
    %3678 = vmatprep.subr.mxu0 0.0
    %3679 = vmatpush1.msra.mxu0 0.0
    %3680 = vmatprep.subr.mxu0 0.0
    %3681 = vmatpush1.msra.mxu0 0.0
    %3682 = vmatprep.subr.mxu0 0.0
    %3683 = vmatpush1.msra.mxu0 0.0
    %3684 = vmatprep.subr.mxu0 0.0
    %3685 = vmatpush1.msra.mxu0 0.0
    %3686 = vmatprep.mubr.f32.mxu0 0.0
    %3687 = vmatmul.mubr.f32.gmra.mrb[0].mxu0 %v3617
    %v3688 = vpop.f32.mrb[0].mxu0
    %v3689 = vadd.f32 0.0, %v3688
    %v3690 = vpop.f32.mrb[0].mxu0
    %v3691 = vadd.f32 0.0, %v3690
    %3692 = vdwg.mxu0
    %3693 = vmatprep.subr.mxu0 %v2691
    %3694 = vmatpush1.msra.mxu0 %v2690
    %3695 = vmatprep.subr.mxu0 %v2695
    %3696 = vmatpush1.msra.mxu0 %v2694
    %3697 = vmatprep.subr.mxu0 %v2699
    %3698 = vmatpush1.msra.mxu0 %v2698
    %3699 = vmatprep.subr.mxu0 %v2703
    %3700 = vmatpush1.msra.mxu0 %v2702
    %3701 = vmatprep.subr.mxu0 %v2707
    %3702 = vmatpush1.msra.mxu0 %v2706
    %3703 = vmatprep.subr.mxu0 %v2711
    %3704 = vmatpush1.msra.mxu0 %v2710
    %3705 = vmatprep.subr.mxu0 %v2715
    %3706 = vmatpush1.msra.mxu0 %v2714
    %3707 = vmatprep.subr.mxu0 %v2719
    %3708 = vmatpush1.msra.mxu0 %v2718
    %3709 = vmatprep.subr.mxu0 %v2723
    %3710 = vmatpush1.msra.mxu0 %v2722
    %3711 = vmatprep.subr.mxu0 %v2727
    %3712 = vmatpush1.msra.mxu0 %v2726
    %3713 = vmatprep.subr.mxu0 %v2731
    %3714 = vmatpush1.msra.mxu0 %v2730
    %3715 = vmatprep.subr.mxu0 %v2735
    %3716 = vmatpush1.msra.mxu0 %v2734
    %3717 = vmatprep.subr.mxu0 %v2739
    %3718 = vmatpush1.msra.mxu0 %v2738
    %3719 = vmatprep.subr.mxu0 %v2743
    %3720 = vmatpush1.msra.mxu0 %v2742
    %3721 = vmatprep.subr.mxu0 %v2747
    %3722 = vmatpush1.msra.mxu0 %v2746
    %3723 = vmatprep.subr.mxu0 %v2751
    %3724 = vmatpush1.msra.mxu0 %v2750
    %3725 = vmatprep.subr.mxu0 0.0
    %3726 = vmatpush1.msra.mxu0 0.0
    %3727 = vmatprep.subr.mxu0 0.0
    %3728 = vmatpush1.msra.mxu0 0.0
    %3729 = vmatprep.subr.mxu0 0.0
    %3730 = vmatpush1.msra.mxu0 0.0
    %3731 = vmatprep.subr.mxu0 0.0
    %3732 = vmatpush1.msra.mxu0 0.0
    %3733 = vmatprep.subr.mxu0 0.0
    %3734 = vmatpush1.msra.mxu0 0.0
    %3735 = vmatprep.subr.mxu0 0.0
    %3736 = vmatpush1.msra.mxu0 0.0
    %3737 = vmatprep.subr.mxu0 0.0
    %3738 = vmatpush1.msra.mxu0 0.0
    %3739 = vmatprep.subr.mxu0 0.0
    %3740 = vmatpush1.msra.mxu0 0.0
    %3741 = vmatprep.subr.mxu0 0.0
    %3742 = vmatpush1.msra.mxu0 0.0
    %3743 = vmatprep.subr.mxu0 0.0
    %3744 = vmatpush1.msra.mxu0 0.0
    %3745 = vmatprep.subr.mxu0 0.0
    %3746 = vmatpush1.msra.mxu0 0.0
    %3747 = vmatprep.subr.mxu0 0.0
    %3748 = vmatpush1.msra.mxu0 0.0
    %3749 = vmatprep.subr.mxu0 0.0
    %3750 = vmatpush1.msra.mxu0 0.0
    %3751 = vmatprep.subr.mxu0 0.0
    %3752 = vmatpush1.msra.mxu0 0.0
    %3753 = vmatprep.subr.mxu0 0.0
    %3754 = vmatpush1.msra.mxu0 0.0
    %3755 = vmatprep.subr.mxu0 0.0
    %3756 = vmatpush1.msra.mxu0 0.0
    %3757 = vmatprep.mubr.f32.mxu0 0.0
    %3758 = vmatmul.mubr.f32.gmra.mrb[0].mxu0 %v3617
    %v3759 = vpop.f32.mrb[0].mxu0
    %v3760 = vadd.f32 0.0, %v3759
    %v3761 = vpop.f32.mrb[0].mxu0
    %v3762 = vadd.f32 0.0, %v3761
    %3763 = vdwg.mxu0
    %v3764 = vadd.f32 %v3618, %v3689
    %v3765 = vadd.f32 %v3619, %v3691
    %v3766 = vadd.f32 %v3620, %v3760
    %v3767 = vadd.f32 %v3621, %v3762
    %v3768 = vxor.u32 %v3764, 2147483648
    %v3769 = vmul.f32 %v3768, 1.442695
    %v3770 = vpow.pop %v3769
    %v3771 = vadd.f32 %v3770, 1.0
    %v3772 = vrcp.pop %v3771
    %v3773 = vmul.f32 1.0, %v3772
    %v3774 = vxor.u32 %v3765, 2147483648
    %v3775 = vmul.f32 %v3774, 1.442695
    %v3776 = vpow.pop %v3775
    %v3777 = vadd.f32 %v3776, 1.0
    %v3778 = vrcp.pop %v3777
    %v3779 = vmul.f32 1.0, %v3778
    %v3780 = vtanh.pop %v3766
    %v3781 = vxor.u32 %v3767, 2147483648
    %v3782 = vmul.f32 %v3781, 1.442695
    %v3783 = vpow.pop %v3782
    %v3784 = vadd.f32 %v3783, 1.0
    %v3785 = vrcp.pop %v3784
    %v3786 = vmul.f32 1.0, %v3785
    %v3787 = vmul.f32 %v3779, %v3615
    %v3788 = vmul.f32 %v3773, %v3780
    %v3789 = vadd.f32 %v3787, %v3788
    %v3790 = vtanh.pop %v3789
    %v3791 = vmul.f32 %v3786, %v3790
    %v3792 = vld [vmem:[%s1848] sm:$0xff]
    %v3793 = vld [vmem:[%s1848 + $0x8] sm:$0xff]
    %v3794 = vld [vmem:[%s1848 + $0x10] sm:$0xff]
    %v3795 = vld [vmem:[%s1848 + $0x18] sm:$0xff]
    %3796 = vmatprep.subr.mxu0 %v2689
    %3797 = vmatpush1.msra.mxu0 %v2688
    %3798 = vmatprep.subr.mxu0 %v2693
    %3799 = vmatpush1.msra.mxu0 %v2692
    %3800 = vmatprep.subr.mxu0 %v2697
    %3801 = vmatpush1.msra.mxu0 %v2696
    %3802 = vmatprep.subr.mxu0 %v2701
    %3803 = vmatpush1.msra.mxu0 %v2700
    %3804 = vmatprep.subr.mxu0 %v2705
    %3805 = vmatpush1.msra.mxu0 %v2704
    %3806 = vmatprep.subr.mxu0 %v2709
    %3807 = vmatpush1.msra.mxu0 %v2708
    %3808 = vmatprep.subr.mxu0 %v2713
    %3809 = vmatpush1.msra.mxu0 %v2712
    %3810 = vmatprep.subr.mxu0 %v2717
    %3811 = vmatpush1.msra.mxu0 %v2716
    %3812 = vmatprep.subr.mxu0 %v2721
    %3813 = vmatpush1.msra.mxu0 %v2720
    %3814 = vmatprep.subr.mxu0 %v2725
    %3815 = vmatpush1.msra.mxu0 %v2724
    %3816 = vmatprep.subr.mxu0 %v2729
    %3817 = vmatpush1.msra.mxu0 %v2728
    %3818 = vmatprep.subr.mxu0 %v2733
    %3819 = vmatpush1.msra.mxu0 %v2732
    %3820 = vmatprep.subr.mxu0 %v2737
    %3821 = vmatpush1.msra.mxu0 %v2736
    %3822 = vmatprep.subr.mxu0 %v2741
    %3823 = vmatpush1.msra.mxu0 %v2740
    %3824 = vmatprep.subr.mxu0 %v2745
    %3825 = vmatpush1.msra.mxu0 %v2744
    %3826 = vmatprep.subr.mxu0 %v2749
    %3827 = vmatpush1.msra.mxu0 %v2748
    %3828 = vmatprep.subr.mxu0 0.0
    %3829 = vmatpush1.msra.mxu0 0.0
    %3830 = vmatprep.subr.mxu0 0.0
    %3831 = vmatpush1.msra.mxu0 0.0
    %3832 = vmatprep.subr.mxu0 0.0
    %3833 = vmatpush1.msra.mxu0 0.0
    %3834 = vmatprep.subr.mxu0 0.0
    %3835 = vmatpush1.msra.mxu0 0.0
    %3836 = vmatprep.subr.mxu0 0.0
    %3837 = vmatpush1.msra.mxu0 0.0
    %3838 = vmatprep.subr.mxu0 0.0
    %3839 = vmatpush1.msra.mxu0 0.0
    %3840 = vmatprep.subr.mxu0 0.0
    %3841 = vmatpush1.msra.mxu0 0.0
    %3842 = vmatprep.subr.mxu0 0.0
    %3843 = vmatpush1.msra.mxu0 0.0
    %3844 = vmatprep.subr.mxu0 0.0
    %3845 = vmatpush1.msra.mxu0 0.0
    %3846 = vmatprep.subr.mxu0 0.0
    %3847 = vmatpush1.msra.mxu0 0.0
    %3848 = vmatprep.subr.mxu0 0.0
    %3849 = vmatpush1.msra.mxu0 0.0
    %3850 = vmatprep.subr.mxu0 0.0
    %3851 = vmatpush1.msra.mxu0 0.0
    %3852 = vmatprep.subr.mxu0 0.0
    %3853 = vmatpush1.msra.mxu0 0.0
    %3854 = vmatprep.subr.mxu0 0.0
    %3855 = vmatpush1.msra.mxu0 0.0
    %3856 = vmatprep.subr.mxu0 0.0
    %3857 = vmatpush1.msra.mxu0 0.0
    %3858 = vmatprep.subr.mxu0 0.0
    %3859 = vmatpush1.msra.mxu0 0.0
    %3860 = vmatprep.mubr.f32.mxu0 0.0
    %3861 = vmatmul.mubr.f32.gmra.mrb[0].mxu0 %v3791
    %v3862 = vpop.f32.mrb[0].mxu0
    %v3863 = vadd.f32 0.0, %v3862
    %v3864 = vpop.f32.mrb[0].mxu0
    %v3865 = vadd.f32 0.0, %v3864
    %3866 = vdwg.mxu0
    %3867 = vmatprep.subr.mxu0 %v2691
    %3868 = vmatpush1.msra.mxu0 %v2690
    %3869 = vmatprep.subr.mxu0 %v2695
    %3870 = vmatpush1.msra.mxu0 %v2694
    %3871 = vmatprep.subr.mxu0 %v2699
    %3872 = vmatpush1.msra.mxu0 %v2698
    %3873 = vmatprep.subr.mxu0 %v2703
    %3874 = vmatpush1.msra.mxu0 %v2702
    %3875 = vmatprep.subr.mxu0 %v2707
    %3876 = vmatpush1.msra.mxu0 %v2706
    %3877 = vmatprep.subr.mxu0 %v2711
    %3878 = vmatpush1.msra.mxu0 %v2710
    %3879 = vmatprep.subr.mxu0 %v2715
    %3880 = vmatpush1.msra.mxu0 %v2714
    %3881 = vmatprep.subr.mxu0 %v2719
    %3882 = vmatpush1.msra.mxu0 %v2718
    %3883 = vmatprep.subr.mxu0 %v2723
    %3884 = vmatpush1.msra.mxu0 %v2722
    %3885 = vmatprep.subr.mxu0 %v2727
    %3886 = vmatpush1.msra.mxu0 %v2726
    %3887 = vmatprep.subr.mxu0 %v2731
    %3888 = vmatpush1.msra.mxu0 %v2730
    %3889 = vmatprep.subr.mxu0 %v2735
    %3890 = vmatpush1.msra.mxu0 %v2734
    %3891 = vmatprep.subr.mxu0 %v2739
    %3892 = vmatpush1.msra.mxu0 %v2738
    %3893 = vmatprep.subr.mxu0 %v2743
    %3894 = vmatpush1.msra.mxu0 %v2742
    %3895 = vmatprep.subr.mxu0 %v2747
    %3896 = vmatpush1.msra.mxu0 %v2746
    %3897 = vmatprep.subr.mxu0 %v2751
    %3898 = vmatpush1.msra.mxu0 %v2750
    %3899 = vmatprep.subr.mxu0 0.0
    %3900 = vmatpush1.msra.mxu0 0.0
    %3901 = vmatprep.subr.mxu0 0.0
    %3902 = vmatpush1.msra.mxu0 0.0
    %3903 = vmatprep.subr.mxu0 0.0
    %3904 = vmatpush1.msra.mxu0 0.0
    %3905 = vmatprep.subr.mxu0 0.0
    %3906 = vmatpush1.msra.mxu0 0.0
    %3907 = vmatprep.subr.mxu0 0.0
    %3908 = vmatpush1.msra.mxu0 0.0
    %3909 = vmatprep.subr.mxu0 0.0
    %3910 = vmatpush1.msra.mxu0 0.0
    %3911 = vmatprep.subr.mxu0 0.0
    %3912 = vmatpush1.msra.mxu0 0.0
    %3913 = vmatprep.subr.mxu0 0.0
    %3914 = vmatpush1.msra.mxu0 0.0
    %3915 = vmatprep.subr.mxu0 0.0
    %3916 = vmatpush1.msra.mxu0 0.0
    %3917 = vmatprep.subr.mxu0 0.0
    %3918 = vmatpush1.msra.mxu0 0.0
    %3919 = vmatprep.subr.mxu0 0.0
    %3920 = vmatpush1.msra.mxu0 0.0
    %3921 = vmatprep.subr.mxu0 0.0
    %3922 = vmatpush1.msra.mxu0 0.0
    %3923 = vmatprep.subr.mxu0 0.0
    %3924 = vmatpush1.msra.mxu0 0.0
    %3925 = vmatprep.subr.mxu0 0.0
    %3926 = vmatpush1.msra.mxu0 0.0
    %3927 = vmatprep.subr.mxu0 0.0
    %3928 = vmatpush1.msra.mxu0 0.0
    %3929 = vmatprep.subr.mxu0 0.0
    %3930 = vmatpush1.msra.mxu0 0.0
    %3931 = vmatprep.mubr.f32.mxu0 0.0
    %3932 = vmatmul.mubr.f32.gmra.mrb[0].mxu0 %v3791
    %v3933 = vpop.f32.mrb[0].mxu0
    %v3934 = vadd.f32 0.0, %v3933
    %v3935 = vpop.f32.mrb[0].mxu0
    %v3936 = vadd.f32 0.0, %v3935
    %3937 = vdwg.mxu0
    %v3938 = vadd.f32 %v3792, %v3863
    %v3939 = vadd.f32 %v3793, %v3865
    %v3940 = vadd.f32 %v3794, %v3934
    %v3941 = vadd.f32 %v3795, %v3936
    %v3942 = vxor.u32 %v3938, 2147483648
    %v3943 = vmul.f32 %v3942, 1.442695
    %v3944 = vpow.pop %v3943
    %v3945 = vadd.f32 %v3944, 1.0
    %v3946 = vrcp.pop %v3945
    %v3947 = vmul.f32 1.0, %v3946
    %v3948 = vxor.u32 %v3939, 2147483648
    %v3949 = vmul.f32 %v3948, 1.442695
    %v3950 = vpow.pop %v3949
    %v3951 = vadd.f32 %v3950, 1.0
    %v3952 = vrcp.pop %v3951
    %v3953 = vmul.f32 1.0, %v3952
    %v3954 = vtanh.pop %v3940
    %v3955 = vxor.u32 %v3941, 2147483648
    %v3956 = vmul.f32 %v3955, 1.442695
    %v3957 = vpow.pop %v3956
    %v3958 = vadd.f32 %v3957, 1.0
    %v3959 = vrcp.pop %v3958
    %v3960 = vmul.f32 1.0, %v3959
    %v3961 = vmul.f32 %v3953, %v3789
    %v3962 = vmul.f32 %v3947, %v3954
    %v3963 = vadd.f32 %v3961, %v3962
    %v3964 = vtanh.pop %v3963
    %v3965 = vmul.f32 %v3960, %v3964
    %v3966 = vld [vmem:[%s2091] sm:$0xff]
    %v3967 = vld [vmem:[%s2091 + $0x8] sm:$0xff]
    %v3968 = vld [vmem:[%s2091 + $0x10] sm:$0xff]
    %v3969 = vld [vmem:[%s2091 + $0x18] sm:$0xff]
    %3970 = vmatprep.subr.mxu0 %v2689
    %3971 = vmatpush1.msra.mxu0 %v2688
    %3972 = vmatprep.subr.mxu0 %v2693
    %3973 = vmatpush1.msra.mxu0 %v2692
    %3974 = vmatprep.subr.mxu0 %v2697
    %3975 = vmatpush1.msra.mxu0 %v2696
    %3976 = vmatprep.subr.mxu0 %v2701
    %3977 = vmatpush1.msra.mxu0 %v2700
    %3978 = vmatprep.subr.mxu0 %v2705
    %3979 = vmatpush1.msra.mxu0 %v2704
    %3980 = vmatprep.subr.mxu0 %v2709
    %3981 = vmatpush1.msra.mxu0 %v2708
    %3982 = vmatprep.subr.mxu0 %v2713
    %3983 = vmatpush1.msra.mxu0 %v2712
    %3984 = vmatprep.subr.mxu0 %v2717
    %3985 = vmatpush1.msra.mxu0 %v2716
    %3986 = vmatprep.subr.mxu0 %v2721
    %3987 = vmatpush1.msra.mxu0 %v2720
    %3988 = vmatprep.subr.mxu0 %v2725
    %3989 = vmatpush1.msra.mxu0 %v2724
    %3990 = vmatprep.subr.mxu0 %v2729
    %3991 = vmatpush1.msra.mxu0 %v2728
    %3992 = vmatprep.subr.mxu0 %v2733
    %3993 = vmatpush1.msra.mxu0 %v2732
    %3994 = vmatprep.subr.mxu0 %v2737
    %3995 = vmatpush1.msra.mxu0 %v2736
    %3996 = vmatprep.subr.mxu0 %v2741
    %3997 = vmatpush1.msra.mxu0 %v2740
    %3998 = vmatprep.subr.mxu0 %v2745
    %3999 = vmatpush1.msra.mxu0 %v2744
    %4000 = vmatprep.subr.mxu0 %v2749
    %4001 = vmatpush1.msra.mxu0 %v2748
    %4002 = vmatprep.subr.mxu0 0.0
    %4003 = vmatpush1.msra.mxu0 0.0
    %4004 = vmatprep.subr.mxu0 0.0
    %4005 = vmatpush1.msra.mxu0 0.0
    %4006 = vmatprep.subr.mxu0 0.0
    %4007 = vmatpush1.msra.mxu0 0.0
    %4008 = vmatprep.subr.mxu0 0.0
    %4009 = vmatpush1.msra.mxu0 0.0
    %4010 = vmatprep.subr.mxu0 0.0
    %4011 = vmatpush1.msra.mxu0 0.0
    %4012 = vmatprep.subr.mxu0 0.0
    %4013 = vmatpush1.msra.mxu0 0.0
    %4014 = vmatprep.subr.mxu0 0.0
    %4015 = vmatpush1.msra.mxu0 0.0
    %4016 = vmatprep.subr.mxu0 0.0
    %4017 = vmatpush1.msra.mxu0 0.0
    %4018 = vmatprep.subr.mxu0 0.0
    %4019 = vmatpush1.msra.mxu0 0.0
    %4020 = vmatprep.subr.mxu0 0.0
    %4021 = vmatpush1.msra.mxu0 0.0
    %4022 = vmatprep.subr.mxu0 0.0
    %4023 = vmatpush1.msra.mxu0 0.0
    %4024 = vmatprep.subr.mxu0 0.0
    %4025 = vmatpush1.msra.mxu0 0.0
    %4026 = vmatprep.subr.mxu0 0.0
    %4027 = vmatpush1.msra.mxu0 0.0
    %4028 = vmatprep.subr.mxu0 0.0
    %4029 = vmatpush1.msra.mxu0 0.0
    %4030 = vmatprep.subr.mxu0 0.0
    %4031 = vmatpush1.msra.mxu0 0.0
    %4032 = vmatprep.subr.mxu0 0.0
    %4033 = vmatpush1.msra.mxu0 0.0
    %4034 = vmatprep.mubr.f32.mxu0 0.0
    %4035 = vmatmul.mubr.f32.gmra.mrb[0].mxu0 %v3965
    %v4036 = vpop.f32.mrb[0].mxu0
    %v4037 = vadd.f32 0.0, %v4036
    %v4038 = vpop.f32.mrb[0].mxu0
    %v4039 = vadd.f32 0.0, %v4038
    %4040 = vdwg.mxu0
    %4041 = vmatprep.subr.mxu0 %v2691
    %4042 = vmatpush1.msra.mxu0 %v2690
    %4043 = vmatprep.subr.mxu0 %v2695
    %4044 = vmatpush1.msra.mxu0 %v2694
    %4045 = vmatprep.subr.mxu0 %v2699
    %4046 = vmatpush1.msra.mxu0 %v2698
    %4047 = vmatprep.subr.mxu0 %v2703
    %4048 = vmatpush1.msra.mxu0 %v2702
    %4049 = vmatprep.subr.mxu0 %v2707
    %4050 = vmatpush1.msra.mxu0 %v2706
    %4051 = vmatprep.subr.mxu0 %v2711
    %4052 = vmatpush1.msra.mxu0 %v2710
    %4053 = vmatprep.subr.mxu0 %v2715
    %4054 = vmatpush1.msra.mxu0 %v2714
    %4055 = vmatprep.subr.mxu0 %v2719
    %4056 = vmatpush1.msra.mxu0 %v2718
    %4057 = vmatprep.subr.mxu0 %v2723
    %4058 = vmatpush1.msra.mxu0 %v2722
    %4059 = vmatprep.subr.mxu0 %v2727
    %4060 = vmatpush1.msra.mxu0 %v2726
    %4061 = vmatprep.subr.mxu0 %v2731
    %4062 = vmatpush1.msra.mxu0 %v2730
    %4063 = vmatprep.subr.mxu0 %v2735
    %4064 = vmatpush1.msra.mxu0 %v2734
    %4065 = vmatprep.subr.mxu0 %v2739
    %4066 = vmatpush1.msra.mxu0 %v2738
    %4067 = vmatprep.subr.mxu0 %v2743
    %4068 = vmatpush1.msra.mxu0 %v2742
    %4069 = vmatprep.subr.mxu0 %v2747
    %4070 = vmatpush1.msra.mxu0 %v2746
    %4071 = vmatprep.subr.mxu0 %v2751
    %4072 = vmatpush1.msra.mxu0 %v2750
    %4073 = vmatprep.subr.mxu0 0.0
    %4074 = vmatpush1.msra.mxu0 0.0
    %4075 = vmatprep.subr.mxu0 0.0
    %4076 = vmatpush1.msra.mxu0 0.0
    %4077 = vmatprep.subr.mxu0 0.0
    %4078 = vmatpush1.msra.mxu0 0.0
    %4079 = vmatprep.subr.mxu0 0.0
    %4080 = vmatpush1.msra.mxu0 0.0
    %4081 = vmatprep.subr.mxu0 0.0
    %4082 = vmatpush1.msra.mxu0 0.0
    %4083 = vmatprep.subr.mxu0 0.0
    %4084 = vmatpush1.msra.mxu0 0.0
    %4085 = vmatprep.subr.mxu0 0.0
    %4086 = vmatpush1.msra.mxu0 0.0
    %4087 = vmatprep.subr.mxu0 0.0
    %4088 = vmatpush1.msra.mxu0 0.0
    %4089 = vmatprep.subr.mxu0 0.0
    %4090 = vmatpush1.msra.mxu0 0.0
    %4091 = vmatprep.subr.mxu0 0.0
    %4092 = vmatpush1.msra.mxu0 0.0
    %4093 = vmatprep.subr.mxu0 0.0
    %4094 = vmatpush1.msra.mxu0 0.0
    %4095 = vmatprep.subr.mxu0 0.0
    %4096 = vmatpush1.msra.mxu0 0.0
    %4097 = vmatprep.subr.mxu0 0.0
    %4098 = vmatpush1.msra.mxu0 0.0
    %4099 = vmatprep.subr.mxu0 0.0
    %4100 = vmatpush1.msra.mxu0 0.0
    %4101 = vmatprep.subr.mxu0 0.0
    %4102 = vmatpush1.msra.mxu0 0.0
    %4103 = vmatprep.subr.mxu0 0.0
    %4104 = vmatpush1.msra.mxu0 0.0
    %4105 = vmatprep.mubr.f32.mxu0 0.0
    %4106 = vmatmul.mubr.f32.gmra.mrb[0].mxu0 %v3965
    %v4107 = vpop.f32.mrb[0].mxu0
    %v4108 = vadd.f32 0.0, %v4107
    %v4109 = vpop.f32.mrb[0].mxu0
    %v4110 = vadd.f32 0.0, %v4109
    %4111 = vdwg.mxu0
    %v4112 = vadd.f32 %v3966, %v4037
    %v4113 = vadd.f32 %v3967, %v4039
    %v4114 = vadd.f32 %v3968, %v4108
    %v4115 = vadd.f32 %v3969, %v4110
    %v4116 = vxor.u32 %v4112, 2147483648
    %v4117 = vmul.f32 %v4116, 1.442695
    %v4118 = vpow.pop %v4117
    %v4119 = vadd.f32 %v4118, 1.0
    %v4120 = vrcp.pop %v4119
    %v4121 = vmul.f32 1.0, %v4120
    %v4122 = vxor.u32 %v4113, 2147483648
    %v4123 = vmul.f32 %v4122, 1.442695
    %v4124 = vpow.pop %v4123
    %v4125 = vadd.f32 %v4124, 1.0
    %v4126 = vrcp.pop %v4125
    %v4127 = vmul.f32 1.0, %v4126
    %v4128 = vtanh.pop %v4114
    %v4129 = vxor.u32 %v4115, 2147483648
    %v4130 = vmul.f32 %v4129, 1.442695
    %v4131 = vpow.pop %v4130
    %v4132 = vadd.f32 %v4131, 1.0
    %v4133 = vrcp.pop %v4132
    %v4134 = vmul.f32 1.0, %v4133
    %v4135 = vmul.f32 %v4127, %v3963
    %v4136 = vmul.f32 %v4121, %v4128
    %v4137 = vadd.f32 %v4135, %v4136
    %v4138 = vtanh.pop %v4137
    %v4139 = vmul.f32 %v4134, %v4138
    %4140 = vst [vmem:[#allocation10] sm:$0xff] %v4139
    // Predicated region
    $region42: #{tpu_custom_call.1} parent=1 // pred_check
      _
    $region43: #{tpu_custom_call.1} parent=1 // pred_check_branch
      %4142 = sbr.rel (0) target = $region45
    $region44: #{tpu_custom_call.1} parent=1 // pred_region
      %s4144 = ssub.s32 128, 128
      %4145 = vsyncadd [#allocation6], %s4144
      %s4147 = sshll.u32 [#allocation10], 4
      %s4148 = int_to_ptr.vmem [resolvable:$true] %s4147
      %4150 = dma.vmem_to_hbm [thread:$0]  %s4148, 128, %s7, [#allocation6]
    $region45: #{tpu_custom_call.1} parent=1 // pred_fallthru
      _
    // Predicated region
    $region46: #{tpu_custom_call.1} parent=1 // pred_check
      _
    $region47: #{tpu_custom_call.1} parent=1 // pred_check_branch
      %4152 = sbr.rel (0) target = $region49
    $region48: #{tpu_custom_call.1} parent=1 // pred_region
      %4153 = dma.done [#allocation6], 128
    $region49: #{tpu_custom_call.1} parent=1 // pred_fallthru
      _
    %4154 = vsyncpa [#allocation5], 1
    %4155 = vsyncpa [#allocation8], 1
    %4156 = vsyncpa [#allocation6], 1

</llo_original>
